<compile_context>
chip_gen: v5e
topology: v5e:2x2
jax: 0.10.0
libtpu: 0.0.40
codegen_flags: <defaults>
</compile_context>

<pallas_src>
import functools

import jax
import jax.numpy as jnp
from jax.experimental import pallas as pl
from jax.experimental.pallas import tpu as pltpu

KS = (3, 4, 5)     # conv kernel heights
CO = 100           # conv output channels (PyTorch)
CP = 128           # lane-padded conv output channels
NUM_CLASSES = 5


# ---------------- Kernel 1: fused 3x(Conv2d((K,D)) + ReLU + max_pool1d over time) ----------------
def _fused_conv_pool_kernel(emb_ref, w_ref, b_ref, out_ref, *, sent_len, ks):
    # emb_ref: (T*W, D) bf16   w_ref: (D, sum(K)*CP) bf16   b_ref: (1, len(ks)*CP) f32
    # out_ref: (T, len(ks)*CP) f32
    TW, _ = emb_ref.shape
    W = sent_len
    T = TW // W
    Cp = out_ref.shape[1] // len(ks)

    # One big MXU matmul covering every (conv, shift-row) pair and every word position.
    z = jnp.dot(emb_ref[...], w_ref[...], preferred_element_type=jnp.float32)  # (T*W, sum(K)*Cp)
    z = z.reshape(T, W, z.shape[1])                                            # clean leading split
    b = b_ref[...]

    off = 0
    for j, K in enumerate(ks):
        L = W - K + 1
        acc = z[:, 0:L, off * Cp:(off + 1) * Cp]
        for k in range(1, K):
            acc = acc + z[:, k:k + L, (off + k) * Cp:(off + k + 1) * Cp]
        acc = jnp.maximum(acc + b[:, j * Cp:(j + 1) * Cp], 0.0)                # bias + ReLU
        out_ref[:, j * Cp:(j + 1) * Cp] = jnp.max(acc, axis=1)                 # max over time
        off += K


def conv_features(emb2d, n_sent, sent_len, w_all, b_all, *, tile=64):
    # emb2d: (n_sent*sent_len, D) bf16 -> (n_sent, len(KS)*CP) f32
    D = emb2d.shape[1]
    c_tot = b_all.shape[1]
    T = min(tile, n_sent)
    T = -(-T // 8) * 8                         # sublane-aligned sentence tile
    Np = -(-n_sent // T) * T
    if Np != n_sent:
        emb2d = jnp.pad(emb2d, ((0, (Np - n_sent) * sent_len), (0, 0)))

    out = pl.pallas_call(
        functools.partial(_fused_conv_pool_kernel, sent_len=sent_len, ks=KS),
        out_shape=jax.ShapeDtypeStruct((Np, c_tot), jnp.float32),
        grid=(Np // T,),
        in_specs=[
            pl.BlockSpec((T * sent_len, D), lambda n: (n, 0)),
            pl.BlockSpec(w_all.shape, lambda n: (0, 0)),   # weights resident
            pl.BlockSpec(b_all.shape, lambda n: (0, 0)),
        ],
        out_specs=pl.BlockSpec((T, c_tot), lambda n: (n, 0)),
        compiler_params=pltpu.CompilerParams(dimension_semantics=("parallel",)),
    )(emb2d, w_all, b_all)
    return out[:n_sent]


# ---------------- Kernel 2: init_hidden/memory + (proj_input folded into) LSTM + classifier ----------------
def _lstm_head_kernel(feats_ref, wx_ref, bx_ref, whh_ref, wh0_ref, bh0_ref,
                      wc0_ref, bc0_ref, wcls_ref, bcls_ref, out_ref, *, batch, hidden):
    # feats_ref: (S*B, F) f32, row = s*B + b.   out_ref: (S*B, 5) f32.
    SB, _ = feats_ref.shape
    B, H = batch, hidden
    S = SB // B

    # Hoist resident-weight loads out of the unrolled recurrence.
    feats = feats_ref[...]
    wx, bx = wx_ref[...], bx_ref[...]
    whh = whh_ref[...]
    wcls, bcls = wcls_ref[...], bcls_ref[...]

    # init_hidden / init_memory from the first-sentence features.
    f0 = feats[0:B]
    h = jnp.dot(f0, wh0_ref[...], preferred_element_type=jnp.float32) + bh0_ref[...]
    c = jnp.dot(f0, wc0_ref[...], preferred_element_type=jnp.float32) + bc0_ref[...]

    # Input-side gate pre-activations for ALL timesteps in one matmul
    # (proj_input folded into W_ih:  wx = wp @ wih, bx = bp @ wih + b_ih + b_hh).
    gx_all = jnp.dot(feats, wx, preferred_element_type=jnp.float32) + bx      # (S*B, 4H)

    for t in range(S):   # static unroll; only h @ whh is on the serial chain
        gates = gx_all[t * B:(t + 1) * B] + jnp.dot(h, whh, preferred_element_type=jnp.float32)
        # PyTorch LSTM gate order: input, forget, cell(g), output
        i_g = jax.nn.sigmoid(gates[:, 0:H])
        f_g = jax.nn.sigmoid(gates[:, H:2 * H])
        g_g = jnp.tanh(gates[:, 2 * H:3 * H])
        o_g = jax.nn.sigmoid(gates[:, 3 * H:4 * H])
        c = f_g * c + i_g * g_g
        h = o_g * jnp.tanh(c)
        pred = jnp.dot(h, wcls, preferred_element_type=jnp.float32) + bcls
        out_ref[t * B:(t + 1) * B, :] = pred.astype(out_ref.dtype)            # no concat epilogue


def lstm_head(feats, batch, params):
    SB, _ = feats.shape
    H = params["whh"].shape[0]
    args = (feats, params["wx"], params["bx"], params["whh"], params["wh0"], params["bh0"],
            params["wc0"], params["bc0"], params["wcls"], params["bcls"])

    def full(shape):
        return pl.BlockSpec(shape, lambda i, _n=len(shape): (0,) * _n)

    return pl.pallas_call(
        functools.partial(_lstm_head_kernel, batch=batch, hidden=H),
        out_shape=jax.ShapeDtypeStruct((SB, NUM_CLASSES), jnp.float32),
        grid=(1,),
        in_specs=[full(a.shape) for a in args],
        out_specs=full((SB, NUM_CLASSES)),
    )(*args)


# ---------------- Glue (embedding lookup + layout plumbing) ----------------
def toulmin_forward(paragraphs, params):
    B, S, W = paragraphs.shape
    tokens = paragraphs.reshape(B * S * W)
    emb2d = jnp.take(params["embed"], tokens, axis=0)                     # (B*S*W, D) bf16

    feats = conv_features(emb2d, B * S, W, params["w_all"], params["b_all"])  # (B*S, 3*CP)
    # CNN dropout(0.5): inference-mode identity.
    F = feats.shape[1]
    feats = feats.reshape(B, S, F).transpose(1, 0, 2).reshape(S * B, F)   # row = s*B + b

    out = lstm_head(feats, B, params)                                     # (S*B, 5)
    return out.reshape(S, B, NUM_CLASSES).transpose(1, 0, 2)              # (B, S, 5)


# ---------------- Parameter init (PyTorch-shaped) + conversion to kernel form ----------------
def init_params(key, vocab_size, D, H):
    keys = jax.random.split(key, 16)
    p = {}
    p["embed"] = jax.random.normal(keys[0], (vocab_size, D), jnp.float32) * 0.1
    p["conv_w"], p["conv_b"] = [], []
    for i, K in enumerate(KS):
        p["conv_w"].append(jax.random.normal(keys[1 + i], (CO, 1, K, D), jnp.float32) * 0.05)
        p["conv_b"].append(jax.random.normal(keys[4 + i], (CO,), jnp.float32) * 0.05)
    p["proj_w"] = jax.random.uniform(keys[7], (3 * CO, 3 * CO), jnp.float32, -0.1, 0.1)
    p["proj_b"] = jnp.zeros((3 * CO,), jnp.float32)
    p["initH_w"] = jax.random.uniform(keys[8], (H, 3 * CO), jnp.float32, -0.1, 0.1)
    p["initH_b"] = jnp.zeros((H,), jnp.float32)
    p["initC_w"] = jax.random.uniform(keys[9], (H, 3 * CO), jnp.float32, -0.1, 0.1)
    p["initC_b"] = jnp.zeros((H,), jnp.float32)
    # TODO(synk): reference uses orthogonal init for LSTM weights; deterministic normal here.
    p["lstm_w_ih"] = jax.random.normal(keys[10], (4 * H, D), jnp.float32) * 0.05
    p["lstm_w_hh"] = jax.random.normal(keys[11], (4 * H, H), jnp.float32) * 0.05
    p["lstm_b_ih"] = jnp.zeros((4 * H,), jnp.float32)
    p["lstm_b_hh"] = jnp.zeros((4 * H,), jnp.float32)
    p["cls_w"] = jax.random.uniform(keys[12], (NUM_CLASSES, H), jnp.float32, -0.1, 0.1)
    p["cls_b"] = jnp.zeros((NUM_CLASSES,), jnp.float32)
    return p


def prepare_kernel_params(raw):
    D = raw["embed"].shape[1]
    kp = {"embed": raw["embed"].astype(jnp.bfloat16)}

    # Conv weights -> one (D, sum(K)*CP) matmul operand (Co padded to 128 lanes per block).
    w_blocks, b_blocks = [], []
    for K, wc, bc in zip(KS, raw["conv_w"], raw["conv_b"]):
        w = wc.reshape(CO, K, D)
        for k in range(K):
            w_blocks.append(jnp.pad(w[:, k, :].T, ((0, 0), (0, CP - CO))))   # (D, CP)
        b_blocks.append(jnp.pad(bc, (0, CP - CO)))
    kp["w_all"] = jnp.concatenate(w_blocks, axis=1).astype(jnp.bfloat16)     # (D, 12*CP)
    kp["b_all"] = jnp.concatenate(b_blocks)[None, :]                         # (1, 3*CP) f32

    def pad_rows(w):   # (3*CO, X) -> (3*CP, X): zero rows at padded channel slots
        parts = [jnp.pad(w[j * CO:(j + 1) * CO], ((0, CP - CO), (0, 0))) for j in range(3)]
        return jnp.concatenate(parts, axis=0)

    wp = raw["proj_w"].T                              # x @ wp form
    bp = raw["proj_b"][None, :]
    wih = raw["lstm_w_ih"].T                          # (300, 4H)
    blstm = (raw["lstm_b_ih"] + raw["lstm_b_hh"])[None, :]

    kp["wx"] = pad_rows(wp @ wih)                     # proj_input folded into W_ih  (384, 4H)
    kp["bx"] = bp @ wih + blstm                       # (1, 4H)
    kp["whh"] = raw["lstm_w_hh"].T                    # (H, 4H)
    kp["wh0"] = pad_rows(raw["initH_w"].T)            # (384, H)
    kp["bh0"] = raw["initH_b"][None, :]
    kp["wc0"] = pad_rows(raw["initC_w"].T)
    kp["bc0"] = raw["initC_b"][None, :]
    kp["wcls"] = raw["cls_w"].T                       # (H, 5)
    kp["bcls"] = raw["cls_b"][None, :]
    return kp


# ---------------- Pure-JAX reference (f32) for a loose self-check ----------------
def reference_forward(paragraphs, raw):
    B, S, W = paragraphs.shape
    D = raw["embed"].shape[1]
    N = B * S
    emb = jnp.take(raw["embed"], paragraphs.reshape(N, W), axis=0)        # (N, W, D)
    feats = []
    for K, wc, bc in zip(KS, raw["conv_w"], raw["conv_b"]):
        L = W - K + 1
        cols = jnp.stack([emb[:, k:k + L, :] for k in range(K)], axis=2).reshape(N, L, K * D)
        conv = jnp.einsum("nlx,cx->nlc", cols, wc.reshape(CO, K * D)) + bc
        feats.append(jnp.max(jax.nn.relu(conv), axis=1))
    feats = jnp.concatenate(feats, axis=1).reshape(B, S, 3 * CO)

    wp, bp = raw["proj_w"].T, raw["proj_b"]
    wih, whh = raw["lstm_w_ih"].T, raw["lstm_w_hh"].T
    blstm = raw["lstm_b_ih"] + raw["lstm_b_hh"]
    h = feats[:, 0, :] @ raw["initH_w"].T + raw["initH_b"]
    c = feats[:, 0, :] @ raw["initC_w"].T + raw["initC_b"]
    H = h.shape[1]
    preds = []
    for t in range(S):
        x = feats[:, t, :] @ wp + bp
        g = x @ wih + h @ whh + blstm
        i = jax.nn.sigmoid(g[:, :H]); f = jax.nn.sigmoid(g[:, H:2 * H])
        gg = jnp.tanh(g[:, 2 * H:3 * H]); o = jax.nn.sigmoid(g[:, 3 * H:4 * H])
        c = f * c + i * gg
        h = o * jnp.tanh(c)
        preds.append(h @ raw["cls_w"].T + raw["cls_b"])
    return jnp.stack(preds, axis=1)


if __name__ == "__main__":
    # embed_size must be 300 (= 3*Co) for the reference module's proj/LSTM shapes to line up.
    VOCAB, D, H = 50, 300, 32
    B, S, W = 2, 4, 16      # batch, max_sent_seq, max_word_seq

    key = jax.random.PRNGKey(0)
    pkey, dkey = jax.random.split(key)
    raw = init_params(pkey, VOCAB, D, H)
    kparams = prepare_kernel_params(raw)
    paragraphs = jax.random.randint(dkey, (B, S, W), 0, VOCAB, dtype=jnp.int32)

    fwd = jax.jit(functools.partial(toulmin_forward, params=kparams))
    out = jax.block_until_ready(fwd(paragraphs))
    assert out.shape == (B, S, NUM_CLASSES) and out.dtype == jnp.float32

    ref = jax.block_until_ready(reference_forward(paragraphs, raw))
    assert bool(jnp.allclose(out, ref, rtol=5e-2, atol=5e-2)), float(jnp.max(jnp.abs(out - ref)))
    print("KERNEL_OK")
</pallas_src>

<mosaic_0001>
module attributes {stable_mosaic.version = 11 : i64} {
  func.func @_fused_conv_pool_kernel(%arg0: i32, %arg1: memref<128x300xbf16, #tpu.memory_space<vmem>>, %arg2: memref<300x1536xbf16, #tpu.memory_space<vmem>>, %arg3: memref<1x384xf32, #tpu.memory_space<vmem>>, %arg4: memref<8x384xf32, #tpu.memory_space<vmem>>) attributes {dimension_semantics = [#tpu.dimension_semantics<parallel>], iteration_bounds = array<i64: 1>, scalar_prefetch = 0 : i64, scratch_operands = 0 : i64, tpu.core_type = #tpu.core_type<tc>, window_params = [{transform_indices = @transform_0, window_bounds = array<i64: 128, 300>}, {pipeline_mode = #tpu.pipeline_mode<synchronous>, transform_indices = @transform_1, window_bounds = array<i64: 300, 1536>}, {pipeline_mode = #tpu.pipeline_mode<synchronous>, transform_indices = @transform_2, window_bounds = array<i64: 1, 384>}, {transform_indices = @transform_3, window_bounds = array<i64: 8, 384>}]} {
    %c0 = arith.constant 0 : index
    %c0_0 = arith.constant 0 : index
    %0 = vector.load %arg1[%c0, %c0_0] : memref<128x300xbf16, #tpu.memory_space<vmem>>, vector<128x300xbf16>
    %c0_1 = arith.constant 0 : index
    %c0_2 = arith.constant 0 : index
    %1 = vector.load %arg2[%c0_1, %c0_2] : memref<300x1536xbf16, #tpu.memory_space<vmem>>, vector<300x1536xbf16>
    %cst = arith.constant dense<0.000000e+00> : vector<128x1536xf32>
    %2 = tpu.matmul %0, %1, %cst {dimension_numbers = #tpu.dot_dimension_numbers<[1], [0], [0], [1], [0, 0, 1, 1], [], []>} : vector<128x300xbf16>, vector<300x1536xbf16>, vector<128x1536xf32> -> vector<128x1536xf32>
    %3 = vector.shape_cast %2 : vector<128x1536xf32> to vector<8x16x1536xf32>
    %c0_3 = arith.constant 0 : index
    %c0_4 = arith.constant 0 : index
    %4 = vector.load %arg3[%c0_3, %c0_4] : memref<1x384xf32, #tpu.memory_space<vmem>>, vector<1x384xf32>
    %5 = vector.extract_strided_slice %3 {offsets = [0, 0, 0], sizes = [8, 14, 128], strides = [1, 1, 1]} : vector<8x16x1536xf32> to vector<8x14x128xf32>
    %6 = vector.extract_strided_slice %3 {offsets = [0, 1, 128], sizes = [8, 14, 128], strides = [1, 1, 1]} : vector<8x16x1536xf32> to vector<8x14x128xf32>
    %7 = arith.addf %5, %6 : vector<8x14x128xf32>
    %8 = vector.extract_strided_slice %3 {offsets = [0, 2, 256], sizes = [8, 14, 128], strides = [1, 1, 1]} : vector<8x16x1536xf32> to vector<8x14x128xf32>
    %9 = arith.addf %7, %8 : vector<8x14x128xf32>
    %10 = vector.extract_strided_slice %4 {offsets = [0, 0], sizes = [1, 128], strides = [1, 1]} : vector<1x384xf32> to vector<1x128xf32>
    %11 = vector.shape_cast %10 : vector<1x128xf32> to vector<1x1x128xf32>
    %12 = vector.broadcast %11 : vector<1x1x128xf32> to vector<8x14x128xf32>
    %13 = arith.addf %9, %12 : vector<8x14x128xf32>
    %cst_5 = arith.constant 0.000000e+00 : f32
    %14 = vector.broadcast %cst_5 : f32 to vector<8x14x128xf32>
    %15 = arith.maximumf %13, %14 : vector<8x14x128xf32>
    %cst_6 = arith.constant dense<0xFF800000> : vector<8x128xf32>
    %16 = vector.multi_reduction <maximumf>, %15, %cst_6 [1] : vector<8x14x128xf32> to vector<8x128xf32>
    %c0_7 = arith.constant 0 : index
    %c0_8 = arith.constant 0 : index
    %17 = vector.load %arg4[%c0_7, %c0_8] : memref<8x384xf32, #tpu.memory_space<vmem>>, vector<8x128xf32>
    tpu.vector_store %arg4[%c0_7, %c0_8], %16 {strides = array<i32>} : memref<8x384xf32, #tpu.memory_space<vmem>>, vector<8x128xf32>,
    %18 = vector.extract_strided_slice %3 {offsets = [0, 0, 384], sizes = [8, 13, 128], strides = [1, 1, 1]} : vector<8x16x1536xf32> to vector<8x13x128xf32>
    %19 = vector.extract_strided_slice %3 {offsets = [0, 1, 512], sizes = [8, 13, 128], strides = [1, 1, 1]} : vector<8x16x1536xf32> to vector<8x13x128xf32>
    %20 = arith.addf %18, %19 : vector<8x13x128xf32>
    %21 = vector.extract_strided_slice %3 {offsets = [0, 2, 640], sizes = [8, 13, 128], strides = [1, 1, 1]} : vector<8x16x1536xf32> to vector<8x13x128xf32>
    %22 = arith.addf %20, %21 : vector<8x13x128xf32>
    %23 = vector.extract_strided_slice %3 {offsets = [0, 3, 768], sizes = [8, 13, 128], strides = [1, 1, 1]} : vector<8x16x1536xf32> to vector<8x13x128xf32>
    %24 = arith.addf %22, %23 : vector<8x13x128xf32>
    %25 = vector.extract_strided_slice %4 {offsets = [0, 128], sizes = [1, 128], strides = [1, 1]} : vector<1x384xf32> to vector<1x128xf32>
    %26 = vector.shape_cast %25 : vector<1x128xf32> to vector<1x1x128xf32>
    %27 = vector.broadcast %26 : vector<1x1x128xf32> to vector<8x13x128xf32>
    %28 = arith.addf %24, %27 : vector<8x13x128xf32>
    %cst_9 = arith.constant 0.000000e+00 : f32
    %29 = vector.broadcast %cst_9 : f32 to vector<8x13x128xf32>
    %30 = arith.maximumf %28, %29 : vector<8x13x128xf32>
    %cst_10 = arith.constant dense<0xFF800000> : vector<8x128xf32>
    %31 = vector.multi_reduction <maximumf>, %30, %cst_10 [1] : vector<8x13x128xf32> to vector<8x128xf32>
    %c0_11 = arith.constant 0 : index
    %c128 = arith.constant 128 : index
    %32 = vector.load %arg4[%c0_11, %c128] : memref<8x384xf32, #tpu.memory_space<vmem>>, vector<8x128xf32>
    tpu.vector_store %arg4[%c0_11, %c128], %31 {strides = array<i32>} : memref<8x384xf32, #tpu.memory_space<vmem>>, vector<8x128xf32>,
    %33 = vector.extract_strided_slice %3 {offsets = [0, 0, 896], sizes = [8, 12, 128], strides = [1, 1, 1]} : vector<8x16x1536xf32> to vector<8x12x128xf32>
    %34 = vector.extract_strided_slice %3 {offsets = [0, 1, 1024], sizes = [8, 12, 128], strides = [1, 1, 1]} : vector<8x16x1536xf32> to vector<8x12x128xf32>
    %35 = arith.addf %33, %34 : vector<8x12x128xf32>
    %36 = vector.extract_strided_slice %3 {offsets = [0, 2, 1152], sizes = [8, 12, 128], strides = [1, 1, 1]} : vector<8x16x1536xf32> to vector<8x12x128xf32>
    %37 = arith.addf %35, %36 : vector<8x12x128xf32>
    %38 = vector.extract_strided_slice %3 {offsets = [0, 3, 1280], sizes = [8, 12, 128], strides = [1, 1, 1]} : vector<8x16x1536xf32> to vector<8x12x128xf32>
    %39 = arith.addf %37, %38 : vector<8x12x128xf32>
    %40 = vector.extract_strided_slice %3 {offsets = [0, 4, 1408], sizes = [8, 12, 128], strides = [1, 1, 1]} : vector<8x16x1536xf32> to vector<8x12x128xf32>
    %41 = arith.addf %39, %40 : vector<8x12x128xf32>
    %42 = vector.extract_strided_slice %4 {offsets = [0, 256], sizes = [1, 128], strides = [1, 1]} : vector<1x384xf32> to vector<1x128xf32>
    %43 = vector.shape_cast %42 : vector<1x128xf32> to vector<1x1x128xf32>
    %44 = vector.broadcast %43 : vector<1x1x128xf32> to vector<8x12x128xf32>
    %45 = arith.addf %41, %44 : vector<8x12x128xf32>
    %cst_12 = arith.constant 0.000000e+00 : f32
    %46 = vector.broadcast %cst_12 : f32 to vector<8x12x128xf32>
    %47 = arith.maximumf %45, %46 : vector<8x12x128xf32>
    %cst_13 = arith.constant dense<0xFF800000> : vector<8x128xf32>
    %48 = vector.multi_reduction <maximumf>, %47, %cst_13 [1] : vector<8x12x128xf32> to vector<8x128xf32>
    %c0_14 = arith.constant 0 : index
    %c256 = arith.constant 256 : index
    %49 = vector.load %arg4[%c0_14, %c256] : memref<8x384xf32, #tpu.memory_space<vmem>>, vector<8x128xf32>
    tpu.vector_store %arg4[%c0_14, %c256], %48 {strides = array<i32>} : memref<8x384xf32, #tpu.memory_space<vmem>>, vector<8x128xf32>,
    return
  }
  func.func @transform_0(%arg0: i32) -> (i32, i32) {
    %c0_i32 = arith.constant 0 : i32
    %c0_i32_0 = arith.constant 0 : i32
    return %arg0, %c0_i32 : i32, i32
  }
  func.func @transform_1(%arg0: i32) -> (i32, i32) {
    %c0_i32 = arith.constant 0 : i32
    %c0_i32_0 = arith.constant 0 : i32
    %c0_i32_1 = arith.constant 0 : i32
    return %c0_i32, %c0_i32_0 : i32, i32
  }
  func.func @transform_2(%arg0: i32) -> (i32, i32) {
    %c0_i32 = arith.constant 0 : i32
    %c0_i32_0 = arith.constant 0 : i32
    %c0_i32_1 = arith.constant 0 : i32
    return %c0_i32, %c0_i32_0 : i32, i32
  }
  func.func @transform_3(%arg0: i32) -> (i32, i32) {
    %c0_i32 = arith.constant 0 : i32
    %c0_i32_0 = arith.constant 0 : i32
    return %arg0, %c0_i32 : i32, i32
  }
}

module attributes {stable_mosaic.version = 11 : i64} {
  func.func @_lstm_head_kernel(%arg0: i32, %arg1: memref<8x384xf32, #tpu.memory_space<vmem>>, %arg2: memref<384x128xf32, #tpu.memory_space<vmem>>, %arg3: memref<1x128xf32, #tpu.memory_space<vmem>>, %arg4: memref<32x128xf32, #tpu.memory_space<vmem>>, %arg5: memref<384x32xf32, #tpu.memory_space<vmem>>, %arg6: memref<1x32xf32, #tpu.memory_space<vmem>>, %arg7: memref<384x32xf32, #tpu.memory_space<vmem>>, %arg8: memref<1x32xf32, #tpu.memory_space<vmem>>, %arg9: memref<32x5xf32, #tpu.memory_space<vmem>>, %arg10: memref<1x5xf32, #tpu.memory_space<vmem>>, %arg11: memref<8x5xf32, #tpu.memory_space<vmem>>) attributes {dimension_semantics = [#tpu.dimension_semantics<arbitrary>], iteration_bounds = array<i64: 1>, scalar_prefetch = 0 : i64, scratch_operands = 0 : i64, tpu.core_type = #tpu.core_type<tc>, window_params = [{pipeline_mode = #tpu.pipeline_mode<synchronous>, transform_indices = @transform_0, window_bounds = array<i64: 8, 384>}, {pipeline_mode = #tpu.pipeline_mode<synchronous>, transform_indices = @transform_1, window_bounds = array<i64: 384, 128>}, {pipeline_mode = #tpu.pipeline_mode<synchronous>, transform_indices = @transform_2, window_bounds = array<i64: 1, 128>}, {pipeline_mode = #tpu.pipeline_mode<synchronous>, transform_indices = @transform_3, window_bounds = array<i64: 32, 128>}, {pipeline_mode = #tpu.pipeline_mode<synchronous>, transform_indices = @transform_4, window_bounds = array<i64: 384, 32>}, {pipeline_mode = #tpu.pipeline_mode<synchronous>, transform_indices = @transform_5, window_bounds = array<i64: 1, 32>}, {pipeline_mode = #tpu.pipeline_mode<synchronous>, transform_indices = @transform_6, window_bounds = array<i64: 384, 32>}, {pipeline_mode = #tpu.pipeline_mode<synchronous>, transform_indices = @transform_7, window_bounds = array<i64: 1, 32>}, {pipeline_mode = #tpu.pipeline_mode<synchronous>, transform_indices = @transform_8, window_bounds = array<i64: 32, 5>}, {pipeline_mode = #tpu.pipeline_mode<synchronous>, transform_indices = @transform_9, window_bounds = array<i64: 1, 5>}, {pipeline_mode = #tpu.pipeline_mode<synchronous>, transform_indices = @transform_10, window_bounds = array<i64: 8, 5>}]} {
    %c0 = arith.constant 0 : index
    %c0_0 = arith.constant 0 : index
    %0 = vector.load %arg1[%c0, %c0_0] : memref<8x384xf32, #tpu.memory_space<vmem>>, vector<8x384xf32>
    %c0_1 = arith.constant 0 : index
    %c0_2 = arith.constant 0 : index
    %1 = vector.load %arg2[%c0_1, %c0_2] : memref<384x128xf32, #tpu.memory_space<vmem>>, vector<384x128xf32>
    %c0_3 = arith.constant 0 : index
    %c0_4 = arith.constant 0 : index
    %2 = vector.load %arg3[%c0_3, %c0_4] : memref<1x128xf32, #tpu.memory_space<vmem>>, vector<1x128xf32>
    %c0_5 = arith.constant 0 : index
    %c0_6 = arith.constant 0 : index
    %3 = vector.load %arg4[%c0_5, %c0_6] : memref<32x128xf32, #tpu.memory_space<vmem>>, vector<32x128xf32>
    %c0_7 = arith.constant 0 : index
    %c0_8 = arith.constant 0 : index
    %4 = vector.load %arg9[%c0_7, %c0_8] : memref<32x5xf32, #tpu.memory_space<vmem>>, vector<32x5xf32>
    %c0_9 = arith.constant 0 : index
    %c0_10 = arith.constant 0 : index
    %5 = vector.load %arg10[%c0_9, %c0_10] : memref<1x5xf32, #tpu.memory_space<vmem>>, vector<1x5xf32>
    %6 = vector.extract_strided_slice %0 {offsets = [0, 0], sizes = [2, 384], strides = [1, 1]} : vector<8x384xf32> to vector<2x384xf32>
    %c0_11 = arith.constant 0 : index
    %c0_12 = arith.constant 0 : index
    %7 = vector.load %arg5[%c0_11, %c0_12] : memref<384x32xf32, #tpu.memory_space<vmem>>, vector<384x32xf32>
    %cst = arith.constant dense<0.000000e+00> : vector<2x32xf32>
    %8 = tpu.matmul %6, %7, %cst {dimension_numbers = #tpu.dot_dimension_numbers<[1], [0], [0], [1], [0, 0, 1, 1], [], []>} : vector<2x384xf32>, vector<384x32xf32>, vector<2x32xf32> -> vector<2x32xf32>
    %c0_13 = arith.constant 0 : index
    %c0_14 = arith.constant 0 : index
    %9 = vector.load %arg6[%c0_13, %c0_14] : memref<1x32xf32, #tpu.memory_space<vmem>>, vector<1x32xf32>
    %10 = vector.broadcast %9 : vector<1x32xf32> to vector<2x32xf32>
    %11 = arith.addf %8, %10 : vector<2x32xf32>
    %c0_15 = arith.constant 0 : index
    %c0_16 = arith.constant 0 : index
    %12 = vector.load %arg7[%c0_15, %c0_16] : memref<384x32xf32, #tpu.memory_space<vmem>>, vector<384x32xf32>
    %cst_17 = arith.constant dense<0.000000e+00> : vector<2x32xf32>
    %13 = tpu.matmul %6, %12, %cst_17 {dimension_numbers = #tpu.dot_dimension_numbers<[1], [0], [0], [1], [0, 0, 1, 1], [], []>} : vector<2x384xf32>, vector<384x32xf32>, vector<2x32xf32> -> vector<2x32xf32>
    %c0_18 = arith.constant 0 : index
    %c0_19 = arith.constant 0 : index
    %14 = vector.load %arg8[%c0_18, %c0_19] : memref<1x32xf32, #tpu.memory_space<vmem>>, vector<1x32xf32>
    %15 = vector.broadcast %14 : vector<1x32xf32> to vector<2x32xf32>
    %16 = arith.addf %13, %15 : vector<2x32xf32>
    %cst_20 = arith.constant dense<0.000000e+00> : vector<8x128xf32>
    %17 = tpu.matmul %0, %1, %cst_20 {dimension_numbers = #tpu.dot_dimension_numbers<[1], [0], [0], [1], [0, 0, 1, 1], [], []>} : vector<8x384xf32>, vector<384x128xf32>, vector<8x128xf32> -> vector<8x128xf32>
    %18 = vector.broadcast %2 : vector<1x128xf32> to vector<8x128xf32>
    %19 = arith.addf %17, %18 : vector<8x128xf32>
    %20 = vector.extract_strided_slice %19 {offsets = [0, 0], sizes = [2, 128], strides = [1, 1]} : vector<8x128xf32> to vector<2x128xf32>
    %cst_21 = arith.constant dense<0.000000e+00> : vector<2x128xf32>
    %21 = tpu.matmul %11, %3, %cst_21 {dimension_numbers = #tpu.dot_dimension_numbers<[1], [0], [0], [1], [0, 0, 1, 1], [], []>} : vector<2x32xf32>, vector<32x128xf32>, vector<2x128xf32> -> vector<2x128xf32>
    %22 = arith.addf %20, %21 : vector<2x128xf32>
    %23 = vector.extract_strided_slice %22 {offsets = [0, 0], sizes = [2, 32], strides = [1, 1]} : vector<2x128xf32> to vector<2x32xf32>
    %24 = arith.negf %23 : vector<2x32xf32>
    %25 = math.exp %24 : vector<2x32xf32>
    %cst_22 = arith.constant 1.000000e+00 : f32
    %26 = vector.broadcast %cst_22 : f32 to vector<2x32xf32>
    %27 = arith.addf %26, %25 : vector<2x32xf32>
    %28 = arith.divf %26, %27 : vector<2x32xf32>
    %29 = vector.extract_strided_slice %22 {offsets = [0, 32], sizes = [2, 32], strides = [1, 1]} : vector<2x128xf32> to vector<2x32xf32>
    %30 = arith.negf %29 : vector<2x32xf32>
    %31 = math.exp %30 : vector<2x32xf32>
    %cst_23 = arith.constant 1.000000e+00 : f32
    %32 = vector.broadcast %cst_23 : f32 to vector<2x32xf32>
    %33 = arith.addf %32, %31 : vector<2x32xf32>
    %34 = arith.divf %32, %33 : vector<2x32xf32>
    %35 = vector.extract_strided_slice %22 {offsets = [0, 64], sizes = [2, 32], strides = [1, 1]} : vector<2x128xf32> to vector<2x32xf32>
    %36 = math.tanh %35 : vector<2x32xf32>
    %37 = vector.extract_strided_slice %22 {offsets = [0, 96], sizes = [2, 32], strides = [1, 1]} : vector<2x128xf32> to vector<2x32xf32>
    %38 = arith.negf %37 : vector<2x32xf32>
    %39 = math.exp %38 : vector<2x32xf32>
    %cst_24 = arith.constant 1.000000e+00 : f32
    %40 = vector.broadcast %cst_24 : f32 to vector<2x32xf32>
    %41 = arith.addf %40, %39 : vector<2x32xf32>
    %42 = arith.divf %40, %41 : vector<2x32xf32>
    %43 = arith.mulf %34, %16 : vector<2x32xf32>
    %44 = arith.mulf %28, %36 : vector<2x32xf32>
    %45 = arith.addf %43, %44 : vector<2x32xf32>
    %46 = math.tanh %45 : vector<2x32xf32>
    %47 = arith.mulf %42, %46 : vector<2x32xf32>
    %cst_25 = arith.constant dense<0.000000e+00> : vector<2x5xf32>
    %48 = tpu.matmul %47, %4, %cst_25 {dimension_numbers = #tpu.dot_dimension_numbers<[1], [0], [0], [1], [0, 0, 1, 1], [], []>} : vector<2x32xf32>, vector<32x5xf32>, vector<2x5xf32> -> vector<2x5xf32>
    %49 = vector.broadcast %5 : vector<1x5xf32> to vector<2x5xf32>
    %50 = arith.addf %48, %49 : vector<2x5xf32>
    %c0_26 = arith.constant 0 : index
    %c0_27 = arith.constant 0 : index
    %51 = vector.load %arg11[%c0_26, %c0_27] : memref<8x5xf32, #tpu.memory_space<vmem>>, vector<2x5xf32>
    tpu.vector_store %arg11[%c0_26, %c0_27], %50 {strides = array<i32>} : memref<8x5xf32, #tpu.memory_space<vmem>>, vector<2x5xf32>,
    %52 = vector.extract_strided_slice %19 {offsets = [2, 0], sizes = [2, 128], strides = [1, 1]} : vector<8x128xf32> to vector<2x128xf32>
    %cst_28 = arith.constant dense<0.000000e+00> : vector<2x128xf32>
    %53 = tpu.matmul %47, %3, %cst_28 {dimension_numbers = #tpu.dot_dimension_numbers<[1], [0], [0], [1], [0, 0, 1, 1], [], []>} : vector<2x32xf32>, vector<32x128xf32>, vector<2x128xf32> -> vector<2x128xf32>
    %54 = arith.addf %52, %53 : vector<2x128xf32>
    %55 = vector.extract_strided_slice %54 {offsets = [0, 0], sizes = [2, 32], strides = [1, 1]} : vector<2x128xf32> to vector<2x32xf32>
    %56 = arith.negf %55 : vector<2x32xf32>
    %57 = math.exp %56 : vector<2x32xf32>
    %cst_29 = arith.constant 1.000000e+00 : f32
    %58 = vector.broadcast %cst_29 : f32 to vector<2x32xf32>
    %59 = arith.addf %58, %57 : vector<2x32xf32>
    %60 = arith.divf %58, %59 : vector<2x32xf32>
    %61 = vector.extract_strided_slice %54 {offsets = [0, 32], sizes = [2, 32], strides = [1, 1]} : vector<2x128xf32> to vector<2x32xf32>
    %62 = arith.negf %61 : vector<2x32xf32>
    %63 = math.exp %62 : vector<2x32xf32>
    %cst_30 = arith.constant 1.000000e+00 : f32
    %64 = vector.broadcast %cst_30 : f32 to vector<2x32xf32>
    %65 = arith.addf %64, %63 : vector<2x32xf32>
    %66 = arith.divf %64, %65 : vector<2x32xf32>
    %67 = vector.extract_strided_slice %54 {offsets = [0, 64], sizes = [2, 32], strides = [1, 1]} : vector<2x128xf32> to vector<2x32xf32>
    %68 = math.tanh %67 : vector<2x32xf32>
    %69 = vector.extract_strided_slice %54 {offsets = [0, 96], sizes = [2, 32], strides = [1, 1]} : vector<2x128xf32> to vector<2x32xf32>
    %70 = arith.negf %69 : vector<2x32xf32>
    %71 = math.exp %70 : vector<2x32xf32>
    %cst_31 = arith.constant 1.000000e+00 : f32
    %72 = vector.broadcast %cst_31 : f32 to vector<2x32xf32>
    %73 = arith.addf %72, %71 : vector<2x32xf32>
    %74 = arith.divf %72, %73 : vector<2x32xf32>
    %75 = arith.mulf %66, %45 : vector<2x32xf32>
    %76 = arith.mulf %60, %68 : vector<2x32xf32>
    %77 = arith.addf %75, %76 : vector<2x32xf32>
    %78 = math.tanh %77 : vector<2x32xf32>
    %79 = arith.mulf %74, %78 : vector<2x32xf32>
    %cst_32 = arith.constant dense<0.000000e+00> : vector<2x5xf32>
    %80 = tpu.matmul %79, %4, %cst_32 {dimension_numbers = #tpu.dot_dimension_numbers<[1], [0], [0], [1], [0, 0, 1, 1], [], []>} : vector<2x32xf32>, vector<32x5xf32>, vector<2x5xf32> -> vector<2x5xf32>
    %81 = vector.broadcast %5 : vector<1x5xf32> to vector<2x5xf32>
    %82 = arith.addf %80, %81 : vector<2x5xf32>
    %c2 = arith.constant 2 : index
    %c0_33 = arith.constant 0 : index
    %83 = vector.load %arg11[%c2, %c0_33] : memref<8x5xf32, #tpu.memory_space<vmem>>, vector<2x5xf32>
    tpu.vector_store %arg11[%c2, %c0_33], %82 {strides = array<i32>} : memref<8x5xf32, #tpu.memory_space<vmem>>, vector<2x5xf32>,
    %84 = vector.extract_strided_slice %19 {offsets = [4, 0], sizes = [2, 128], strides = [1, 1]} : vector<8x128xf32> to vector<2x128xf32>
    %cst_34 = arith.constant dense<0.000000e+00> : vector<2x128xf32>
    %85 = tpu.matmul %79, %3, %cst_34 {dimension_numbers = #tpu.dot_dimension_numbers<[1], [0], [0], [1], [0, 0, 1, 1], [], []>} : vector<2x32xf32>, vector<32x128xf32>, vector<2x128xf32> -> vector<2x128xf32>
    %86 = arith.addf %84, %85 : vector<2x128xf32>
    %87 = vector.extract_strided_slice %86 {offsets = [0, 0], sizes = [2, 32], strides = [1, 1]} : vector<2x128xf32> to vector<2x32xf32>
    %88 = arith.negf %87 : vector<2x32xf32>
    %89 = math.exp %88 : vector<2x32xf32>
    %cst_35 = arith.constant 1.000000e+00 : f32
    %90 = vector.broadcast %cst_35 : f32 to vector<2x32xf32>
    %91 = arith.addf %90, %89 : vector<2x32xf32>
    %92 = arith.divf %90, %91 : vector<2x32xf32>
    %93 = vector.extract_strided_slice %86 {offsets = [0, 32], sizes = [2, 32], strides = [1, 1]} : vector<2x128xf32> to vector<2x32xf32>
    %94 = arith.negf %93 : vector<2x32xf32>
    %95 = math.exp %94 : vector<2x32xf32>
    %cst_36 = arith.constant 1.000000e+00 : f32
    %96 = vector.broadcast %cst_36 : f32 to vector<2x32xf32>
    %97 = arith.addf %96, %95 : vector<2x32xf32>
    %98 = arith.divf %96, %97 : vector<2x32xf32>
    %99 = vector.extract_strided_slice %86 {offsets = [0, 64], sizes = [2, 32], strides = [1, 1]} : vector<2x128xf32> to vector<2x32xf32>
    %100 = math.tanh %99 : vector<2x32xf32>
    %101 = vector.extract_strided_slice %86 {offsets = [0, 96], sizes = [2, 32], strides = [1, 1]} : vector<2x128xf32> to vector<2x32xf32>
    %102 = arith.negf %101 : vector<2x32xf32>
    %103 = math.exp %102 : vector<2x32xf32>
    %cst_37 = arith.constant 1.000000e+00 : f32
    %104 = vector.broadcast %cst_37 : f32 to vector<2x32xf32>
    %105 = arith.addf %104, %103 : vector<2x32xf32>
    %106 = arith.divf %104, %105 : vector<2x32xf32>
    %107 = arith.mulf %98, %77 : vector<2x32xf32>
    %108 = arith.mulf %92, %100 : vector<2x32xf32>
    %109 = arith.addf %107, %108 : vector<2x32xf32>
    %110 = math.tanh %109 : vector<2x32xf32>
    %111 = arith.mulf %106, %110 : vector<2x32xf32>
    %cst_38 = arith.constant dense<0.000000e+00> : vector<2x5xf32>
    %112 = tpu.matmul %111, %4, %cst_38 {dimension_numbers = #tpu.dot_dimension_numbers<[1], [0], [0], [1], [0, 0, 1, 1], [], []>} : vector<2x32xf32>, vector<32x5xf32>, vector<2x5xf32> -> vector<2x5xf32>
    %113 = vector.broadcast %5 : vector<1x5xf32> to vector<2x5xf32>
    %114 = arith.addf %112, %113 : vector<2x5xf32>
    %c4 = arith.constant 4 : index
    %c0_39 = arith.constant 0 : index
    %115 = vector.load %arg11[%c4, %c0_39] : memref<8x5xf32, #tpu.memory_space<vmem>>, vector<2x5xf32>
    tpu.vector_store %arg11[%c4, %c0_39], %114 {strides = array<i32>} : memref<8x5xf32, #tpu.memory_space<vmem>>, vector<2x5xf32>,
    %116 = vector.extract_strided_slice %19 {offsets = [6, 0], sizes = [2, 128], strides = [1, 1]} : vector<8x128xf32> to vector<2x128xf32>
    %cst_40 = arith.constant dense<0.000000e+00> : vector<2x128xf32>
    %117 = tpu.matmul %111, %3, %cst_40 {dimension_numbers = #tpu.dot_dimension_numbers<[1], [0], [0], [1], [0, 0, 1, 1], [], []>} : vector<2x32xf32>, vector<32x128xf32>, vector<2x128xf32> -> vector<2x128xf32>
    %118 = arith.addf %116, %117 : vector<2x128xf32>
    %119 = vector.extract_strided_slice %118 {offsets = [0, 0], sizes = [2, 32], strides = [1, 1]} : vector<2x128xf32> to vector<2x32xf32>
    %120 = arith.negf %119 : vector<2x32xf32>
    %121 = math.exp %120 : vector<2x32xf32>
    %cst_41 = arith.constant 1.000000e+00 : f32
    %122 = vector.broadcast %cst_41 : f32 to vector<2x32xf32>
    %123 = arith.addf %122, %121 : vector<2x32xf32>
    %124 = arith.divf %122, %123 : vector<2x32xf32>
    %125 = vector.extract_strided_slice %118 {offsets = [0, 32], sizes = [2, 32], strides = [1, 1]} : vector<2x128xf32> to vector<2x32xf32>
    %126 = arith.negf %125 : vector<2x32xf32>
    %127 = math.exp %126 : vector<2x32xf32>
    %cst_42 = arith.constant 1.000000e+00 : f32
    %128 = vector.broadcast %cst_42 : f32 to vector<2x32xf32>
    %129 = arith.addf %128, %127 : vector<2x32xf32>
    %130 = arith.divf %128, %129 : vector<2x32xf32>
    %131 = vector.extract_strided_slice %118 {offsets = [0, 64], sizes = [2, 32], strides = [1, 1]} : vector<2x128xf32> to vector<2x32xf32>
    %132 = math.tanh %131 : vector<2x32xf32>
    %133 = vector.extract_strided_slice %118 {offsets = [0, 96], sizes = [2, 32], strides = [1, 1]} : vector<2x128xf32> to vector<2x32xf32>
    %134 = arith.negf %133 : vector<2x32xf32>
    %135 = math.exp %134 : vector<2x32xf32>
    %cst_43 = arith.constant 1.000000e+00 : f32
    %136 = vector.broadcast %cst_43 : f32 to vector<2x32xf32>
    %137 = arith.addf %136, %135 : vector<2x32xf32>
    %138 = arith.divf %136, %137 : vector<2x32xf32>
    %139 = arith.mulf %130, %109 : vector<2x32xf32>
    %140 = arith.mulf %124, %132 : vector<2x32xf32>
    %141 = arith.addf %139, %140 : vector<2x32xf32>
    %142 = math.tanh %141 : vector<2x32xf32>
    %143 = arith.mulf %138, %142 : vector<2x32xf32>
    %cst_44 = arith.constant dense<0.000000e+00> : vector<2x5xf32>
    %144 = tpu.matmul %143, %4, %cst_44 {dimension_numbers = #tpu.dot_dimension_numbers<[1], [0], [0], [1], [0, 0, 1, 1], [], []>} : vector<2x32xf32>, vector<32x5xf32>, vector<2x5xf32> -> vector<2x5xf32>
    %145 = vector.broadcast %5 : vector<1x5xf32> to vector<2x5xf32>
    %146 = arith.addf %144, %145 : vector<2x5xf32>
    %c6 = arith.constant 6 : index
    %c0_45 = arith.constant 0 : index
    %147 = vector.load %arg11[%c6, %c0_45] : memref<8x5xf32, #tpu.memory_space<vmem>>, vector<2x5xf32>
    tpu.vector_store %arg11[%c6, %c0_45], %146 {strides = array<i32>} : memref<8x5xf32, #tpu.memory_space<vmem>>, vector<2x5xf32>,
    return
  }
  func.func @transform_0(%arg0: i32) -> (i32, i32) {
    %c0_i32 = arith.constant 0 : i32
    %c0_i32_0 = arith.constant 0 : i32
    %c0_i32_1 = arith.constant 0 : i32
    return %c0_i32, %c0_i32_0 : i32, i32
  }
  func.func @transform_1(%arg0: i32) -> (i32, i32) {
    %c0_i32 = arith.constant 0 : i32
    %c0_i32_0 = arith.constant 0 : i32
    %c0_i32_1 = arith.constant 0 : i32
    return %c0_i32, %c0_i32_0 : i32, i32
  }
  func.func @transform_2(%arg0: i32) -> (i32, i32) {
    %c0_i32 = arith.constant 0 : i32
    %c0_i32_0 = arith.constant 0 : i32
    %c0_i32_1 = arith.constant 0 : i32
    return %c0_i32, %c0_i32_0 : i32, i32
  }
  func.func @transform_3(%arg0: i32) -> (i32, i32) {
    %c0_i32 = arith.constant 0 : i32
    %c0_i32_0 = arith.constant 0 : i32
    %c0_i32_1 = arith.constant 0 : i32
    return %c0_i32, %c0_i32_0 : i32, i32
  }
  func.func @transform_4(%arg0: i32) -> (i32, i32) {
    %c0_i32 = arith.constant 0 : i32
    %c0_i32_0 = arith.constant 0 : i32
    %c0_i32_1 = arith.constant 0 : i32
    return %c0_i32, %c0_i32_0 : i32, i32
  }
  func.func @transform_5(%arg0: i32) -> (i32, i32) {
    %c0_i32 = arith.constant 0 : i32
    %c0_i32_0 = arith.constant 0 : i32
    %c0_i32_1 = arith.constant 0 : i32
    return %c0_i32, %c0_i32_0 : i32, i32
  }
  func.func @transform_6(%arg0: i32) -> (i32, i32) {
    %c0_i32 = arith.constant 0 : i32
    %c0_i32_0 = arith.constant 0 : i32
    %c0_i32_1 = arith.constant 0 : i32
    return %c0_i32, %c0_i32_0 : i32, i32
  }
  func.func @transform_7(%arg0: i32) -> (i32, i32) {
    %c0_i32 = arith.constant 0 : i32
    %c0_i32_0 = arith.constant 0 : i32
    %c0_i32_1 = arith.constant 0 : i32
    return %c0_i32, %c0_i32_0 : i32, i32
  }
  func.func @transform_8(%arg0: i32) -> (i32, i32) {
    %c0_i32 = arith.constant 0 : i32
    %c0_i32_0 = arith.constant 0 : i32
    %c0_i32_1 = arith.constant 0 : i32
    return %c0_i32, %c0_i32_0 : i32, i32
  }
  func.func @transform_9(%arg0: i32) -> (i32, i32) {
    %c0_i32 = arith.constant 0 : i32
    %c0_i32_0 = arith.constant 0 : i32
    %c0_i32_1 = arith.constant 0 : i32
    return %c0_i32, %c0_i32_0 : i32, i32
  }
  func.func @transform_10(%arg0: i32) -> (i32, i32) {
    %c0_i32 = arith.constant 0 : i32
    %c0_i32_0 = arith.constant 0 : i32
    %c0_i32_1 = arith.constant 0 : i32
    return %c0_i32, %c0_i32_0 : i32, i32
  }
}

</mosaic_0001>

<llo_original>
// kernel: toulmin_forward.3
$region0: #{toulmin_forward.3}
  #allocation0 [shape = 'u32[]', space=smem, size = 0x4, offset = 0x4, fixed_abs, tag = 'smem constant byte address 0x4 - core index']
  #allocation1 [shape = 'u32[72,128]{1,0:T(1,128)}', space=vmem, size = 0x9000, scoped, tag = 'internal scratch']
  %s0 = inlined_call_operand.vmem [shape: f32[8,384], index: 0, kind: input, shape index: {}]
  %s1 = inlined_call_operand.vmem [shape: f32[384,128], index: 1, kind: input, shape index: {}]
  %s2 = inlined_call_operand.vmem [shape: f32[1,128], index: 2, kind: input, shape index: {}]
  %s3 = inlined_call_operand.vmem [shape: f32[32,128], index: 3, kind: input, shape index: {}]
  %s4 = inlined_call_operand.hbm [shape: f32[384,32], index: 4, kind: input, shape index: {}]
  %s5 = inlined_call_operand.vmem [shape: f32[1,32], index: 5, kind: input, shape index: {}, may-alias: {5,7}]
  %s6 = inlined_call_operand.hbm [shape: f32[384,32], index: 6, kind: input, shape index: {}]
  %s7 = inlined_call_operand.vmem [shape: f32[1,32], index: 7, kind: input, shape index: {}, may-alias: {5,7}]
  %s8 = inlined_call_operand.hbm [shape: f32[32,5], index: 8, kind: input, shape index: {}]
  %s9 = inlined_call_operand.vmem [shape: f32[1,5], index: 9, kind: input, shape index: {}]
  %s10 = inlined_call_operand.vmem [shape: f32[8,5], index: 10, kind: output, shape index: {}]
  %s11 = sld [smem:[#allocation0]]
  $region62: #{toulmin_forward.3} parent=0
    _
  %s13 = ssub.s32 1, %s11
  %s14 = scalar_select 0, %s13, %s11
  $region1: #{toulmin_forward.3} parent=0
    #allocation2 [shape = 'u8[196608]{0}', space=vmem, size = 0x30000, scoped, tag = 'input window, operand 4, single buffered']
    #allocation3 [shape = 's32[1]{0}', space=sflag, size = 0x4, scoped, tag = 'scoped memory for toulmin_forward.3']
    #allocation4 [shape = 'u8[196608]{0}', space=vmem, size = 0x30000, scoped, tag = 'input window, operand 6, single buffered']
    #allocation5 [shape = 's32[1]{0}', space=sflag, size = 0x4, scoped, tag = 'scoped memory for toulmin_forward.3']
    #allocation6 [shape = 'u8[16384]{0}', space=vmem, size = 0x4000, scoped, tag = 'input window, operand 8, single buffered']
    %15 = vsyncpa [#allocation3], 0
    %16 = vsyncpa [#allocation5], 0
    // Predicated region
    $region2: #{toulmin_forward.3} parent=1 // pred_check
      _
    $region3: #{toulmin_forward.3} parent=1 // pred_check_branch
      %18 = sbr.rel (0) target = $region5
    $region4: #{toulmin_forward.3} parent=1 // pred_region
      _
    $region5: #{toulmin_forward.3} parent=1 // pred_fallthru
      _
    // Predicated region
    $region6: #{toulmin_forward.3} parent=1 // pred_check
      _
    $region7: #{toulmin_forward.3} parent=1 // pred_check_branch
      %20 = sbr.rel (0) target = $region9
    $region8: #{toulmin_forward.3} parent=1 // pred_region
      _
    $region9: #{toulmin_forward.3} parent=1 // pred_fallthru
      _
    // Predicated region
    $region10: #{toulmin_forward.3} parent=1 // pred_check
      _
    $region11: #{toulmin_forward.3} parent=1 // pred_check_branch
      %22 = sbr.rel (0) target = $region13
    $region12: #{toulmin_forward.3} parent=1 // pred_region
      _
    $region13: #{toulmin_forward.3} parent=1 // pred_fallthru
      _
    // Predicated region
    $region14: #{toulmin_forward.3} parent=1 // pred_check
      _
    $region15: #{toulmin_forward.3} parent=1 // pred_check_branch
      %24 = sbr.rel (0) target = $region17
    $region16: #{toulmin_forward.3} parent=1 // pred_region
      _
    $region17: #{toulmin_forward.3} parent=1 // pred_fallthru
      _
    // Predicated region
    $region18: #{toulmin_forward.3} parent=1 // pred_check
      _
    $region19: #{toulmin_forward.3} parent=1 // pred_check_branch
      %26 = sbr.rel (0) target = $region21
    $region20: #{toulmin_forward.3} parent=1 // pred_region
      %28 = vsyncadd [#allocation3], 0
      %s29 = sshll.u32 %s4, 4
      %s30 = int_to_ptr.hbm [resolvable:$true] %s29
      %s31 = sshll.u32 [#allocation2], 4
      %s32 = int_to_ptr.vmem [resolvable:$true] %s31
      %37 = dma.hbm_to_vmem [thread:$0]  %s30, 6144, %s32, [#allocation3], 128, 128, 8
    $region21: #{toulmin_forward.3} parent=1 // pred_fallthru
      _
    // Predicated region
    $region22: #{toulmin_forward.3} parent=1 // pred_check
      _
    $region23: #{toulmin_forward.3} parent=1 // pred_check_branch
      %39 = sbr.rel (0) target = $region25
    $region24: #{toulmin_forward.3} parent=1 // pred_region
      _
    $region25: #{toulmin_forward.3} parent=1 // pred_fallthru
      _
    // Predicated region
    $region26: #{toulmin_forward.3} parent=1 // pred_check
      _
    $region27: #{toulmin_forward.3} parent=1 // pred_check_branch
      %41 = sbr.rel (0) target = $region29
    $region28: #{toulmin_forward.3} parent=1 // pred_region
      %43 = vsyncadd [#allocation5], 0
      %s44 = sshll.u32 %s6, 4
      %s45 = int_to_ptr.hbm [resolvable:$true] %s44
      %s46 = sshll.u32 [#allocation4], 4
      %s47 = int_to_ptr.vmem [resolvable:$true] %s46
      %52 = dma.hbm_to_vmem [thread:$0]  %s45, 6144, %s47, [#allocation5], 128, 128, 8
    $region29: #{toulmin_forward.3} parent=1 // pred_fallthru
      _
    // Predicated region
    $region30: #{toulmin_forward.3} parent=1 // pred_check
      _
    $region31: #{toulmin_forward.3} parent=1 // pred_check_branch
      %54 = sbr.rel (0) target = $region33
    $region32: #{toulmin_forward.3} parent=1 // pred_region
      _
    $region33: #{toulmin_forward.3} parent=1 // pred_fallthru
      _
    // Predicated region
    $region34: #{toulmin_forward.3} parent=1 // pred_check
      _
    $region35: #{toulmin_forward.3} parent=1 // pred_check_branch
      %56 = sbr.rel (0) target = $region37
    $region36: #{toulmin_forward.3} parent=1 // pred_region
      %58 = vsyncadd [#allocation5], 0
      %s59 = sshll.u32 %s8, 4
      %s60 = int_to_ptr.hbm [resolvable:$true] %s59
      %s61 = sshll.u32 [#allocation6], 4
      %s62 = int_to_ptr.vmem [resolvable:$true] %s61
      %67 = dma.hbm_to_vmem [thread:$0]  %s60, 512, %s62, [#allocation5], 128, 128, 8
    $region37: #{toulmin_forward.3} parent=1 // pred_fallthru
      _
    // Predicated region
    $region38: #{toulmin_forward.3} parent=1 // pred_check
      _
    $region39: #{toulmin_forward.3} parent=1 // pred_check_branch
      %69 = sbr.rel (0) target = $region41
    $region40: #{toulmin_forward.3} parent=1 // pred_region
      _
    $region41: #{toulmin_forward.3} parent=1 // pred_fallthru
      _
    // Predicated region
    $region42: #{toulmin_forward.3} parent=1 // pred_check
      _
    $region43: #{toulmin_forward.3} parent=1 // pred_check_branch
      %71 = sbr.rel (0) target = $region45
    $region44: #{toulmin_forward.3} parent=1 // pred_region
      %73 = dma.done [#allocation3], 6144
    $region45: #{toulmin_forward.3} parent=1 // pred_fallthru
      _
    // Predicated region
    $region46: #{toulmin_forward.3} parent=1 // pred_check
      _
    $region47: #{toulmin_forward.3} parent=1 // pred_check_branch
      %75 = sbr.rel (0) target = $region49
    $region48: #{toulmin_forward.3} parent=1 // pred_region
      %77 = dma.done [#allocation5], 6144
    $region49: #{toulmin_forward.3} parent=1 // pred_fallthru
      _
    // Predicated region
    $region50: #{toulmin_forward.3} parent=1 // pred_check
      _
    $region51: #{toulmin_forward.3} parent=1 // pred_check_branch
      %79 = sbr.rel (0) target = $region53
    $region52: #{toulmin_forward.3} parent=1 // pred_region
      %81 = dma.done [#allocation5], 512
    $region53: #{toulmin_forward.3} parent=1 // pred_fallthru
      _
    %v82 = vld [vmem:[%s0] sm:$0xff]
    %v83 = vld [vmem:[%s0 + $0x8] sm:$0xff]
    %v84 = vld [vmem:[%s0 + $0x10] sm:$0xff]
    %v85 = vld [vmem:[%s1] sm:$0xff]
    %v86 = vld [vmem:[%s1 + $0x8] sm:$0xff]
    %v87 = vld [vmem:[%s1 + $0x10] sm:$0xff]
    %v88 = vld [vmem:[%s1 + $0x18] sm:$0xff]
    %v89 = vld [vmem:[%s1 + $0x20] sm:$0xff]
    %v90 = vld [vmem:[%s1 + $0x28] sm:$0xff]
    %v91 = vld [vmem:[%s1 + $0x30] sm:$0xff]
    %v92 = vld [vmem:[%s1 + $0x38] sm:$0xff]
    %v93 = vld [vmem:[%s1 + $0x40] sm:$0xff]
    %v94 = vld [vmem:[%s1 + $0x48] sm:$0xff]
    %v95 = vld [vmem:[%s1 + $0x50] sm:$0xff]
    %v96 = vld [vmem:[%s1 + $0x58] sm:$0xff]
    %v97 = vld [vmem:[%s1 + $0x60] sm:$0xff]
    %v98 = vld [vmem:[%s1 + $0x68] sm:$0xff]
    %v99 = vld [vmem:[%s1 + $0x70] sm:$0xff]
    %v100 = vld [vmem:[%s1 + $0x78] sm:$0xff]
    %v101 = vld [vmem:[%s1 + $0x80] sm:$0xff]
    %v102 = vld [vmem:[%s1 + $0x88] sm:$0xff]
    %v103 = vld [vmem:[%s1 + $0x90] sm:$0xff]
    %v104 = vld [vmem:[%s1 + $0x98] sm:$0xff]
    %v105 = vld [vmem:[%s1 + $0xa0] sm:$0xff]
    %v106 = vld [vmem:[%s1 + $0xa8] sm:$0xff]
    %v107 = vld [vmem:[%s1 + $0xb0] sm:$0xff]
    %v108 = vld [vmem:[%s1 + $0xb8] sm:$0xff]
    %v109 = vld [vmem:[%s1 + $0xc0] sm:$0xff]
    %v110 = vld [vmem:[%s1 + $0xc8] sm:$0xff]
    %v111 = vld [vmem:[%s1 + $0xd0] sm:$0xff]
    %v112 = vld [vmem:[%s1 + $0xd8] sm:$0xff]
    %v113 = vld [vmem:[%s1 + $0xe0] sm:$0xff]
    %v114 = vld [vmem:[%s1 + $0xe8] sm:$0xff]
    %v115 = vld [vmem:[%s1 + $0xf0] sm:$0xff]
    %v116 = vld [vmem:[%s1 + $0xf8] sm:$0xff]
    %v117 = vld [vmem:[%s1 + $0x100] sm:$0xff]
    %v118 = vld [vmem:[%s1 + $0x108] sm:$0xff]
    %v119 = vld [vmem:[%s1 + $0x110] sm:$0xff]
    %v120 = vld [vmem:[%s1 + $0x118] sm:$0xff]
    %v121 = vld [vmem:[%s1 + $0x120] sm:$0xff]
    %v122 = vld [vmem:[%s1 + $0x128] sm:$0xff]
    %v123 = vld [vmem:[%s1 + $0x130] sm:$0xff]
    %v124 = vld [vmem:[%s1 + $0x138] sm:$0xff]
    %v125 = vld [vmem:[%s1 + $0x140] sm:$0xff]
    %v126 = vld [vmem:[%s1 + $0x148] sm:$0xff]
    %v127 = vld [vmem:[%s1 + $0x150] sm:$0xff]
    %v128 = vld [vmem:[%s1 + $0x158] sm:$0xff]
    %v129 = vld [vmem:[%s1 + $0x160] sm:$0xff]
    %v130 = vld [vmem:[%s1 + $0x168] sm:$0xff]
    %v131 = vld [vmem:[%s1 + $0x170] sm:$0xff]
    %v132 = vld [vmem:[%s1 + $0x178] sm:$0xff]
    %v133 = vld [vmem:[%s2] sm:$0x1]
    %v134 = vld [vmem:[%s3] sm:$0xff]
    %v135 = vld [vmem:[%s3 + $0x8] sm:$0xff]
    %v136 = vld [vmem:[%s3 + $0x10] sm:$0xff]
    %v137 = vld [vmem:[%s3 + $0x18] sm:$0xff]
    %v138 = vld [vmem:[#allocation6] sm:$0xff]
    %v139 = vld [vmem:[#allocation6 + $0x8] sm:$0xff]
    %v140 = vld [vmem:[#allocation6 + $0x10] sm:$0xff]
    %v141 = vld [vmem:[#allocation6 + $0x18] sm:$0xff]
    %v142 = vld [vmem:[%s9] sm:$0x1]
    %v143 = vld [vmem:[#allocation2] sm:$0xff]
    %v144 = vld [vmem:[#allocation2 + $0x8] sm:$0xff]
    %v145 = vld [vmem:[#allocation2 + $0x10] sm:$0xff]
    %v146 = vld [vmem:[#allocation2 + $0x18] sm:$0xff]
    %v147 = vld [vmem:[#allocation2 + $0x20] sm:$0xff]
    %v148 = vld [vmem:[#allocation2 + $0x28] sm:$0xff]
    %v149 = vld [vmem:[#allocation2 + $0x30] sm:$0xff]
    %v150 = vld [vmem:[#allocation2 + $0x38] sm:$0xff]
    %v151 = vld [vmem:[#allocation2 + $0x40] sm:$0xff]
    %v152 = vld [vmem:[#allocation2 + $0x48] sm:$0xff]
    %v153 = vld [vmem:[#allocation2 + $0x50] sm:$0xff]
    %v154 = vld [vmem:[#allocation2 + $0x58] sm:$0xff]
    %v155 = vld [vmem:[#allocation2 + $0x60] sm:$0xff]
    %v156 = vld [vmem:[#allocation2 + $0x68] sm:$0xff]
    %v157 = vld [vmem:[#allocation2 + $0x70] sm:$0xff]
    %v158 = vld [vmem:[#allocation2 + $0x78] sm:$0xff]
    %v159 = vld [vmem:[#allocation2 + $0x80] sm:$0xff]
    %v160 = vld [vmem:[#allocation2 + $0x88] sm:$0xff]
    %v161 = vld [vmem:[#allocation2 + $0x90] sm:$0xff]
    %v162 = vld [vmem:[#allocation2 + $0x98] sm:$0xff]
    %v163 = vld [vmem:[#allocation2 + $0xa0] sm:$0xff]
    %v164 = vld [vmem:[#allocation2 + $0xa8] sm:$0xff]
    %v165 = vld [vmem:[#allocation2 + $0xb0] sm:$0xff]
    %v166 = vld [vmem:[#allocation2 + $0xb8] sm:$0xff]
    %v167 = vld [vmem:[#allocation2 + $0xc0] sm:$0xff]
    %v168 = vld [vmem:[#allocation2 + $0xc8] sm:$0xff]
    %v169 = vld [vmem:[#allocation2 + $0xd0] sm:$0xff]
    %v170 = vld [vmem:[#allocation2 + $0xd8] sm:$0xff]
    %v171 = vld [vmem:[#allocation2 + $0xe0] sm:$0xff]
    %v172 = vld [vmem:[#allocation2 + $0xe8] sm:$0xff]
    %v173 = vld [vmem:[#allocation2 + $0xf0] sm:$0xff]
    %v174 = vld [vmem:[#allocation2 + $0xf8] sm:$0xff]
    %v175 = vld [vmem:[#allocation2 + $0x100] sm:$0xff]
    %v176 = vld [vmem:[#allocation2 + $0x108] sm:$0xff]
    %v177 = vld [vmem:[#allocation2 + $0x110] sm:$0xff]
    %v178 = vld [vmem:[#allocation2 + $0x118] sm:$0xff]
    %v179 = vld [vmem:[#allocation2 + $0x120] sm:$0xff]
    %v180 = vld [vmem:[#allocation2 + $0x128] sm:$0xff]
    %v181 = vld [vmem:[#allocation2 + $0x130] sm:$0xff]
    %v182 = vld [vmem:[#allocation2 + $0x138] sm:$0xff]
    %v183 = vld [vmem:[#allocation2 + $0x140] sm:$0xff]
    %v184 = vld [vmem:[#allocation2 + $0x148] sm:$0xff]
    %v185 = vld [vmem:[#allocation2 + $0x150] sm:$0xff]
    %v186 = vld [vmem:[#allocation2 + $0x158] sm:$0xff]
    %v187 = vld [vmem:[#allocation2 + $0x160] sm:$0xff]
    %v188 = vld [vmem:[#allocation2 + $0x168] sm:$0xff]
    %v189 = vld [vmem:[#allocation2 + $0x170] sm:$0xff]
    %v190 = vld [vmem:[#allocation2 + $0x178] sm:$0xff]
    %v191 = vld [vmem:[%s5] sm:$0x1]
    %v193 = vperm.slane %v191, 0
    %195 = vmatpush.msra.mxu0 %v158
    %196 = vmatpush.msra.mxu0 %v157
    %197 = vmatpush.msra.mxu0 %v156
    %198 = vmatpush.msra.mxu0 %v155
    %199 = vmatpush.msra.mxu0 %v154
    %200 = vmatpush.msra.mxu0 %v153
    %201 = vmatpush.msra.mxu0 %v152
    %202 = vmatpush.msra.mxu0 %v151
    %203 = vmatpush.msra.mxu0 %v150
    %204 = vmatpush.msra.mxu0 %v149
    %205 = vmatpush.msra.mxu0 %v148
    %206 = vmatpush.msra.mxu0 %v147
    %207 = vmatpush.msra.mxu0 %v146
    %208 = vmatpush.msra.mxu0 %v145
    %209 = vmatpush.msra.mxu0 %v144
    %210 = vmatpush.msra.mxu0 %v143
    %211 = vmatmul.f32.gmra.mxu0 %v82
    %v212 = vpop.f32.mrf.mxu0
    %v213 = vadd.f32 %v193, %v212
    %214 = vdwg.mxu0
    %215 = vmatpush.msra.mxu0 %v174
    %216 = vmatpush.msra.mxu0 %v173
    %217 = vmatpush.msra.mxu0 %v172
    %218 = vmatpush.msra.mxu0 %v171
    %219 = vmatpush.msra.mxu0 %v170
    %220 = vmatpush.msra.mxu0 %v169
    %221 = vmatpush.msra.mxu0 %v168
    %222 = vmatpush.msra.mxu0 %v167
    %223 = vmatpush.msra.mxu0 %v166
    %224 = vmatpush.msra.mxu0 %v165
    %225 = vmatpush.msra.mxu0 %v164
    %226 = vmatpush.msra.mxu0 %v163
    %227 = vmatpush.msra.mxu0 %v162
    %228 = vmatpush.msra.mxu0 %v161
    %229 = vmatpush.msra.mxu0 %v160
    %230 = vmatpush.msra.mxu0 %v159
    %231 = vmatmul.f32.gmra.mxu0 %v83
    %v232 = vpop.f32.mrf.mxu0
    %v233 = vadd.f32 %v213, %v232
    %234 = vdwg.mxu0
    %235 = vmatpush.msra.mxu0 %v190
    %236 = vmatpush.msra.mxu0 %v189
    %237 = vmatpush.msra.mxu0 %v188
    %238 = vmatpush.msra.mxu0 %v187
    %239 = vmatpush.msra.mxu0 %v186
    %240 = vmatpush.msra.mxu0 %v185
    %241 = vmatpush.msra.mxu0 %v184
    %242 = vmatpush.msra.mxu0 %v183
    %243 = vmatpush.msra.mxu0 %v182
    %244 = vmatpush.msra.mxu0 %v181
    %245 = vmatpush.msra.mxu0 %v180
    %246 = vmatpush.msra.mxu0 %v179
    %247 = vmatpush.msra.mxu0 %v178
    %248 = vmatpush.msra.mxu0 %v177
    %249 = vmatpush.msra.mxu0 %v176
    %250 = vmatpush.msra.mxu0 %v175
    %251 = vmatmul.f32.gmra.mxu0 %v84
    %v252 = vpop.f32.mrf.mxu0
    %v253 = vadd.f32 %v233, %v252
    %254 = vdwg.mxu0
    %v255 = vld [vmem:[#allocation4] sm:$0xff]
    %v256 = vld [vmem:[#allocation4 + $0x8] sm:$0xff]
    %v257 = vld [vmem:[#allocation4 + $0x10] sm:$0xff]
    %v258 = vld [vmem:[#allocation4 + $0x18] sm:$0xff]
    %v259 = vld [vmem:[#allocation4 + $0x20] sm:$0xff]
    %v260 = vld [vmem:[#allocation4 + $0x28] sm:$0xff]
    %v261 = vld [vmem:[#allocation4 + $0x30] sm:$0xff]
    %v262 = vld [vmem:[#allocation4 + $0x38] sm:$0xff]
    %v263 = vld [vmem:[#allocation4 + $0x40] sm:$0xff]
    %v264 = vld [vmem:[#allocation4 + $0x48] sm:$0xff]
    %v265 = vld [vmem:[#allocation4 + $0x50] sm:$0xff]
    %v266 = vld [vmem:[#allocation4 + $0x58] sm:$0xff]
    %v267 = vld [vmem:[#allocation4 + $0x60] sm:$0xff]
    %v268 = vld [vmem:[#allocation4 + $0x68] sm:$0xff]
    %v269 = vld [vmem:[#allocation4 + $0x70] sm:$0xff]
    %v270 = vld [vmem:[#allocation4 + $0x78] sm:$0xff]
    %v271 = vld [vmem:[#allocation4 + $0x80] sm:$0xff]
    %v272 = vld [vmem:[#allocation4 + $0x88] sm:$0xff]
    %v273 = vld [vmem:[#allocation4 + $0x90] sm:$0xff]
    %v274 = vld [vmem:[#allocation4 + $0x98] sm:$0xff]
    %v275 = vld [vmem:[#allocation4 + $0xa0] sm:$0xff]
    %v276 = vld [vmem:[#allocation4 + $0xa8] sm:$0xff]
    %v277 = vld [vmem:[#allocation4 + $0xb0] sm:$0xff]
    %v278 = vld [vmem:[#allocation4 + $0xb8] sm:$0xff]
    %v279 = vld [vmem:[#allocation4 + $0xc0] sm:$0xff]
    %v280 = vld [vmem:[#allocation4 + $0xc8] sm:$0xff]
    %v281 = vld [vmem:[#allocation4 + $0xd0] sm:$0xff]
    %v282 = vld [vmem:[#allocation4 + $0xd8] sm:$0xff]
    %v283 = vld [vmem:[#allocation4 + $0xe0] sm:$0xff]
    %v284 = vld [vmem:[#allocation4 + $0xe8] sm:$0xff]
    %v285 = vld [vmem:[#allocation4 + $0xf0] sm:$0xff]
    %v286 = vld [vmem:[#allocation4 + $0xf8] sm:$0xff]
    %v287 = vld [vmem:[#allocation4 + $0x100] sm:$0xff]
    %v288 = vld [vmem:[#allocation4 + $0x108] sm:$0xff]
    %v289 = vld [vmem:[#allocation4 + $0x110] sm:$0xff]
    %v290 = vld [vmem:[#allocation4 + $0x118] sm:$0xff]
    %v291 = vld [vmem:[#allocation4 + $0x120] sm:$0xff]
    %v292 = vld [vmem:[#allocation4 + $0x128] sm:$0xff]
    %v293 = vld [vmem:[#allocation4 + $0x130] sm:$0xff]
    %v294 = vld [vmem:[#allocation4 + $0x138] sm:$0xff]
    %v295 = vld [vmem:[#allocation4 + $0x140] sm:$0xff]
    %v296 = vld [vmem:[#allocation4 + $0x148] sm:$0xff]
    %v297 = vld [vmem:[#allocation4 + $0x150] sm:$0xff]
    %v298 = vld [vmem:[#allocation4 + $0x158] sm:$0xff]
    %v299 = vld [vmem:[#allocation4 + $0x160] sm:$0xff]
    %v300 = vld [vmem:[#allocation4 + $0x168] sm:$0xff]
    %v301 = vld [vmem:[#allocation4 + $0x170] sm:$0xff]
    %v302 = vld [vmem:[#allocation4 + $0x178] sm:$0xff]
    %v303 = vld [vmem:[%s7] sm:$0x1]
    %v305 = vperm.slane %v303, 0
    %307 = vmatpush.msra.mxu0 %v270
    %308 = vmatpush.msra.mxu0 %v269
    %309 = vmatpush.msra.mxu0 %v268
    %310 = vmatpush.msra.mxu0 %v267
    %311 = vmatpush.msra.mxu0 %v266
    %312 = vmatpush.msra.mxu0 %v265
    %313 = vmatpush.msra.mxu0 %v264
    %314 = vmatpush.msra.mxu0 %v263
    %315 = vmatpush.msra.mxu0 %v262
    %316 = vmatpush.msra.mxu0 %v261
    %317 = vmatpush.msra.mxu0 %v260
    %318 = vmatpush.msra.mxu0 %v259
    %319 = vmatpush.msra.mxu0 %v258
    %320 = vmatpush.msra.mxu0 %v257
    %321 = vmatpush.msra.mxu0 %v256
    %322 = vmatpush.msra.mxu0 %v255
    %323 = vmatmul.f32.gmra.mxu0 %v82
    %v324 = vpop.f32.mrf.mxu0
    %v325 = vadd.f32 %v305, %v324
    %326 = vdwg.mxu0
    %327 = vmatpush.msra.mxu0 %v286
    %328 = vmatpush.msra.mxu0 %v285
    %329 = vmatpush.msra.mxu0 %v284
    %330 = vmatpush.msra.mxu0 %v283
    %331 = vmatpush.msra.mxu0 %v282
    %332 = vmatpush.msra.mxu0 %v281
    %333 = vmatpush.msra.mxu0 %v280
    %334 = vmatpush.msra.mxu0 %v279
    %335 = vmatpush.msra.mxu0 %v278
    %336 = vmatpush.msra.mxu0 %v277
    %337 = vmatpush.msra.mxu0 %v276
    %338 = vmatpush.msra.mxu0 %v275
    %339 = vmatpush.msra.mxu0 %v274
    %340 = vmatpush.msra.mxu0 %v273
    %341 = vmatpush.msra.mxu0 %v272
    %342 = vmatpush.msra.mxu0 %v271
    %343 = vmatmul.f32.gmra.mxu0 %v83
    %v344 = vpop.f32.mrf.mxu0
    %v345 = vadd.f32 %v325, %v344
    %346 = vdwg.mxu0
    %347 = vmatpush.msra.mxu0 %v302
    %348 = vmatpush.msra.mxu0 %v301
    %349 = vmatpush.msra.mxu0 %v300
    %350 = vmatpush.msra.mxu0 %v299
    %351 = vmatpush.msra.mxu0 %v298
    %352 = vmatpush.msra.mxu0 %v297
    %353 = vmatpush.msra.mxu0 %v296
    %354 = vmatpush.msra.mxu0 %v295
    %355 = vmatpush.msra.mxu0 %v294
    %356 = vmatpush.msra.mxu0 %v293
    %357 = vmatpush.msra.mxu0 %v292
    %358 = vmatpush.msra.mxu0 %v291
    %359 = vmatpush.msra.mxu0 %v290
    %360 = vmatpush.msra.mxu0 %v289
    %361 = vmatpush.msra.mxu0 %v288
    %362 = vmatpush.msra.mxu0 %v287
    %363 = vmatmul.f32.gmra.mxu0 %v84
    %v364 = vpop.f32.mrf.mxu0
    %v365 = vadd.f32 %v345, %v364
    %366 = vdwg.mxu0
    %v368 = vperm.slane %v133, 0
    %370 = vmatpush.msra.mxu0 %v100
    %371 = vmatpush.msra.mxu0 %v99
    %372 = vmatpush.msra.mxu0 %v98
    %373 = vmatpush.msra.mxu0 %v97
    %374 = vmatpush.msra.mxu0 %v96
    %375 = vmatpush.msra.mxu0 %v95
    %376 = vmatpush.msra.mxu0 %v94
    %377 = vmatpush.msra.mxu0 %v93
    %378 = vmatpush.msra.mxu0 %v92
    %379 = vmatpush.msra.mxu0 %v91
    %380 = vmatpush.msra.mxu0 %v90
    %381 = vmatpush.msra.mxu0 %v89
    %382 = vmatpush.msra.mxu0 %v88
    %383 = vmatpush.msra.mxu0 %v87
    %384 = vmatpush.msra.mxu0 %v86
    %385 = vmatpush.msra.mxu0 %v85
    %386 = vmatmul.f32.gmra.mxu0 %v82
    %v387 = vpop.f32.mrf.mxu0
    %v388 = vadd.f32 %v368, %v387
    %389 = vdwg.mxu0
    %390 = vmatpush.msra.mxu0 %v116
    %391 = vmatpush.msra.mxu0 %v115
    %392 = vmatpush.msra.mxu0 %v114
    %393 = vmatpush.msra.mxu0 %v113
    %394 = vmatpush.msra.mxu0 %v112
    %395 = vmatpush.msra.mxu0 %v111
    %396 = vmatpush.msra.mxu0 %v110
    %397 = vmatpush.msra.mxu0 %v109
    %398 = vmatpush.msra.mxu0 %v108
    %399 = vmatpush.msra.mxu0 %v107
    %400 = vmatpush.msra.mxu0 %v106
    %401 = vmatpush.msra.mxu0 %v105
    %402 = vmatpush.msra.mxu0 %v104
    %403 = vmatpush.msra.mxu0 %v103
    %404 = vmatpush.msra.mxu0 %v102
    %405 = vmatpush.msra.mxu0 %v101
    %406 = vmatmul.f32.gmra.mxu0 %v83
    %v407 = vpop.f32.mrf.mxu0
    %v408 = vadd.f32 %v388, %v407
    %409 = vdwg.mxu0
    %410 = vmatpush.msra.mxu0 %v132
    %411 = vmatpush.msra.mxu0 %v131
    %412 = vmatpush.msra.mxu0 %v130
    %413 = vmatpush.msra.mxu0 %v129
    %414 = vmatpush.msra.mxu0 %v128
    %415 = vmatpush.msra.mxu0 %v127
    %416 = vmatpush.msra.mxu0 %v126
    %417 = vmatpush.msra.mxu0 %v125
    %418 = vmatpush.msra.mxu0 %v124
    %419 = vmatpush.msra.mxu0 %v123
    %420 = vmatpush.msra.mxu0 %v122
    %421 = vmatpush.msra.mxu0 %v121
    %422 = vmatpush.msra.mxu0 %v120
    %423 = vmatpush.msra.mxu0 %v119
    %424 = vmatpush.msra.mxu0 %v118
    %425 = vmatpush.msra.mxu0 %v117
    %426 = vmatmul.f32.gmra.mxu0 %v84
    %v427 = vpop.f32.mrf.mxu0
    %v428 = vadd.f32 %v408, %v427
    %429 = vdwg.mxu0
    %vm430 = vcmask 261120
    %v432 = vsel %vm430, %v253, 0
    %434 = vmatpush.msra.mxu0 0.0
    %435 = vmatpush.msra.mxu0 0.0
    %436 = vmatpush.msra.mxu0 0.0
    %437 = vmatpush.msra.mxu0 0.0
    %438 = vmatpush.msra.mxu0 0.0
    %439 = vmatpush.msra.mxu0 0.0
    %440 = vmatpush.msra.mxu0 0.0
    %441 = vmatpush.msra.mxu0 0.0
    %442 = vmatpush.msra.mxu0 0.0
    %443 = vmatpush.msra.mxu0 0.0
    %444 = vmatpush.msra.mxu0 0.0
    %445 = vmatpush.msra.mxu0 0.0
    %446 = vmatpush.msra.mxu0 %v137
    %447 = vmatpush.msra.mxu0 %v136
    %448 = vmatpush.msra.mxu0 %v135
    %449 = vmatpush.msra.mxu0 %v134
    %450 = vmatmul.f32.gmra.mxu0 %v432
    %v451 = vpop.f32.mrf.mxu0
    %v452 = vadd.f32 0.0, %v451
    %453 = vdwg.mxu0
    %v454 = vadd.f32 %v428, %v452
    %v455 = vxor.u32 %v454, 2147483648
    %v456 = vmul.f32 %v455, 1.442695
    %v457 = vpow.pop %v456
    %v458 = vadd.f32 %v457, 1.0
    %v459 = vrcp.pop %v458
    %v460 = vmul.f32 %v458, %v459
    %v461 = vsub.f32 1.0, %v460
    %v462 = vmul.f32 %v459, %v461
    %v463 = vadd.f32 %v459, %v462
    %vm464 = vweird.f32 %v458
    %vm465 = vweird.f32 %v459
    %vm466 = vmor %vm464, %vm465
    %v467 = vsel %vm466, %v459, %v463
    %v468 = vand.u32 2147483647, %v458
    %vm469 = vcmp.eq.f32.partialorder %v468, 8.507059e+37
    %v470 = vand.u32 %v458, 2147483648
    %v471 = vor.u32 1.1754944e-38, %v470
    %v472 = vsel %vm469, %v471, %v467
    %v473 = vmul.f32 1.0, %v472
    %v474 = vtanh.pop %v454
    %476 = vrot.lane.b32.xlu0 %v365, 32
    %v477 = vpop.permute.xlu0 %476
    %v479 = vmul.f32 %v473, %v477
    %481 = vrot.lane.b32.xlu0 %v474, 64
    %v482 = vpop.permute.xlu0 %481
    %v484 = vmul.f32 %v473, %v482
    %486 = vrot.lane.b32.xlu0 %v484, 32
    %v487 = vpop.permute.xlu0 %486
    %v489 = vadd.f32 %v479, %v487
    %v490 = vtanh.pop %v489
    %492 = vrot.lane.b32.xlu0 %v490, 64
    %v493 = vpop.permute.xlu0 %492
    %v495 = vmul.f32 %v473, %v493
    %v497 = vperm.slane %v142, 0
    %500 = vrot.lane.b32.xlu0 %v495, 32
    %v501 = vpop.permute.xlu0 %500
    %v502 = vsel %vm430, %v501, 0
    %504 = vmatpush.msra.mxu0 0.0
    %505 = vmatpush.msra.mxu0 0.0
    %506 = vmatpush.msra.mxu0 0.0
    %507 = vmatpush.msra.mxu0 0.0
    %508 = vmatpush.msra.mxu0 0.0
    %509 = vmatpush.msra.mxu0 0.0
    %510 = vmatpush.msra.mxu0 0.0
    %511 = vmatpush.msra.mxu0 0.0
    %512 = vmatpush.msra.mxu0 0.0
    %513 = vmatpush.msra.mxu0 0.0
    %514 = vmatpush.msra.mxu0 0.0
    %515 = vmatpush.msra.mxu0 0.0
    %516 = vmatpush.msra.mxu0 %v141
    %517 = vmatpush.msra.mxu0 %v140
    %518 = vmatpush.msra.mxu0 %v139
    %519 = vmatpush.msra.mxu0 %v138
    %520 = vmatmul.f32.gmra.mxu0 %v502
    %v521 = vpop.f32.mrf.mxu0
    %v522 = vadd.f32 %v497, %v521
    %523 = vdwg.mxu0
    %vm524 = vcmask 33792
    %525 = vst.msk [vmem:[%s10] sm:$0x3] %vm524, %v522
    %526 = vmatpush.msra.mxu0 0.0
    %527 = vmatpush.msra.mxu0 0.0
    %528 = vmatpush.msra.mxu0 0.0
    %529 = vmatpush.msra.mxu0 0.0
    %530 = vmatpush.msra.mxu0 0.0
    %531 = vmatpush.msra.mxu0 0.0
    %532 = vmatpush.msra.mxu0 0.0
    %533 = vmatpush.msra.mxu0 0.0
    %534 = vmatpush.msra.mxu0 0.0
    %535 = vmatpush.msra.mxu0 0.0
    %536 = vmatpush.msra.mxu0 0.0
    %537 = vmatpush.msra.mxu0 0.0
    %538 = vmatpush.msra.mxu0 %v137
    %539 = vmatpush.msra.mxu0 %v136
    %540 = vmatpush.msra.mxu0 %v135
    %541 = vmatpush.msra.mxu0 %v134
    %542 = vmatmul.f32.gmra.mxu0 %v502
    %v543 = vpop.f32.mrf.mxu0
    %v544 = vadd.f32 0.0, %v543
    %545 = vdwg.mxu0
    %v547 = vrot.slane %v544, 6
    %v549 = vadd.f32 %v428, %v547
    %v550 = vxor.u32 %v549, 2147483648
    %v551 = vmul.f32 %v550, 1.442695
    %v552 = vpow.pop %v551
    %v553 = vadd.f32 %v552, 1.0
    %v554 = vrcp.pop %v553
    %v555 = vmul.f32 %v553, %v554
    %v556 = vsub.f32 1.0, %v555
    %v557 = vmul.f32 %v554, %v556
    %v558 = vadd.f32 %v554, %v557
    %vm559 = vweird.f32 %v553
    %vm560 = vweird.f32 %v554
    %vm561 = vmor %vm559, %vm560
    %v562 = vsel %vm561, %v554, %v558
    %v563 = vand.u32 2147483647, %v553
    %vm564 = vcmp.eq.f32.partialorder %v563, 8.507059e+37
    %v565 = vand.u32 %v553, 2147483648
    %v566 = vor.u32 1.1754944e-38, %v565
    %v567 = vsel %vm564, %v566, %v562
    %v568 = vmul.f32 1.0, %v567
    %v569 = vtanh.pop %v549
    %v571 = vrot.slane %v489, 6
    %v573 = vmul.f32 %v568, %v571
    %575 = vrot.lane.b32.xlu0 %v569, 64
    %v576 = vpop.permute.xlu0 %575
    %v578 = vmul.f32 %v568, %v576
    %580 = vrot.lane.b32.xlu0 %v578, 32
    %v581 = vpop.permute.xlu0 %580
    %v583 = vadd.f32 %v573, %v581
    %v584 = vtanh.pop %v583
    %586 = vrot.lane.b32.xlu0 %v584, 64
    %v587 = vpop.permute.xlu0 %586
    %v589 = vmul.f32 %v568, %v587
    %v591 = vrot.slane %v589, 2
    %592 = vrot.lane.b32.xlu0 %v591, 32
    %v593 = vpop.permute.xlu0 %592
    %v594 = vsel %vm430, %v593, 0
    %596 = vmatpush.msra.mxu0 0.0
    %597 = vmatpush.msra.mxu0 0.0
    %598 = vmatpush.msra.mxu0 0.0
    %599 = vmatpush.msra.mxu0 0.0
    %600 = vmatpush.msra.mxu0 0.0
    %601 = vmatpush.msra.mxu0 0.0
    %602 = vmatpush.msra.mxu0 0.0
    %603 = vmatpush.msra.mxu0 0.0
    %604 = vmatpush.msra.mxu0 0.0
    %605 = vmatpush.msra.mxu0 0.0
    %606 = vmatpush.msra.mxu0 0.0
    %607 = vmatpush.msra.mxu0 0.0
    %608 = vmatpush.msra.mxu0 %v141
    %609 = vmatpush.msra.mxu0 %v140
    %610 = vmatpush.msra.mxu0 %v139
    %611 = vmatpush.msra.mxu0 %v138
    %612 = vmatmul.f32.gmra.mxu0 %v594
    %v613 = vpop.f32.mrf.mxu0
    %v614 = vadd.f32 %v497, %v613
    %615 = vdwg.mxu0
    %616 = vst.msk [vmem:[%s10 + $0x2] sm:$0x3] %vm524, %v614
    %617 = vmatpush.msra.mxu0 0.0
    %618 = vmatpush.msra.mxu0 0.0
    %619 = vmatpush.msra.mxu0 0.0
    %620 = vmatpush.msra.mxu0 0.0
    %621 = vmatpush.msra.mxu0 0.0
    %622 = vmatpush.msra.mxu0 0.0
    %623 = vmatpush.msra.mxu0 0.0
    %624 = vmatpush.msra.mxu0 0.0
    %625 = vmatpush.msra.mxu0 0.0
    %626 = vmatpush.msra.mxu0 0.0
    %627 = vmatpush.msra.mxu0 0.0
    %628 = vmatpush.msra.mxu0 0.0
    %629 = vmatpush.msra.mxu0 %v137
    %630 = vmatpush.msra.mxu0 %v136
    %631 = vmatpush.msra.mxu0 %v135
    %632 = vmatpush.msra.mxu0 %v134
    %633 = vmatmul.f32.gmra.mxu0 %v594
    %v634 = vpop.f32.mrf.mxu0
    %v635 = vadd.f32 0.0, %v634
    %636 = vdwg.mxu0
    %v638 = vrot.slane %v635, 4
    %v640 = vadd.f32 %v428, %v638
    %v641 = vxor.u32 %v640, 2147483648
    %v642 = vmul.f32 %v641, 1.442695
    %v643 = vpow.pop %v642
    %v644 = vadd.f32 %v643, 1.0
    %v645 = vrcp.pop %v644
    %v646 = vmul.f32 %v644, %v645
    %v647 = vsub.f32 1.0, %v646
    %v648 = vmul.f32 %v645, %v647
    %v649 = vadd.f32 %v645, %v648
    %vm650 = vweird.f32 %v644
    %vm651 = vweird.f32 %v645
    %vm652 = vmor %vm650, %vm651
    %v653 = vsel %vm652, %v645, %v649
    %v654 = vand.u32 2147483647, %v644
    %vm655 = vcmp.eq.f32.partialorder %v654, 8.507059e+37
    %v656 = vand.u32 %v644, 2147483648
    %v657 = vor.u32 1.1754944e-38, %v656
    %v658 = vsel %vm655, %v657, %v653
    %v659 = vmul.f32 1.0, %v658
    %v660 = vtanh.pop %v640
    %v662 = vrot.slane %v583, 6
    %v664 = vmul.f32 %v659, %v662
    %666 = vrot.lane.b32.xlu0 %v660, 64
    %v667 = vpop.permute.xlu0 %666
    %v669 = vmul.f32 %v659, %v667
    %671 = vrot.lane.b32.xlu0 %v669, 32
    %v672 = vpop.permute.xlu0 %671
    %v674 = vadd.f32 %v664, %v672
    %v675 = vtanh.pop %v674
    %677 = vrot.lane.b32.xlu0 %v675, 64
    %v678 = vpop.permute.xlu0 %677
    %v680 = vmul.f32 %v659, %v678
    %v682 = vrot.slane %v680, 4
    %683 = vrot.lane.b32.xlu0 %v682, 32
    %v684 = vpop.permute.xlu0 %683
    %v685 = vsel %vm430, %v684, 0
    %687 = vmatpush.msra.mxu0 0.0
    %688 = vmatpush.msra.mxu0 0.0
    %689 = vmatpush.msra.mxu0 0.0
    %690 = vmatpush.msra.mxu0 0.0
    %691 = vmatpush.msra.mxu0 0.0
    %692 = vmatpush.msra.mxu0 0.0
    %693 = vmatpush.msra.mxu0 0.0
    %694 = vmatpush.msra.mxu0 0.0
    %695 = vmatpush.msra.mxu0 0.0
    %696 = vmatpush.msra.mxu0 0.0
    %697 = vmatpush.msra.mxu0 0.0
    %698 = vmatpush.msra.mxu0 0.0
    %699 = vmatpush.msra.mxu0 %v141
    %700 = vmatpush.msra.mxu0 %v140
    %701 = vmatpush.msra.mxu0 %v139
    %702 = vmatpush.msra.mxu0 %v138
    %703 = vmatmul.f32.gmra.mxu0 %v685
    %v704 = vpop.f32.mrf.mxu0
    %v705 = vadd.f32 %v497, %v704
    %706 = vdwg.mxu0
    %707 = vst.msk [vmem:[%s10 + $0x4] sm:$0x3] %vm524, %v705
    %708 = vmatpush.msra.mxu0 0.0
    %709 = vmatpush.msra.mxu0 0.0
    %710 = vmatpush.msra.mxu0 0.0
    %711 = vmatpush.msra.mxu0 0.0
    %712 = vmatpush.msra.mxu0 0.0
    %713 = vmatpush.msra.mxu0 0.0
    %714 = vmatpush.msra.mxu0 0.0
    %715 = vmatpush.msra.mxu0 0.0
    %716 = vmatpush.msra.mxu0 0.0
    %717 = vmatpush.msra.mxu0 0.0
    %718 = vmatpush.msra.mxu0 0.0
    %719 = vmatpush.msra.mxu0 0.0
    %720 = vmatpush.msra.mxu0 %v137
    %721 = vmatpush.msra.mxu0 %v136
    %722 = vmatpush.msra.mxu0 %v135
    %723 = vmatpush.msra.mxu0 %v134
    %724 = vmatmul.f32.gmra.mxu0 %v685
    %v725 = vpop.f32.mrf.mxu0
    %v726 = vadd.f32 0.0, %v725
    %727 = vdwg.mxu0
    %v729 = vrot.slane %v726, 2
    %v731 = vadd.f32 %v428, %v729
    %v732 = vxor.u32 %v731, 2147483648
    %v733 = vmul.f32 %v732, 1.442695
    %v734 = vpow.pop %v733
    %v735 = vadd.f32 %v734, 1.0
    %v736 = vrcp.pop %v735
    %v737 = vmul.f32 %v735, %v736
    %v738 = vsub.f32 1.0, %v737
    %v739 = vmul.f32 %v736, %v738
    %v740 = vadd.f32 %v736, %v739
    %vm741 = vweird.f32 %v735
    %vm742 = vweird.f32 %v736
    %vm743 = vmor %vm741, %vm742
    %v744 = vsel %vm743, %v736, %v740
    %v745 = vand.u32 2147483647, %v735
    %vm746 = vcmp.eq.f32.partialorder %v745, 8.507059e+37
    %v747 = vand.u32 %v735, 2147483648
    %v748 = vor.u32 1.1754944e-38, %v747
    %v749 = vsel %vm746, %v748, %v744
    %v750 = vmul.f32 1.0, %v749
    %v751 = vtanh.pop %v731
    %v753 = vrot.slane %v674, 6
    %v755 = vmul.f32 %v750, %v753
    %757 = vrot.lane.b32.xlu0 %v751, 64
    %v758 = vpop.permute.xlu0 %757
    %v760 = vmul.f32 %v750, %v758
    %762 = vrot.lane.b32.xlu0 %v760, 32
    %v763 = vpop.permute.xlu0 %762
    %v765 = vadd.f32 %v755, %v763
    %v766 = vtanh.pop %v765
    %768 = vrot.lane.b32.xlu0 %v766, 64
    %v769 = vpop.permute.xlu0 %768
    %v771 = vmul.f32 %v750, %v769
    %v773 = vrot.slane %v771, 6
    %774 = vrot.lane.b32.xlu0 %v773, 32
    %v775 = vpop.permute.xlu0 %774
    %v776 = vsel %vm430, %v775, 0
    %778 = vmatpush.msra.mxu0 0.0
    %779 = vmatpush.msra.mxu0 0.0
    %780 = vmatpush.msra.mxu0 0.0
    %781 = vmatpush.msra.mxu0 0.0
    %782 = vmatpush.msra.mxu0 0.0
    %783 = vmatpush.msra.mxu0 0.0
    %784 = vmatpush.msra.mxu0 0.0
    %785 = vmatpush.msra.mxu0 0.0
    %786 = vmatpush.msra.mxu0 0.0
    %787 = vmatpush.msra.mxu0 0.0
    %788 = vmatpush.msra.mxu0 0.0
    %789 = vmatpush.msra.mxu0 0.0
    %790 = vmatpush.msra.mxu0 %v141
    %791 = vmatpush.msra.mxu0 %v140
    %792 = vmatpush.msra.mxu0 %v139
    %793 = vmatpush.msra.mxu0 %v138
    %794 = vmatmul.f32.gmra.mxu0 %v776
    %v795 = vpop.f32.mrf.mxu0
    %v796 = vadd.f32 %v497, %v795
    %797 = vdwg.mxu0
    %798 = vst.msk [vmem:[%s10 + $0x6] sm:$0x3] %vm524, %v796
    // Predicated region
    $region54: #{toulmin_forward.3} parent=1 // pred_check
      _
    $region55: #{toulmin_forward.3} parent=1 // pred_check_branch
      %800 = sbr.rel (0) target = $region57
    $region56: #{toulmin_forward.3} parent=1 // pred_region
      _
    $region57: #{toulmin_forward.3} parent=1 // pred_fallthru
      _
    // Predicated region
    $region58: #{toulmin_forward.3} parent=1 // pred_check
      _
    $region59: #{toulmin_forward.3} parent=1 // pred_check_branch
      %802 = sbr.rel (0) target = $region61
    $region60: #{toulmin_forward.3} parent=1 // pred_region
      _
    $region61: #{toulmin_forward.3} parent=1 // pred_fallthru
      _
    %803 = vsyncpa [#allocation3], 1
    %804 = vsyncpa [#allocation5], 1

// kernel: toulmin_forward.2
$region0: #{toulmin_forward.2}
  #allocation0 [shape = 'u32[]', space=smem, size = 0x4, offset = 0x4, fixed_abs, tag = 'smem constant byte address 0x4 - core index']
  #allocation1 [shape = 'u32[72,128]{1,0:T(1,128)}', space=vmem, size = 0x9000, scoped, tag = 'internal scratch']
  %s0 = inlined_call_operand.vmem [shape: bf16[128,300], index: 0, kind: input, shape index: {}]
  %s1 = inlined_call_operand.vmem [shape: bf16[300,1536], index: 1, kind: input, shape index: {}]
  %s2 = inlined_call_operand.vmem [shape: f32[1,384], index: 2, kind: input, shape index: {}]
  %s3 = inlined_call_operand.vmem [shape: f32[8,384], index: 3, kind: output, shape index: {}]
  %s4 = sld [smem:[#allocation0]]
  $region22: #{toulmin_forward.2} parent=0
    _
  %s6 = ssub.s32 1, %s4
  %s7 = scalar_select 0, %s6, %s4
  // Predicated region
  $region2: #{toulmin_forward.2} parent=0 // pred_check
    _
  $region3: #{toulmin_forward.2} parent=0 // pred_check_branch
    %9 = sbr.rel (0) target = $region5
  $region4: #{toulmin_forward.2} parent=0 // pred_region
    _
  $region5: #{toulmin_forward.2} parent=0 // pred_fallthru
    _
  // Predicated region
  $region6: #{toulmin_forward.2} parent=0 // pred_check
    _
  $region7: #{toulmin_forward.2} parent=0 // pred_check_branch
    %11 = sbr.rel (0) target = $region9
  $region8: #{toulmin_forward.2} parent=0 // pred_region
    _
  $region9: #{toulmin_forward.2} parent=0 // pred_fallthru
    _
  // Predicated region
  $region10: #{toulmin_forward.2} parent=0 // pred_check
    _
  $region11: #{toulmin_forward.2} parent=0 // pred_check_branch
    %13 = sbr.rel (0) target = $region13
  $region12: #{toulmin_forward.2} parent=0 // pred_region
    _
  $region13: #{toulmin_forward.2} parent=0 // pred_fallthru
    _
  %v15 = vld [vmem:[%s0] sm:$0xff]
  %v16 = vld [vmem:[%s0 + $0x8] sm:$0xf]
  %v17 = vld [vmem:[%s0 + $0xc] sm:$0xff]
  %v18 = vld [vmem:[%s0 + $0x14] sm:$0xf]
  %v19 = vld [vmem:[%s0 + $0x18] sm:$0xff]
  %v20 = vld [vmem:[%s0 + $0x20] sm:$0xf]
  %v21 = vld [vmem:[%s0 + $0x24] sm:$0xff]
  %v22 = vld [vmem:[%s0 + $0x2c] sm:$0xf]
  %v23 = vld [vmem:[%s0 + $0x30] sm:$0xff]
  %v24 = vld [vmem:[%s0 + $0x38] sm:$0xf]
  %v25 = vld [vmem:[%s0 + $0x3c] sm:$0xff]
  %v26 = vld [vmem:[%s0 + $0x44] sm:$0xf]
  %v27 = vld [vmem:[%s0 + $0x48] sm:$0xff]
  %v28 = vld [vmem:[%s0 + $0x50] sm:$0xf]
  %v29 = vld [vmem:[%s0 + $0x54] sm:$0xff]
  %v30 = vld [vmem:[%s0 + $0x5c] sm:$0xf]
  %v31 = vld [vmem:[%s0 + $0x60] sm:$0xff]
  %v32 = vld [vmem:[%s0 + $0x68] sm:$0xf]
  %v33 = vld [vmem:[%s0 + $0x6c] sm:$0xff]
  %v34 = vld [vmem:[%s0 + $0x74] sm:$0xf]
  %v35 = vld [vmem:[%s0 + $0x78] sm:$0xff]
  %v36 = vld [vmem:[%s0 + $0x80] sm:$0xf]
  %v37 = vld [vmem:[%s0 + $0x84] sm:$0xff]
  %v38 = vld [vmem:[%s0 + $0x8c] sm:$0xf]
  %v39 = vld [vmem:[%s0 + $0x90] sm:$0xff]
  %v40 = vld [vmem:[%s0 + $0x98] sm:$0xf]
  %v41 = vld [vmem:[%s0 + $0x9c] sm:$0xff]
  %v42 = vld [vmem:[%s0 + $0xa4] sm:$0xf]
  %v43 = vld [vmem:[%s0 + $0xa8] sm:$0xff]
  %v44 = vld [vmem:[%s0 + $0xb0] sm:$0xf]
  %v45 = vld [vmem:[%s0 + $0xb4] sm:$0xff]
  %v46 = vld [vmem:[%s0 + $0xbc] sm:$0xf]
  %v47 = vld [vmem:[%s1] sm:$0xff]
  %v48 = vld [vmem:[%s1 + $0x8] sm:$0xff]
  %v49 = vld [vmem:[%s1 + $0x10] sm:$0xff]
  %v50 = vld [vmem:[%s1 + $0x18] sm:$0xff]
  %v51 = vld [vmem:[%s1 + $0x20] sm:$0xff]
  %v52 = vld [vmem:[%s1 + $0x28] sm:$0xff]
  %v53 = vld [vmem:[%s1 + $0x30] sm:$0xff]
  %v54 = vld [vmem:[%s1 + $0x38] sm:$0xff]
  %v55 = vld [vmem:[%s1 + $0x40] sm:$0xff]
  %v56 = vld [vmem:[%s1 + $0x48] sm:$0xff]
  %v57 = vld [vmem:[%s1 + $0x50] sm:$0xff]
  %v58 = vld [vmem:[%s1 + $0x58] sm:$0xff]
  %v59 = vld [vmem:[%s1 + $0x60] sm:$0xff]
  %v60 = vld [vmem:[%s1 + $0x68] sm:$0xff]
  %v61 = vld [vmem:[%s1 + $0x70] sm:$0xff]
  %v62 = vld [vmem:[%s1 + $0x78] sm:$0xff]
  %v63 = vld [vmem:[%s1 + $0x80] sm:$0xff]
  %v64 = vld [vmem:[%s1 + $0x88] sm:$0xff]
  %v65 = vld [vmem:[%s1 + $0x90] sm:$0xff]
  %v66 = vld [vmem:[%s1 + $0x98] sm:$0xff]
  %v67 = vld [vmem:[%s1 + $0xa0] sm:$0xff]
  %v68 = vld [vmem:[%s1 + $0xa8] sm:$0xff]
  %v69 = vld [vmem:[%s1 + $0xb0] sm:$0xff]
  %v70 = vld [vmem:[%s1 + $0xb8] sm:$0xff]
  %v71 = vld [vmem:[%s1 + $0xc0] sm:$0xff]
  %v72 = vld [vmem:[%s1 + $0xc8] sm:$0xff]
  %v73 = vld [vmem:[%s1 + $0xd0] sm:$0xff]
  %v74 = vld [vmem:[%s1 + $0xd8] sm:$0xff]
  %v75 = vld [vmem:[%s1 + $0xe0] sm:$0xff]
  %v76 = vld [vmem:[%s1 + $0xe8] sm:$0xff]
  %v77 = vld [vmem:[%s1 + $0xf0] sm:$0xff]
  %v78 = vld [vmem:[%s1 + $0xf8] sm:$0xff]
  %v79 = vld [vmem:[%s1 + $0x100] sm:$0xff]
  %v80 = vld [vmem:[%s1 + $0x108] sm:$0xff]
  %v81 = vld [vmem:[%s1 + $0x110] sm:$0xff]
  %v82 = vld [vmem:[%s1 + $0x118] sm:$0xff]
  %v83 = vld [vmem:[%s1 + $0x120] sm:$0xff]
  %v84 = vld [vmem:[%s1 + $0x128] sm:$0xff]
  %v85 = vld [vmem:[%s1 + $0x130] sm:$0xff]
  %v86 = vld [vmem:[%s1 + $0x138] sm:$0xff]
  %v87 = vld [vmem:[%s1 + $0x140] sm:$0xff]
  %v88 = vld [vmem:[%s1 + $0x148] sm:$0xff]
  %v89 = vld [vmem:[%s1 + $0x150] sm:$0xff]
  %v90 = vld [vmem:[%s1 + $0x158] sm:$0xff]
  %v91 = vld [vmem:[%s1 + $0x160] sm:$0xff]
  %v92 = vld [vmem:[%s1 + $0x168] sm:$0xff]
  %v93 = vld [vmem:[%s1 + $0x170] sm:$0xff]
  %v94 = vld [vmem:[%s1 + $0x178] sm:$0xff]
  %v95 = vld [vmem:[%s1 + $0x180] sm:$0xff]
  %v96 = vld [vmem:[%s1 + $0x188] sm:$0xff]
  %v97 = vld [vmem:[%s1 + $0x190] sm:$0xff]
  %v98 = vld [vmem:[%s1 + $0x198] sm:$0xff]
  %v99 = vld [vmem:[%s1 + $0x1a0] sm:$0xff]
  %v100 = vld [vmem:[%s1 + $0x1a8] sm:$0xff]
  %v101 = vld [vmem:[%s1 + $0x1b0] sm:$0xff]
  %v102 = vld [vmem:[%s1 + $0x1b8] sm:$0xff]
  %v103 = vld [vmem:[%s1 + $0x1c0] sm:$0xff]
  %v104 = vld [vmem:[%s1 + $0x1c8] sm:$0xff]
  %v105 = vld [vmem:[%s1 + $0x1d0] sm:$0xff]
  %v106 = vld [vmem:[%s1 + $0x1d8] sm:$0xff]
  %v107 = vld [vmem:[%s1 + $0x1e0] sm:$0xff]
  %v108 = vld [vmem:[%s1 + $0x1e8] sm:$0xff]
  %v109 = vld [vmem:[%s1 + $0x1f0] sm:$0xff]
  %v110 = vld [vmem:[%s1 + $0x1f8] sm:$0xff]
  %v111 = vld [vmem:[%s1 + $0x200] sm:$0xff]
  %v112 = vld [vmem:[%s1 + $0x208] sm:$0xff]
  %v113 = vld [vmem:[%s1 + $0x210] sm:$0xff]
  %v114 = vld [vmem:[%s1 + $0x218] sm:$0xff]
  %v115 = vld [vmem:[%s1 + $0x220] sm:$0xff]
  %v116 = vld [vmem:[%s1 + $0x228] sm:$0xff]
  %v117 = vld [vmem:[%s1 + $0x230] sm:$0xff]
  %v118 = vld [vmem:[%s1 + $0x238] sm:$0xff]
  %v119 = vld [vmem:[%s1 + $0x240] sm:$0xff]
  %v120 = vld [vmem:[%s1 + $0x248] sm:$0xff]
  %v121 = vld [vmem:[%s1 + $0x250] sm:$0xff]
  %v122 = vld [vmem:[%s1 + $0x258] sm:$0xff]
  %v123 = vld [vmem:[%s1 + $0x260] sm:$0xff]
  %v124 = vld [vmem:[%s1 + $0x268] sm:$0xff]
  %v125 = vld [vmem:[%s1 + $0x270] sm:$0xff]
  %v126 = vld [vmem:[%s1 + $0x278] sm:$0xff]
  %v127 = vld [vmem:[%s1 + $0x280] sm:$0xff]
  %v128 = vld [vmem:[%s1 + $0x288] sm:$0xff]
  %v129 = vld [vmem:[%s1 + $0x290] sm:$0xff]
  %v130 = vld [vmem:[%s1 + $0x298] sm:$0xff]
  %v131 = vld [vmem:[%s1 + $0x2a0] sm:$0xff]
  %v132 = vld [vmem:[%s1 + $0x2a8] sm:$0xff]
  %v133 = vld [vmem:[%s1 + $0x2b0] sm:$0xff]
  %v134 = vld [vmem:[%s1 + $0x2b8] sm:$0xff]
  %v135 = vld [vmem:[%s1 + $0x2c0] sm:$0xff]
  %v136 = vld [vmem:[%s1 + $0x2c8] sm:$0xff]
  %v137 = vld [vmem:[%s1 + $0x2d0] sm:$0xff]
  %v138 = vld [vmem:[%s1 + $0x2d8] sm:$0xff]
  %v139 = vld [vmem:[%s1 + $0x2e0] sm:$0xff]
  %v140 = vld [vmem:[%s1 + $0x2e8] sm:$0xff]
  %v141 = vld [vmem:[%s1 + $0x2f0] sm:$0xff]
  %v142 = vld [vmem:[%s1 + $0x2f8] sm:$0xff]
  %v143 = vld [vmem:[%s1 + $0x300] sm:$0xff]
  %v144 = vld [vmem:[%s1 + $0x308] sm:$0xff]
  %v145 = vld [vmem:[%s1 + $0x310] sm:$0xff]
  %v146 = vld [vmem:[%s1 + $0x318] sm:$0xff]
  %v147 = vld [vmem:[%s1 + $0x320] sm:$0xff]
  %v148 = vld [vmem:[%s1 + $0x328] sm:$0xff]
  %v149 = vld [vmem:[%s1 + $0x330] sm:$0xff]
  %v150 = vld [vmem:[%s1 + $0x338] sm:$0xff]
  %v151 = vld [vmem:[%s1 + $0x340] sm:$0xff]
  %v152 = vld [vmem:[%s1 + $0x348] sm:$0xff]
  %v153 = vld [vmem:[%s1 + $0x350] sm:$0xff]
  %v154 = vld [vmem:[%s1 + $0x358] sm:$0xff]
  %v155 = vld [vmem:[%s1 + $0x360] sm:$0xff]
  %v156 = vld [vmem:[%s1 + $0x368] sm:$0xff]
  %v157 = vld [vmem:[%s1 + $0x370] sm:$0xff]
  %v158 = vld [vmem:[%s1 + $0x378] sm:$0xff]
  %v159 = vld [vmem:[%s1 + $0x380] sm:$0xff]
  %v160 = vld [vmem:[%s1 + $0x388] sm:$0xff]
  %v161 = vld [vmem:[%s1 + $0x390] sm:$0xff]
  %v162 = vld [vmem:[%s1 + $0x398] sm:$0xff]
  %v163 = vld [vmem:[%s1 + $0x3a0] sm:$0xff]
  %v164 = vld [vmem:[%s1 + $0x3a8] sm:$0xff]
  %v165 = vld [vmem:[%s1 + $0x3b0] sm:$0xff]
  %v166 = vld [vmem:[%s1 + $0x3b8] sm:$0xff]
  %v167 = vld [vmem:[%s1 + $0x3c0] sm:$0xff]
  %v168 = vld [vmem:[%s1 + $0x3c8] sm:$0xff]
  %v169 = vld [vmem:[%s1 + $0x3d0] sm:$0xff]
  %v170 = vld [vmem:[%s1 + $0x3d8] sm:$0xff]
  %v171 = vld [vmem:[%s1 + $0x3e0] sm:$0xff]
  %v172 = vld [vmem:[%s1 + $0x3e8] sm:$0xff]
  %v173 = vld [vmem:[%s1 + $0x3f0] sm:$0xff]
  %v174 = vld [vmem:[%s1 + $0x3f8] sm:$0xff]
  %v175 = vld [vmem:[%s1 + $0x400] sm:$0xff]
  %v176 = vld [vmem:[%s1 + $0x408] sm:$0xff]
  %v177 = vld [vmem:[%s1 + $0x410] sm:$0xff]
  %v178 = vld [vmem:[%s1 + $0x418] sm:$0xff]
  %v179 = vld [vmem:[%s1 + $0x420] sm:$0xff]
  %v180 = vld [vmem:[%s1 + $0x428] sm:$0xff]
  %v181 = vld [vmem:[%s1 + $0x430] sm:$0xff]
  %v182 = vld [vmem:[%s1 + $0x438] sm:$0xff]
  %v183 = vld [vmem:[%s1 + $0x440] sm:$0xff]
  %v184 = vld [vmem:[%s1 + $0x448] sm:$0xff]
  %v185 = vld [vmem:[%s1 + $0x450] sm:$0xff]
  %v186 = vld [vmem:[%s1 + $0x458] sm:$0xff]
  %v187 = vld [vmem:[%s1 + $0x460] sm:$0xff]
  %v188 = vld [vmem:[%s1 + $0x468] sm:$0xff]
  %v189 = vld [vmem:[%s1 + $0x470] sm:$0xff]
  %v190 = vld [vmem:[%s1 + $0x478] sm:$0xff]
  %v191 = vld [vmem:[%s1 + $0x480] sm:$0xff]
  %v192 = vld [vmem:[%s1 + $0x488] sm:$0xff]
  %v193 = vld [vmem:[%s1 + $0x490] sm:$0xff]
  %v194 = vld [vmem:[%s1 + $0x498] sm:$0xff]
  %v195 = vld [vmem:[%s1 + $0x4a0] sm:$0xff]
  %v196 = vld [vmem:[%s1 + $0x4a8] sm:$0xff]
  %v197 = vld [vmem:[%s1 + $0x4b0] sm:$0xff]
  %v198 = vld [vmem:[%s1 + $0x4b8] sm:$0xff]
  %v199 = vld [vmem:[%s1 + $0x4c0] sm:$0xff]
  %v200 = vld [vmem:[%s1 + $0x4c8] sm:$0xff]
  %v201 = vld [vmem:[%s1 + $0x4d0] sm:$0xff]
  %v202 = vld [vmem:[%s1 + $0x4d8] sm:$0xff]
  %v203 = vld [vmem:[%s1 + $0x4e0] sm:$0xff]
  %v204 = vld [vmem:[%s1 + $0x4e8] sm:$0xff]
  %v205 = vld [vmem:[%s1 + $0x4f0] sm:$0xff]
  %v206 = vld [vmem:[%s1 + $0x4f8] sm:$0xff]
  %v207 = vld [vmem:[%s1 + $0x500] sm:$0xff]
  %v208 = vld [vmem:[%s1 + $0x508] sm:$0xff]
  %v209 = vld [vmem:[%s1 + $0x510] sm:$0xff]
  %v210 = vld [vmem:[%s1 + $0x518] sm:$0xff]
  %v211 = vld [vmem:[%s1 + $0x520] sm:$0xff]
  %v212 = vld [vmem:[%s1 + $0x528] sm:$0xff]
  %v213 = vld [vmem:[%s1 + $0x530] sm:$0xff]
  %v214 = vld [vmem:[%s1 + $0x538] sm:$0xff]
  %v215 = vld [vmem:[%s1 + $0x540] sm:$0xff]
  %v216 = vld [vmem:[%s1 + $0x548] sm:$0xff]
  %v217 = vld [vmem:[%s1 + $0x550] sm:$0xff]
  %v218 = vld [vmem:[%s1 + $0x558] sm:$0xff]
  %v219 = vld [vmem:[%s1 + $0x560] sm:$0xff]
  %v220 = vld [vmem:[%s1 + $0x568] sm:$0xff]
  %v221 = vld [vmem:[%s1 + $0x570] sm:$0xff]
  %v222 = vld [vmem:[%s1 + $0x578] sm:$0xff]
  %v223 = vld [vmem:[%s1 + $0x580] sm:$0xff]
  %v224 = vld [vmem:[%s1 + $0x588] sm:$0xff]
  %v225 = vld [vmem:[%s1 + $0x590] sm:$0xff]
  %v226 = vld [vmem:[%s1 + $0x598] sm:$0xff]
  %v227 = vld [vmem:[%s1 + $0x5a0] sm:$0xff]
  %v228 = vld [vmem:[%s1 + $0x5a8] sm:$0xff]
  %v229 = vld [vmem:[%s1 + $0x5b0] sm:$0xff]
  %v230 = vld [vmem:[%s1 + $0x5b8] sm:$0xff]
  %v231 = vld [vmem:[%s1 + $0x5c0] sm:$0xff]
  %v232 = vld [vmem:[%s1 + $0x5c8] sm:$0xff]
  %v233 = vld [vmem:[%s1 + $0x5d0] sm:$0xff]
  %v234 = vld [vmem:[%s1 + $0x5d8] sm:$0xff]
  %v235 = vld [vmem:[%s1 + $0x5e0] sm:$0xff]
  %v236 = vld [vmem:[%s1 + $0x5e8] sm:$0xff]
  %v237 = vld [vmem:[%s1 + $0x5f0] sm:$0xff]
  %v238 = vld [vmem:[%s1 + $0x5f8] sm:$0xff]
  %v239 = vld [vmem:[%s1 + $0x600] sm:$0xff]
  %v240 = vld [vmem:[%s1 + $0x608] sm:$0xff]
  %v241 = vld [vmem:[%s1 + $0x610] sm:$0xff]
  %v242 = vld [vmem:[%s1 + $0x618] sm:$0xff]
  %v243 = vld [vmem:[%s1 + $0x620] sm:$0xff]
  %v244 = vld [vmem:[%s1 + $0x628] sm:$0xff]
  %v245 = vld [vmem:[%s1 + $0x630] sm:$0xff]
  %v246 = vld [vmem:[%s1 + $0x638] sm:$0xff]
  %v247 = vld [vmem:[%s1 + $0x640] sm:$0xff]
  %v248 = vld [vmem:[%s1 + $0x648] sm:$0xff]
  %v249 = vld [vmem:[%s1 + $0x650] sm:$0xff]
  %v250 = vld [vmem:[%s1 + $0x658] sm:$0xff]
  %v251 = vld [vmem:[%s1 + $0x660] sm:$0xff]
  %v252 = vld [vmem:[%s1 + $0x668] sm:$0xff]
  %v253 = vld [vmem:[%s1 + $0x670] sm:$0xff]
  %v254 = vld [vmem:[%s1 + $0x678] sm:$0xff]
  %v255 = vld [vmem:[%s1 + $0x680] sm:$0xff]
  %v256 = vld [vmem:[%s1 + $0x688] sm:$0xff]
  %v257 = vld [vmem:[%s1 + $0x690] sm:$0xff]
  %v258 = vld [vmem:[%s1 + $0x698] sm:$0xff]
  %v259 = vld [vmem:[%s1 + $0x6a0] sm:$0xff]
  %v260 = vld [vmem:[%s1 + $0x6a8] sm:$0xff]
  %v261 = vld [vmem:[%s1 + $0x6b0] sm:$0xff]
  %v262 = vld [vmem:[%s1 + $0x6b8] sm:$0xff]
  %v263 = vld [vmem:[%s1 + $0x6c0] sm:$0xff]
  %v264 = vld [vmem:[%s1 + $0x6c8] sm:$0xff]
  %v265 = vld [vmem:[%s1 + $0x6d0] sm:$0xff]
  %v266 = vld [vmem:[%s1 + $0x6d8] sm:$0xff]
  %v267 = vld [vmem:[%s1 + $0x6e0] sm:$0xff]
  %v268 = vld [vmem:[%s1 + $0x6e8] sm:$0xff]
  %v269 = vld [vmem:[%s1 + $0x6f0] sm:$0x33]
  %v270 = vld [vmem:[%s1 + $0x6f8] sm:$0x33]
  %v271 = vld [vmem:[%s1 + $0x700] sm:$0x33]
  %v272 = vld [vmem:[%s1 + $0x708] sm:$0x33]
  %v273 = vld [vmem:[%s1 + $0x710] sm:$0x33]
  %v274 = vld [vmem:[%s1 + $0x718] sm:$0x33]
  %v307 = vunpack.c.l.b16 %v15
  %v308 = vunpack.c.h.b16 %v15
  %v309 = vunpack.c.l.b16 %v16
  %v310 = vunpack.c.l.b16 %v17
  %v311 = vunpack.c.h.b16 %v17
  %v312 = vunpack.c.l.b16 %v18
  %v313 = vunpack.c.l.b16 %v19
  %v314 = vunpack.c.h.b16 %v19
  %v315 = vunpack.c.l.b16 %v20
  %v316 = vunpack.c.l.b16 %v21
  %v317 = vunpack.c.h.b16 %v21
  %v318 = vunpack.c.l.b16 %v22
  %v319 = vunpack.c.l.b16 %v23
  %v320 = vunpack.c.h.b16 %v23
  %v321 = vunpack.c.l.b16 %v24
  %v322 = vunpack.c.l.b16 %v25
  %v323 = vunpack.c.h.b16 %v25
  %v324 = vunpack.c.l.b16 %v26
  %v325 = vunpack.c.l.b16 %v27
  %v326 = vunpack.c.h.b16 %v27
  %v327 = vunpack.c.l.b16 %v28
  %v328 = vunpack.c.l.b16 %v29
  %v329 = vunpack.c.h.b16 %v29
  %v330 = vunpack.c.l.b16 %v30
  %v331 = vunpack.c.l.b16 %v31
  %v332 = vunpack.c.h.b16 %v31
  %v333 = vunpack.c.l.b16 %v32
  %v334 = vunpack.c.l.b16 %v33
  %v335 = vunpack.c.h.b16 %v33
  %v336 = vunpack.c.l.b16 %v34
  %v337 = vunpack.c.l.b16 %v35
  %v338 = vunpack.c.h.b16 %v35
  %v339 = vunpack.c.l.b16 %v36
  %v340 = vunpack.c.l.b16 %v37
  %v341 = vunpack.c.h.b16 %v37
  %v342 = vunpack.c.l.b16 %v38
  %v343 = vunpack.c.l.b16 %v39
  %v344 = vunpack.c.h.b16 %v39
  %v345 = vunpack.c.l.b16 %v40
  %v346 = vunpack.c.l.b16 %v41
  %v347 = vunpack.c.h.b16 %v41
  %v348 = vunpack.c.l.b16 %v42
  %v349 = vunpack.c.l.b16 %v43
  %v350 = vunpack.c.h.b16 %v43
  %v351 = vunpack.c.l.b16 %v44
  %v352 = vunpack.c.l.b16 %v45
  %v353 = vunpack.c.h.b16 %v45
  %v354 = vunpack.c.l.b16 %v46
  %v355 = vpack.c.b16 %v310, %v307
  %v356 = vpack.c.b16 %v311, %v308
  %v357 = vpack.c.b16 %v312, %v309
  %v358 = vpack.c.b16 %v316, %v313
  %v359 = vpack.c.b16 %v317, %v314
  %v360 = vpack.c.b16 %v318, %v315
  %v361 = vpack.c.b16 %v322, %v319
  %v362 = vpack.c.b16 %v323, %v320
  %v363 = vpack.c.b16 %v324, %v321
  %v364 = vpack.c.b16 %v328, %v325
  %v365 = vpack.c.b16 %v329, %v326
  %v366 = vpack.c.b16 %v330, %v327
  %v367 = vpack.c.b16 %v334, %v331
  %v368 = vpack.c.b16 %v335, %v332
  %v369 = vpack.c.b16 %v336, %v333
  %v370 = vpack.c.b16 %v340, %v337
  %v371 = vpack.c.b16 %v341, %v338
  %v372 = vpack.c.b16 %v342, %v339
  %v373 = vpack.c.b16 %v346, %v343
  %v374 = vpack.c.b16 %v347, %v344
  %v375 = vpack.c.b16 %v348, %v345
  %v376 = vpack.c.b16 %v352, %v349
  %v377 = vpack.c.b16 %v353, %v350
  %v378 = vpack.c.b16 %v354, %v351
  %v623 = vunpack.c.l.b16 %v47
  %v624 = vunpack.c.h.b16 %v47
  %v625 = vunpack.c.l.b16 %v48
  %v626 = vunpack.c.h.b16 %v48
  %v627 = vunpack.c.l.b16 %v49
  %v628 = vunpack.c.h.b16 %v49
  %v629 = vunpack.c.l.b16 %v50
  %v630 = vunpack.c.h.b16 %v50
  %v631 = vunpack.c.l.b16 %v51
  %v632 = vunpack.c.h.b16 %v51
  %v633 = vunpack.c.l.b16 %v52
  %v634 = vunpack.c.h.b16 %v52
  %v635 = vunpack.c.l.b16 %v53
  %v636 = vunpack.c.h.b16 %v53
  %v637 = vunpack.c.l.b16 %v54
  %v638 = vunpack.c.h.b16 %v54
  %v639 = vunpack.c.l.b16 %v55
  %v640 = vunpack.c.h.b16 %v55
  %v641 = vunpack.c.l.b16 %v56
  %v642 = vunpack.c.h.b16 %v56
  %v643 = vunpack.c.l.b16 %v57
  %v644 = vunpack.c.h.b16 %v57
  %v645 = vunpack.c.l.b16 %v58
  %v646 = vunpack.c.h.b16 %v58
  %v647 = vunpack.c.l.b16 %v59
  %v648 = vunpack.c.h.b16 %v59
  %v649 = vunpack.c.l.b16 %v60
  %v650 = vunpack.c.h.b16 %v60
  %v651 = vunpack.c.l.b16 %v61
  %v652 = vunpack.c.h.b16 %v61
  %v653 = vunpack.c.l.b16 %v62
  %v654 = vunpack.c.h.b16 %v62
  %v655 = vunpack.c.l.b16 %v63
  %v656 = vunpack.c.h.b16 %v63
  %v657 = vunpack.c.l.b16 %v64
  %v658 = vunpack.c.h.b16 %v64
  %v659 = vunpack.c.l.b16 %v65
  %v660 = vunpack.c.h.b16 %v65
  %v661 = vunpack.c.l.b16 %v66
  %v662 = vunpack.c.h.b16 %v66
  %v663 = vunpack.c.l.b16 %v67
  %v664 = vunpack.c.h.b16 %v67
  %v665 = vunpack.c.l.b16 %v68
  %v666 = vunpack.c.h.b16 %v68
  %v667 = vunpack.c.l.b16 %v69
  %v668 = vunpack.c.h.b16 %v69
  %v669 = vunpack.c.l.b16 %v70
  %v670 = vunpack.c.h.b16 %v70
  %v671 = vunpack.c.l.b16 %v71
  %v672 = vunpack.c.h.b16 %v71
  %v673 = vunpack.c.l.b16 %v72
  %v674 = vunpack.c.h.b16 %v72
  %v675 = vunpack.c.l.b16 %v73
  %v676 = vunpack.c.h.b16 %v73
  %v677 = vunpack.c.l.b16 %v74
  %v678 = vunpack.c.h.b16 %v74
  %v679 = vunpack.c.l.b16 %v75
  %v680 = vunpack.c.h.b16 %v75
  %v681 = vunpack.c.l.b16 %v76
  %v682 = vunpack.c.h.b16 %v76
  %v683 = vunpack.c.l.b16 %v77
  %v684 = vunpack.c.h.b16 %v77
  %v685 = vunpack.c.l.b16 %v78
  %v686 = vunpack.c.h.b16 %v78
  %v687 = vunpack.c.l.b16 %v79
  %v688 = vunpack.c.h.b16 %v79
  %v689 = vunpack.c.l.b16 %v80
  %v690 = vunpack.c.h.b16 %v80
  %v691 = vunpack.c.l.b16 %v81
  %v692 = vunpack.c.h.b16 %v81
  %v693 = vunpack.c.l.b16 %v82
  %v694 = vunpack.c.h.b16 %v82
  %v695 = vunpack.c.l.b16 %v83
  %v696 = vunpack.c.h.b16 %v83
  %v697 = vunpack.c.l.b16 %v84
  %v698 = vunpack.c.h.b16 %v84
  %v699 = vunpack.c.l.b16 %v85
  %v700 = vunpack.c.h.b16 %v85
  %v701 = vunpack.c.l.b16 %v86
  %v702 = vunpack.c.h.b16 %v86
  %v703 = vunpack.c.l.b16 %v87
  %v704 = vunpack.c.h.b16 %v87
  %v705 = vunpack.c.l.b16 %v88
  %v706 = vunpack.c.h.b16 %v88
  %v707 = vunpack.c.l.b16 %v89
  %v708 = vunpack.c.h.b16 %v89
  %v709 = vunpack.c.l.b16 %v90
  %v710 = vunpack.c.h.b16 %v90
  %v711 = vunpack.c.l.b16 %v91
  %v712 = vunpack.c.h.b16 %v91
  %v713 = vunpack.c.l.b16 %v92
  %v714 = vunpack.c.h.b16 %v92
  %v715 = vunpack.c.l.b16 %v93
  %v716 = vunpack.c.h.b16 %v93
  %v717 = vunpack.c.l.b16 %v94
  %v718 = vunpack.c.h.b16 %v94
  %v719 = vunpack.c.l.b16 %v95
  %v720 = vunpack.c.h.b16 %v95
  %v721 = vunpack.c.l.b16 %v96
  %v722 = vunpack.c.h.b16 %v96
  %v723 = vunpack.c.l.b16 %v97
  %v724 = vunpack.c.h.b16 %v97
  %v725 = vunpack.c.l.b16 %v98
  %v726 = vunpack.c.h.b16 %v98
  %v727 = vunpack.c.l.b16 %v99
  %v728 = vunpack.c.h.b16 %v99
  %v729 = vunpack.c.l.b16 %v100
  %v730 = vunpack.c.h.b16 %v100
  %v731 = vunpack.c.l.b16 %v101
  %v732 = vunpack.c.h.b16 %v101
  %v733 = vunpack.c.l.b16 %v102
  %v734 = vunpack.c.h.b16 %v102
  %v735 = vunpack.c.l.b16 %v103
  %v736 = vunpack.c.h.b16 %v103
  %v737 = vunpack.c.l.b16 %v104
  %v738 = vunpack.c.h.b16 %v104
  %v739 = vunpack.c.l.b16 %v105
  %v740 = vunpack.c.h.b16 %v105
  %v741 = vunpack.c.l.b16 %v106
  %v742 = vunpack.c.h.b16 %v106
  %v743 = vunpack.c.l.b16 %v107
  %v744 = vunpack.c.h.b16 %v107
  %v745 = vunpack.c.l.b16 %v108
  %v746 = vunpack.c.h.b16 %v108
  %v747 = vunpack.c.l.b16 %v109
  %v748 = vunpack.c.h.b16 %v109
  %v749 = vunpack.c.l.b16 %v110
  %v750 = vunpack.c.h.b16 %v110
  %v751 = vunpack.c.l.b16 %v111
  %v752 = vunpack.c.h.b16 %v111
  %v753 = vunpack.c.l.b16 %v112
  %v754 = vunpack.c.h.b16 %v112
  %v755 = vunpack.c.l.b16 %v113
  %v756 = vunpack.c.h.b16 %v113
  %v757 = vunpack.c.l.b16 %v114
  %v758 = vunpack.c.h.b16 %v114
  %v759 = vunpack.c.l.b16 %v115
  %v760 = vunpack.c.h.b16 %v115
  %v761 = vunpack.c.l.b16 %v116
  %v762 = vunpack.c.h.b16 %v116
  %v763 = vunpack.c.l.b16 %v117
  %v764 = vunpack.c.h.b16 %v117
  %v765 = vunpack.c.l.b16 %v118
  %v766 = vunpack.c.h.b16 %v118
  %v767 = vunpack.c.l.b16 %v119
  %v768 = vunpack.c.h.b16 %v119
  %v769 = vunpack.c.l.b16 %v120
  %v770 = vunpack.c.h.b16 %v120
  %v771 = vunpack.c.l.b16 %v121
  %v772 = vunpack.c.h.b16 %v121
  %v773 = vunpack.c.l.b16 %v122
  %v774 = vunpack.c.h.b16 %v122
  %v775 = vunpack.c.l.b16 %v123
  %v776 = vunpack.c.h.b16 %v123
  %v777 = vunpack.c.l.b16 %v124
  %v778 = vunpack.c.h.b16 %v124
  %v779 = vunpack.c.l.b16 %v125
  %v780 = vunpack.c.h.b16 %v125
  %v781 = vunpack.c.l.b16 %v126
  %v782 = vunpack.c.h.b16 %v126
  %v783 = vunpack.c.l.b16 %v127
  %v784 = vunpack.c.h.b16 %v127
  %v785 = vunpack.c.l.b16 %v128
  %v786 = vunpack.c.h.b16 %v128
  %v787 = vunpack.c.l.b16 %v129
  %v788 = vunpack.c.h.b16 %v129
  %v789 = vunpack.c.l.b16 %v130
  %v790 = vunpack.c.h.b16 %v130
  %v791 = vunpack.c.l.b16 %v131
  %v792 = vunpack.c.h.b16 %v131
  %v793 = vunpack.c.l.b16 %v132
  %v794 = vunpack.c.h.b16 %v132
  %v795 = vunpack.c.l.b16 %v133
  %v796 = vunpack.c.h.b16 %v133
  %v797 = vunpack.c.l.b16 %v134
  %v798 = vunpack.c.h.b16 %v134
  %v799 = vunpack.c.l.b16 %v135
  %v800 = vunpack.c.h.b16 %v135
  %v801 = vunpack.c.l.b16 %v136
  %v802 = vunpack.c.h.b16 %v136
  %v803 = vunpack.c.l.b16 %v137
  %v804 = vunpack.c.h.b16 %v137
  %v805 = vunpack.c.l.b16 %v138
  %v806 = vunpack.c.h.b16 %v138
  %v807 = vunpack.c.l.b16 %v139
  %v808 = vunpack.c.h.b16 %v139
  %v809 = vunpack.c.l.b16 %v140
  %v810 = vunpack.c.h.b16 %v140
  %v811 = vunpack.c.l.b16 %v141
  %v812 = vunpack.c.h.b16 %v141
  %v813 = vunpack.c.l.b16 %v142
  %v814 = vunpack.c.h.b16 %v142
  %v815 = vunpack.c.l.b16 %v143
  %v816 = vunpack.c.h.b16 %v143
  %v817 = vunpack.c.l.b16 %v144
  %v818 = vunpack.c.h.b16 %v144
  %v819 = vunpack.c.l.b16 %v145
  %v820 = vunpack.c.h.b16 %v145
  %v821 = vunpack.c.l.b16 %v146
  %v822 = vunpack.c.h.b16 %v146
  %v823 = vunpack.c.l.b16 %v147
  %v824 = vunpack.c.h.b16 %v147
  %v825 = vunpack.c.l.b16 %v148
  %v826 = vunpack.c.h.b16 %v148
  %v827 = vunpack.c.l.b16 %v149
  %v828 = vunpack.c.h.b16 %v149
  %v829 = vunpack.c.l.b16 %v150
  %v830 = vunpack.c.h.b16 %v150
  %v831 = vunpack.c.l.b16 %v151
  %v832 = vunpack.c.h.b16 %v151
  %v833 = vunpack.c.l.b16 %v152
  %v834 = vunpack.c.h.b16 %v152
  %v835 = vunpack.c.l.b16 %v153
  %v836 = vunpack.c.h.b16 %v153
  %v837 = vunpack.c.l.b16 %v154
  %v838 = vunpack.c.h.b16 %v154
  %v839 = vunpack.c.l.b16 %v155
  %v840 = vunpack.c.h.b16 %v155
  %v841 = vunpack.c.l.b16 %v156
  %v842 = vunpack.c.h.b16 %v156
  %v843 = vunpack.c.l.b16 %v157
  %v844 = vunpack.c.h.b16 %v157
  %v845 = vunpack.c.l.b16 %v158
  %v846 = vunpack.c.h.b16 %v158
  %v847 = vunpack.c.l.b16 %v159
  %v848 = vunpack.c.h.b16 %v159
  %v849 = vunpack.c.l.b16 %v160
  %v850 = vunpack.c.h.b16 %v160
  %v851 = vunpack.c.l.b16 %v161
  %v852 = vunpack.c.h.b16 %v161
  %v853 = vunpack.c.l.b16 %v162
  %v854 = vunpack.c.h.b16 %v162
  %v855 = vunpack.c.l.b16 %v163
  %v856 = vunpack.c.h.b16 %v163
  %v857 = vunpack.c.l.b16 %v164
  %v858 = vunpack.c.h.b16 %v164
  %v859 = vunpack.c.l.b16 %v165
  %v860 = vunpack.c.h.b16 %v165
  %v861 = vunpack.c.l.b16 %v166
  %v862 = vunpack.c.h.b16 %v166
  %v863 = vunpack.c.l.b16 %v167
  %v864 = vunpack.c.h.b16 %v167
  %v865 = vunpack.c.l.b16 %v168
  %v866 = vunpack.c.h.b16 %v168
  %v867 = vunpack.c.l.b16 %v169
  %v868 = vunpack.c.h.b16 %v169
  %v869 = vunpack.c.l.b16 %v170
  %v870 = vunpack.c.h.b16 %v170
  %v871 = vunpack.c.l.b16 %v171
  %v872 = vunpack.c.h.b16 %v171
  %v873 = vunpack.c.l.b16 %v172
  %v874 = vunpack.c.h.b16 %v172
  %v875 = vunpack.c.l.b16 %v173
  %v876 = vunpack.c.h.b16 %v173
  %v877 = vunpack.c.l.b16 %v174
  %v878 = vunpack.c.h.b16 %v174
  %v879 = vunpack.c.l.b16 %v175
  %v880 = vunpack.c.h.b16 %v175
  %v881 = vunpack.c.l.b16 %v176
  %v882 = vunpack.c.h.b16 %v176
  %v883 = vunpack.c.l.b16 %v177
  %v884 = vunpack.c.h.b16 %v177
  %v885 = vunpack.c.l.b16 %v178
  %v886 = vunpack.c.h.b16 %v178
  %v887 = vunpack.c.l.b16 %v179
  %v888 = vunpack.c.h.b16 %v179
  %v889 = vunpack.c.l.b16 %v180
  %v890 = vunpack.c.h.b16 %v180
  %v891 = vunpack.c.l.b16 %v181
  %v892 = vunpack.c.h.b16 %v181
  %v893 = vunpack.c.l.b16 %v182
  %v894 = vunpack.c.h.b16 %v182
  %v895 = vunpack.c.l.b16 %v183
  %v896 = vunpack.c.h.b16 %v183
  %v897 = vunpack.c.l.b16 %v184
  %v898 = vunpack.c.h.b16 %v184
  %v899 = vunpack.c.l.b16 %v185
  %v900 = vunpack.c.h.b16 %v185
  %v901 = vunpack.c.l.b16 %v186
  %v902 = vunpack.c.h.b16 %v186
  %v903 = vunpack.c.l.b16 %v187
  %v904 = vunpack.c.h.b16 %v187
  %v905 = vunpack.c.l.b16 %v188
  %v906 = vunpack.c.h.b16 %v188
  %v907 = vunpack.c.l.b16 %v189
  %v908 = vunpack.c.h.b16 %v189
  %v909 = vunpack.c.l.b16 %v190
  %v910 = vunpack.c.h.b16 %v190
  %v911 = vunpack.c.l.b16 %v191
  %v912 = vunpack.c.h.b16 %v191
  %v913 = vunpack.c.l.b16 %v192
  %v914 = vunpack.c.h.b16 %v192
  %v915 = vunpack.c.l.b16 %v193
  %v916 = vunpack.c.h.b16 %v193
  %v917 = vunpack.c.l.b16 %v194
  %v918 = vunpack.c.h.b16 %v194
  %v919 = vunpack.c.l.b16 %v195
  %v920 = vunpack.c.h.b16 %v195
  %v921 = vunpack.c.l.b16 %v196
  %v922 = vunpack.c.h.b16 %v196
  %v923 = vunpack.c.l.b16 %v197
  %v924 = vunpack.c.h.b16 %v197
  %v925 = vunpack.c.l.b16 %v198
  %v926 = vunpack.c.h.b16 %v198
  %v927 = vunpack.c.l.b16 %v199
  %v928 = vunpack.c.h.b16 %v199
  %v929 = vunpack.c.l.b16 %v200
  %v930 = vunpack.c.h.b16 %v200
  %v931 = vunpack.c.l.b16 %v201
  %v932 = vunpack.c.h.b16 %v201
  %v933 = vunpack.c.l.b16 %v202
  %v934 = vunpack.c.h.b16 %v202
  %v935 = vunpack.c.l.b16 %v203
  %v936 = vunpack.c.h.b16 %v203
  %v937 = vunpack.c.l.b16 %v204
  %v938 = vunpack.c.h.b16 %v204
  %v939 = vunpack.c.l.b16 %v205
  %v940 = vunpack.c.h.b16 %v205
  %v941 = vunpack.c.l.b16 %v206
  %v942 = vunpack.c.h.b16 %v206
  %v943 = vunpack.c.l.b16 %v207
  %v944 = vunpack.c.h.b16 %v207
  %v945 = vunpack.c.l.b16 %v208
  %v946 = vunpack.c.h.b16 %v208
  %v947 = vunpack.c.l.b16 %v209
  %v948 = vunpack.c.h.b16 %v209
  %v949 = vunpack.c.l.b16 %v210
  %v950 = vunpack.c.h.b16 %v210
  %v951 = vunpack.c.l.b16 %v211
  %v952 = vunpack.c.h.b16 %v211
  %v953 = vunpack.c.l.b16 %v212
  %v954 = vunpack.c.h.b16 %v212
  %v955 = vunpack.c.l.b16 %v213
  %v956 = vunpack.c.h.b16 %v213
  %v957 = vunpack.c.l.b16 %v214
  %v958 = vunpack.c.h.b16 %v214
  %v959 = vunpack.c.l.b16 %v215
  %v960 = vunpack.c.h.b16 %v215
  %v961 = vunpack.c.l.b16 %v216
  %v962 = vunpack.c.h.b16 %v216
  %v963 = vunpack.c.l.b16 %v217
  %v964 = vunpack.c.h.b16 %v217
  %v965 = vunpack.c.l.b16 %v218
  %v966 = vunpack.c.h.b16 %v218
  %v967 = vunpack.c.l.b16 %v219
  %v968 = vunpack.c.h.b16 %v219
  %v969 = vunpack.c.l.b16 %v220
  %v970 = vunpack.c.h.b16 %v220
  %v971 = vunpack.c.l.b16 %v221
  %v972 = vunpack.c.h.b16 %v221
  %v973 = vunpack.c.l.b16 %v222
  %v974 = vunpack.c.h.b16 %v222
  %v975 = vunpack.c.l.b16 %v223
  %v976 = vunpack.c.h.b16 %v223
  %v977 = vunpack.c.l.b16 %v224
  %v978 = vunpack.c.h.b16 %v224
  %v979 = vunpack.c.l.b16 %v225
  %v980 = vunpack.c.h.b16 %v225
  %v981 = vunpack.c.l.b16 %v226
  %v982 = vunpack.c.h.b16 %v226
  %v983 = vunpack.c.l.b16 %v227
  %v984 = vunpack.c.h.b16 %v227
  %v985 = vunpack.c.l.b16 %v228
  %v986 = vunpack.c.h.b16 %v228
  %v987 = vunpack.c.l.b16 %v229
  %v988 = vunpack.c.h.b16 %v229
  %v989 = vunpack.c.l.b16 %v230
  %v990 = vunpack.c.h.b16 %v230
  %v991 = vunpack.c.l.b16 %v231
  %v992 = vunpack.c.h.b16 %v231
  %v993 = vunpack.c.l.b16 %v232
  %v994 = vunpack.c.h.b16 %v232
  %v995 = vunpack.c.l.b16 %v233
  %v996 = vunpack.c.h.b16 %v233
  %v997 = vunpack.c.l.b16 %v234
  %v998 = vunpack.c.h.b16 %v234
  %v999 = vunpack.c.l.b16 %v235
  %v1000 = vunpack.c.h.b16 %v235
  %v1001 = vunpack.c.l.b16 %v236
  %v1002 = vunpack.c.h.b16 %v236
  %v1003 = vunpack.c.l.b16 %v237
  %v1004 = vunpack.c.h.b16 %v237
  %v1005 = vunpack.c.l.b16 %v238
  %v1006 = vunpack.c.h.b16 %v238
  %v1007 = vunpack.c.l.b16 %v239
  %v1008 = vunpack.c.h.b16 %v239
  %v1009 = vunpack.c.l.b16 %v240
  %v1010 = vunpack.c.h.b16 %v240
  %v1011 = vunpack.c.l.b16 %v241
  %v1012 = vunpack.c.h.b16 %v241
  %v1013 = vunpack.c.l.b16 %v242
  %v1014 = vunpack.c.h.b16 %v242
  %v1015 = vunpack.c.l.b16 %v243
  %v1016 = vunpack.c.h.b16 %v243
  %v1017 = vunpack.c.l.b16 %v244
  %v1018 = vunpack.c.h.b16 %v244
  %v1019 = vunpack.c.l.b16 %v245
  %v1020 = vunpack.c.h.b16 %v245
  %v1021 = vunpack.c.l.b16 %v246
  %v1022 = vunpack.c.h.b16 %v246
  %v1023 = vunpack.c.l.b16 %v247
  %v1024 = vunpack.c.h.b16 %v247
  %v1025 = vunpack.c.l.b16 %v248
  %v1026 = vunpack.c.h.b16 %v248
  %v1027 = vunpack.c.l.b16 %v249
  %v1028 = vunpack.c.h.b16 %v249
  %v1029 = vunpack.c.l.b16 %v250
  %v1030 = vunpack.c.h.b16 %v250
  %v1031 = vunpack.c.l.b16 %v251
  %v1032 = vunpack.c.h.b16 %v251
  %v1033 = vunpack.c.l.b16 %v252
  %v1034 = vunpack.c.h.b16 %v252
  %v1035 = vunpack.c.l.b16 %v253
  %v1036 = vunpack.c.h.b16 %v253
  %v1037 = vunpack.c.l.b16 %v254
  %v1038 = vunpack.c.h.b16 %v254
  %v1039 = vunpack.c.l.b16 %v255
  %v1040 = vunpack.c.h.b16 %v255
  %v1041 = vunpack.c.l.b16 %v256
  %v1042 = vunpack.c.h.b16 %v256
  %v1043 = vunpack.c.l.b16 %v257
  %v1044 = vunpack.c.h.b16 %v257
  %v1045 = vunpack.c.l.b16 %v258
  %v1046 = vunpack.c.h.b16 %v258
  %v1047 = vunpack.c.l.b16 %v259
  %v1048 = vunpack.c.h.b16 %v259
  %v1049 = vunpack.c.l.b16 %v260
  %v1050 = vunpack.c.h.b16 %v260
  %v1051 = vunpack.c.l.b16 %v261
  %v1052 = vunpack.c.h.b16 %v261
  %v1053 = vunpack.c.l.b16 %v262
  %v1054 = vunpack.c.h.b16 %v262
  %v1055 = vunpack.c.l.b16 %v263
  %v1056 = vunpack.c.h.b16 %v263
  %v1057 = vunpack.c.l.b16 %v264
  %v1058 = vunpack.c.h.b16 %v264
  %v1059 = vunpack.c.l.b16 %v265
  %v1060 = vunpack.c.h.b16 %v265
  %v1061 = vunpack.c.l.b16 %v266
  %v1062 = vunpack.c.h.b16 %v266
  %v1063 = vunpack.c.l.b16 %v267
  %v1064 = vunpack.c.h.b16 %v267
  %v1065 = vunpack.c.l.b16 %v268
  %v1066 = vunpack.c.h.b16 %v268
  %v1067 = vunpack.c.l.b16 %v269
  %v1068 = vunpack.c.h.b16 %v269
  %v1069 = vunpack.c.l.b16 %v270
  %v1070 = vunpack.c.h.b16 %v270
  %v1071 = vunpack.c.l.b16 %v271
  %v1072 = vunpack.c.h.b16 %v271
  %v1073 = vunpack.c.l.b16 %v272
  %v1074 = vunpack.c.h.b16 %v272
  %v1075 = vunpack.c.l.b16 %v273
  %v1076 = vunpack.c.h.b16 %v273
  %v1077 = vunpack.c.l.b16 %v274
  %v1078 = vunpack.c.h.b16 %v274
  %v1079 = vpack.c.b16 %v635, %v623
  %v1080 = vpack.c.b16 %v636, %v624
  %v1081 = vpack.c.b16 %v637, %v625
  %v1082 = vpack.c.b16 %v638, %v626
  %v1083 = vpack.c.b16 %v639, %v627
  %v1084 = vpack.c.b16 %v640, %v628
  %v1085 = vpack.c.b16 %v641, %v629
  %v1086 = vpack.c.b16 %v642, %v630
  %v1087 = vpack.c.b16 %v643, %v631
  %v1088 = vpack.c.b16 %v644, %v632
  %v1089 = vpack.c.b16 %v645, %v633
  %v1090 = vpack.c.b16 %v646, %v634
  %v1091 = vpack.c.b16 %v659, %v647
  %v1092 = vpack.c.b16 %v660, %v648
  %v1093 = vpack.c.b16 %v661, %v649
  %v1094 = vpack.c.b16 %v662, %v650
  %v1095 = vpack.c.b16 %v663, %v651
  %v1096 = vpack.c.b16 %v664, %v652
  %v1097 = vpack.c.b16 %v665, %v653
  %v1098 = vpack.c.b16 %v666, %v654
  %v1099 = vpack.c.b16 %v667, %v655
  %v1100 = vpack.c.b16 %v668, %v656
  %v1101 = vpack.c.b16 %v669, %v657
  %v1102 = vpack.c.b16 %v670, %v658
  %v1103 = vpack.c.b16 %v683, %v671
  %v1104 = vpack.c.b16 %v684, %v672
  %v1105 = vpack.c.b16 %v685, %v673
  %v1106 = vpack.c.b16 %v686, %v674
  %v1107 = vpack.c.b16 %v687, %v675
  %v1108 = vpack.c.b16 %v688, %v676
  %v1109 = vpack.c.b16 %v689, %v677
  %v1110 = vpack.c.b16 %v690, %v678
  %v1111 = vpack.c.b16 %v691, %v679
  %v1112 = vpack.c.b16 %v692, %v680
  %v1113 = vpack.c.b16 %v693, %v681
  %v1114 = vpack.c.b16 %v694, %v682
  %v1115 = vpack.c.b16 %v707, %v695
  %v1116 = vpack.c.b16 %v708, %v696
  %v1117 = vpack.c.b16 %v709, %v697
  %v1118 = vpack.c.b16 %v710, %v698
  %v1119 = vpack.c.b16 %v711, %v699
  %v1120 = vpack.c.b16 %v712, %v700
  %v1121 = vpack.c.b16 %v713, %v701
  %v1122 = vpack.c.b16 %v714, %v702
  %v1123 = vpack.c.b16 %v715, %v703
  %v1124 = vpack.c.b16 %v716, %v704
  %v1125 = vpack.c.b16 %v717, %v705
  %v1126 = vpack.c.b16 %v718, %v706
  %v1127 = vpack.c.b16 %v731, %v719
  %v1128 = vpack.c.b16 %v732, %v720
  %v1129 = vpack.c.b16 %v733, %v721
  %v1130 = vpack.c.b16 %v734, %v722
  %v1131 = vpack.c.b16 %v735, %v723
  %v1132 = vpack.c.b16 %v736, %v724
  %v1133 = vpack.c.b16 %v737, %v725
  %v1134 = vpack.c.b16 %v738, %v726
  %v1135 = vpack.c.b16 %v739, %v727
  %v1136 = vpack.c.b16 %v740, %v728
  %v1137 = vpack.c.b16 %v741, %v729
  %v1138 = vpack.c.b16 %v742, %v730
  %v1139 = vpack.c.b16 %v755, %v743
  %v1140 = vpack.c.b16 %v756, %v744
  %v1141 = vpack.c.b16 %v757, %v745
  %v1142 = vpack.c.b16 %v758, %v746
  %v1143 = vpack.c.b16 %v759, %v747
  %v1144 = vpack.c.b16 %v760, %v748
  %v1145 = vpack.c.b16 %v761, %v749
  %v1146 = vpack.c.b16 %v762, %v750
  %v1147 = vpack.c.b16 %v763, %v751
  %v1148 = vpack.c.b16 %v764, %v752
  %v1149 = vpack.c.b16 %v765, %v753
  %v1150 = vpack.c.b16 %v766, %v754
  %v1151 = vpack.c.b16 %v779, %v767
  %v1152 = vpack.c.b16 %v780, %v768
  %v1153 = vpack.c.b16 %v781, %v769
  %v1154 = vpack.c.b16 %v782, %v770
  %v1155 = vpack.c.b16 %v783, %v771
  %v1156 = vpack.c.b16 %v784, %v772
  %v1157 = vpack.c.b16 %v785, %v773
  %v1158 = vpack.c.b16 %v786, %v774
  %v1159 = vpack.c.b16 %v787, %v775
  %v1160 = vpack.c.b16 %v788, %v776
  %v1161 = vpack.c.b16 %v789, %v777
  %v1162 = vpack.c.b16 %v790, %v778
  %v1163 = vpack.c.b16 %v803, %v791
  %v1164 = vpack.c.b16 %v804, %v792
  %v1165 = vpack.c.b16 %v805, %v793
  %v1166 = vpack.c.b16 %v806, %v794
  %v1167 = vpack.c.b16 %v807, %v795
  %v1168 = vpack.c.b16 %v808, %v796
  %v1169 = vpack.c.b16 %v809, %v797
  %v1170 = vpack.c.b16 %v810, %v798
  %v1171 = vpack.c.b16 %v811, %v799
  %v1172 = vpack.c.b16 %v812, %v800
  %v1173 = vpack.c.b16 %v813, %v801
  %v1174 = vpack.c.b16 %v814, %v802
  %v1175 = vpack.c.b16 %v827, %v815
  %v1176 = vpack.c.b16 %v828, %v816
  %v1177 = vpack.c.b16 %v829, %v817
  %v1178 = vpack.c.b16 %v830, %v818
  %v1179 = vpack.c.b16 %v831, %v819
  %v1180 = vpack.c.b16 %v832, %v820
  %v1181 = vpack.c.b16 %v833, %v821
  %v1182 = vpack.c.b16 %v834, %v822
  %v1183 = vpack.c.b16 %v835, %v823
  %v1184 = vpack.c.b16 %v836, %v824
  %v1185 = vpack.c.b16 %v837, %v825
  %v1186 = vpack.c.b16 %v838, %v826
  %v1187 = vpack.c.b16 %v851, %v839
  %v1188 = vpack.c.b16 %v852, %v840
  %v1189 = vpack.c.b16 %v853, %v841
  %v1190 = vpack.c.b16 %v854, %v842
  %v1191 = vpack.c.b16 %v855, %v843
  %v1192 = vpack.c.b16 %v856, %v844
  %v1193 = vpack.c.b16 %v857, %v845
  %v1194 = vpack.c.b16 %v858, %v846
  %v1195 = vpack.c.b16 %v859, %v847
  %v1196 = vpack.c.b16 %v860, %v848
  %v1197 = vpack.c.b16 %v861, %v849
  %v1198 = vpack.c.b16 %v862, %v850
  %v1199 = vpack.c.b16 %v875, %v863
  %v1200 = vpack.c.b16 %v876, %v864
  %v1201 = vpack.c.b16 %v877, %v865
  %v1202 = vpack.c.b16 %v878, %v866
  %v1203 = vpack.c.b16 %v879, %v867
  %v1204 = vpack.c.b16 %v880, %v868
  %v1205 = vpack.c.b16 %v881, %v869
  %v1206 = vpack.c.b16 %v882, %v870
  %v1207 = vpack.c.b16 %v883, %v871
  %v1208 = vpack.c.b16 %v884, %v872
  %v1209 = vpack.c.b16 %v885, %v873
  %v1210 = vpack.c.b16 %v886, %v874
  %v1211 = vpack.c.b16 %v899, %v887
  %v1212 = vpack.c.b16 %v900, %v888
  %v1213 = vpack.c.b16 %v901, %v889
  %v1214 = vpack.c.b16 %v902, %v890
  %v1215 = vpack.c.b16 %v903, %v891
  %v1216 = vpack.c.b16 %v904, %v892
  %v1217 = vpack.c.b16 %v905, %v893
  %v1218 = vpack.c.b16 %v906, %v894
  %v1219 = vpack.c.b16 %v907, %v895
  %v1220 = vpack.c.b16 %v908, %v896
  %v1221 = vpack.c.b16 %v909, %v897
  %v1222 = vpack.c.b16 %v910, %v898
  %v1223 = vpack.c.b16 %v923, %v911
  %v1224 = vpack.c.b16 %v924, %v912
  %v1225 = vpack.c.b16 %v925, %v913
  %v1226 = vpack.c.b16 %v926, %v914
  %v1227 = vpack.c.b16 %v927, %v915
  %v1228 = vpack.c.b16 %v928, %v916
  %v1229 = vpack.c.b16 %v929, %v917
  %v1230 = vpack.c.b16 %v930, %v918
  %v1231 = vpack.c.b16 %v931, %v919
  %v1232 = vpack.c.b16 %v932, %v920
  %v1233 = vpack.c.b16 %v933, %v921
  %v1234 = vpack.c.b16 %v934, %v922
  %v1235 = vpack.c.b16 %v947, %v935
  %v1236 = vpack.c.b16 %v948, %v936
  %v1237 = vpack.c.b16 %v949, %v937
  %v1238 = vpack.c.b16 %v950, %v938
  %v1239 = vpack.c.b16 %v951, %v939
  %v1240 = vpack.c.b16 %v952, %v940
  %v1241 = vpack.c.b16 %v953, %v941
  %v1242 = vpack.c.b16 %v954, %v942
  %v1243 = vpack.c.b16 %v955, %v943
  %v1244 = vpack.c.b16 %v956, %v944
  %v1245 = vpack.c.b16 %v957, %v945
  %v1246 = vpack.c.b16 %v958, %v946
  %v1247 = vpack.c.b16 %v971, %v959
  %v1248 = vpack.c.b16 %v972, %v960
  %v1249 = vpack.c.b16 %v973, %v961
  %v1250 = vpack.c.b16 %v974, %v962
  %v1251 = vpack.c.b16 %v975, %v963
  %v1252 = vpack.c.b16 %v976, %v964
  %v1253 = vpack.c.b16 %v977, %v965
  %v1254 = vpack.c.b16 %v978, %v966
  %v1255 = vpack.c.b16 %v979, %v967
  %v1256 = vpack.c.b16 %v980, %v968
  %v1257 = vpack.c.b16 %v981, %v969
  %v1258 = vpack.c.b16 %v982, %v970
  %v1259 = vpack.c.b16 %v995, %v983
  %v1260 = vpack.c.b16 %v996, %v984
  %v1261 = vpack.c.b16 %v997, %v985
  %v1262 = vpack.c.b16 %v998, %v986
  %v1263 = vpack.c.b16 %v999, %v987
  %v1264 = vpack.c.b16 %v1000, %v988
  %v1265 = vpack.c.b16 %v1001, %v989
  %v1266 = vpack.c.b16 %v1002, %v990
  %v1267 = vpack.c.b16 %v1003, %v991
  %v1268 = vpack.c.b16 %v1004, %v992
  %v1269 = vpack.c.b16 %v1005, %v993
  %v1270 = vpack.c.b16 %v1006, %v994
  %v1271 = vpack.c.b16 %v1019, %v1007
  %v1272 = vpack.c.b16 %v1020, %v1008
  %v1273 = vpack.c.b16 %v1021, %v1009
  %v1274 = vpack.c.b16 %v1022, %v1010
  %v1275 = vpack.c.b16 %v1023, %v1011
  %v1276 = vpack.c.b16 %v1024, %v1012
  %v1277 = vpack.c.b16 %v1025, %v1013
  %v1278 = vpack.c.b16 %v1026, %v1014
  %v1279 = vpack.c.b16 %v1027, %v1015
  %v1280 = vpack.c.b16 %v1028, %v1016
  %v1281 = vpack.c.b16 %v1029, %v1017
  %v1282 = vpack.c.b16 %v1030, %v1018
  %v1283 = vpack.c.b16 %v1043, %v1031
  %v1284 = vpack.c.b16 %v1044, %v1032
  %v1285 = vpack.c.b16 %v1045, %v1033
  %v1286 = vpack.c.b16 %v1046, %v1034
  %v1287 = vpack.c.b16 %v1047, %v1035
  %v1288 = vpack.c.b16 %v1048, %v1036
  %v1289 = vpack.c.b16 %v1049, %v1037
  %v1290 = vpack.c.b16 %v1050, %v1038
  %v1291 = vpack.c.b16 %v1051, %v1039
  %v1292 = vpack.c.b16 %v1052, %v1040
  %v1293 = vpack.c.b16 %v1053, %v1041
  %v1294 = vpack.c.b16 %v1054, %v1042
  %v1295 = vpack.c.b16 %v1067, %v1055
  %v1296 = vpack.c.b16 %v1068, %v1056
  %v1297 = vpack.c.b16 %v1069, %v1057
  %v1298 = vpack.c.b16 %v1070, %v1058
  %v1299 = vpack.c.b16 %v1071, %v1059
  %v1300 = vpack.c.b16 %v1072, %v1060
  %v1301 = vpack.c.b16 %v1073, %v1061
  %v1302 = vpack.c.b16 %v1074, %v1062
  %v1303 = vpack.c.b16 %v1075, %v1063
  %v1304 = vpack.c.b16 %v1076, %v1064
  %v1305 = vpack.c.b16 %v1077, %v1065
  %v1306 = vpack.c.b16 %v1078, %v1066
  %vm1523 = vcmask 359424
  %v1525 = vsel %vm1523, %v357, 0
  %v1528 = vsel %vm1523, %v360, 0
  %v1531 = vsel %vm1523, %v363, 0
  %v1534 = vsel %vm1523, %v366, 0
  %v1537 = vsel %vm1523, %v369, 0
  %v1540 = vsel %vm1523, %v372, 0
  %v1543 = vsel %vm1523, %v375, 0
  %v1546 = vsel %vm1523, %v378, 0
  %vm1548 = vcmask 1045504
  %v1550 = vsel %vm1548, %v1295, 0
  %v1553 = vsel %vm1548, %v1296, 0
  %v1556 = vsel %vm1548, %v1297, 0
  %v1559 = vsel %vm1548, %v1298, 0
  %v1562 = vsel %vm1548, %v1299, 0
  %v1565 = vsel %vm1548, %v1300, 0
  %v1568 = vsel %vm1548, %v1301, 0
  %v1571 = vsel %vm1548, %v1302, 0
  %v1574 = vsel %vm1548, %v1303, 0
  %v1577 = vsel %vm1548, %v1304, 0
  %v1580 = vsel %vm1548, %v1305, 0
  %v1583 = vsel %vm1548, %v1306, 0
  %1585 = vmatpush.bf16.msra.mxu0 %v1163
  %1586 = vmatpush.bf16.msra.mxu0 %v1151
  %1587 = vmatpush.bf16.msra.mxu0 %v1139
  %1588 = vmatpush.bf16.msra.mxu0 %v1127
  %1589 = vmatpush.bf16.msra.mxu0 %v1115
  %1590 = vmatpush.bf16.msra.mxu0 %v1103
  %1591 = vmatpush.bf16.msra.mxu0 %v1091
  %1592 = vmatpush.bf16.msra.mxu0 %v1079
  %1593 = vmatmul.bf16.gmra.mxu0 %v355
  %v1594 = vpop.f32.mrf.mxu0
  %v1595 = vadd.f32 0.0, %v1594
  %v1596 = vpop.f32.mrf.mxu0
  %v1597 = vadd.f32 0.0, %v1596
  %1598 = vmatmul.bf16.gmra.mxu0 %v358
  %v1599 = vpop.f32.mrf.mxu0
  %v1600 = vadd.f32 0.0, %v1599
  %v1601 = vpop.f32.mrf.mxu0
  %v1602 = vadd.f32 0.0, %v1601
  %1603 = vmatmul.bf16.gmra.mxu0 %v361
  %v1604 = vpop.f32.mrf.mxu0
  %v1605 = vadd.f32 0.0, %v1604
  %v1606 = vpop.f32.mrf.mxu0
  %v1607 = vadd.f32 0.0, %v1606
  %1608 = vmatmul.bf16.gmra.mxu0 %v364
  %v1609 = vpop.f32.mrf.mxu0
  %v1610 = vadd.f32 0.0, %v1609
  %v1611 = vpop.f32.mrf.mxu0
  %v1612 = vadd.f32 0.0, %v1611
  %1613 = vmatmul.bf16.gmra.mxu0 %v367
  %v1614 = vpop.f32.mrf.mxu0
  %v1615 = vadd.f32 0.0, %v1614
  %v1616 = vpop.f32.mrf.mxu0
  %v1617 = vadd.f32 0.0, %v1616
  %1618 = vmatmul.bf16.gmra.mxu0 %v370
  %v1619 = vpop.f32.mrf.mxu0
  %v1620 = vadd.f32 0.0, %v1619
  %v1621 = vpop.f32.mrf.mxu0
  %v1622 = vadd.f32 0.0, %v1621
  %1623 = vmatmul.bf16.gmra.mxu0 %v373
  %v1624 = vpop.f32.mrf.mxu0
  %v1625 = vadd.f32 0.0, %v1624
  %v1626 = vpop.f32.mrf.mxu0
  %v1627 = vadd.f32 0.0, %v1626
  %1628 = vmatmul.bf16.gmra.mxu0 %v376
  %v1629 = vpop.f32.mrf.mxu0
  %v1630 = vadd.f32 0.0, %v1629
  %v1631 = vpop.f32.mrf.mxu0
  %v1632 = vadd.f32 0.0, %v1631
  %1633 = vdwg.mxu0
  %1634 = vmatpush.bf16.msra.mxu0 %v1259
  %1635 = vmatpush.bf16.msra.mxu0 %v1247
  %1636 = vmatpush.bf16.msra.mxu0 %v1235
  %1637 = vmatpush.bf16.msra.mxu0 %v1223
  %1638 = vmatpush.bf16.msra.mxu0 %v1211
  %1639 = vmatpush.bf16.msra.mxu0 %v1199
  %1640 = vmatpush.bf16.msra.mxu0 %v1187
  %1641 = vmatpush.bf16.msra.mxu0 %v1175
  %1642 = vmatmul.bf16.gmra.mxu0 %v356
  %v1643 = vpop.f32.mrf.mxu0
  %v1644 = vadd.f32 %v1595, %v1643
  %v1645 = vpop.f32.mrf.mxu0
  %v1646 = vadd.f32 %v1597, %v1645
  %1647 = vmatmul.bf16.gmra.mxu0 %v359
  %v1648 = vpop.f32.mrf.mxu0
  %v1649 = vadd.f32 %v1600, %v1648
  %v1650 = vpop.f32.mrf.mxu0
  %v1651 = vadd.f32 %v1602, %v1650
  %1652 = vmatmul.bf16.gmra.mxu0 %v362
  %v1653 = vpop.f32.mrf.mxu0
  %v1654 = vadd.f32 %v1605, %v1653
  %v1655 = vpop.f32.mrf.mxu0
  %v1656 = vadd.f32 %v1607, %v1655
  %1657 = vmatmul.bf16.gmra.mxu0 %v365
  %v1658 = vpop.f32.mrf.mxu0
  %v1659 = vadd.f32 %v1610, %v1658
  %v1660 = vpop.f32.mrf.mxu0
  %v1661 = vadd.f32 %v1612, %v1660
  %1662 = vmatmul.bf16.gmra.mxu0 %v368
  %v1663 = vpop.f32.mrf.mxu0
  %v1664 = vadd.f32 %v1615, %v1663
  %v1665 = vpop.f32.mrf.mxu0
  %v1666 = vadd.f32 %v1617, %v1665
  %1667 = vmatmul.bf16.gmra.mxu0 %v371
  %v1668 = vpop.f32.mrf.mxu0
  %v1669 = vadd.f32 %v1620, %v1668
  %v1670 = vpop.f32.mrf.mxu0
  %v1671 = vadd.f32 %v1622, %v1670
  %1672 = vmatmul.bf16.gmra.mxu0 %v374
  %v1673 = vpop.f32.mrf.mxu0
  %v1674 = vadd.f32 %v1625, %v1673
  %v1675 = vpop.f32.mrf.mxu0
  %v1676 = vadd.f32 %v1627, %v1675
  %1677 = vmatmul.bf16.gmra.mxu0 %v377
  %v1678 = vpop.f32.mrf.mxu0
  %v1679 = vadd.f32 %v1630, %v1678
  %v1680 = vpop.f32.mrf.mxu0
  %v1681 = vadd.f32 %v1632, %v1680
  %1682 = vdwg.mxu0
  %1683 = vmatpush.bf16.msra.mxu0 0
  %1684 = vmatpush.bf16.msra.mxu0 0
  %1685 = vmatpush.bf16.msra.mxu0 0
  %1686 = vmatpush.bf16.msra.mxu0 0
  %1687 = vmatpush.bf16.msra.mxu0 0
  %1688 = vmatpush.bf16.msra.mxu0 %v1550
  %1689 = vmatpush.bf16.msra.mxu0 %v1283
  %1690 = vmatpush.bf16.msra.mxu0 %v1271
  %1691 = vmatmul.bf16.gmra.mxu0 %v1525
  %v1692 = vpop.f32.mrf.mxu0
  %v1693 = vadd.f32 %v1644, %v1692
  %v1694 = vpop.f32.mrf.mxu0
  %v1695 = vadd.f32 %v1646, %v1694
  %1696 = vmatmul.bf16.gmra.mxu0 %v1528
  %v1697 = vpop.f32.mrf.mxu0
  %v1698 = vadd.f32 %v1649, %v1697
  %v1699 = vpop.f32.mrf.mxu0
  %v1700 = vadd.f32 %v1651, %v1699
  %1701 = vmatmul.bf16.gmra.mxu0 %v1531
  %v1702 = vpop.f32.mrf.mxu0
  %v1703 = vadd.f32 %v1654, %v1702
  %v1704 = vpop.f32.mrf.mxu0
  %v1705 = vadd.f32 %v1656, %v1704
  %1706 = vmatmul.bf16.gmra.mxu0 %v1534
  %v1707 = vpop.f32.mrf.mxu0
  %v1708 = vadd.f32 %v1659, %v1707
  %v1709 = vpop.f32.mrf.mxu0
  %v1710 = vadd.f32 %v1661, %v1709
  %1711 = vmatmul.bf16.gmra.mxu0 %v1537
  %v1712 = vpop.f32.mrf.mxu0
  %v1713 = vadd.f32 %v1664, %v1712
  %v1714 = vpop.f32.mrf.mxu0
  %v1715 = vadd.f32 %v1666, %v1714
  %1716 = vmatmul.bf16.gmra.mxu0 %v1540
  %v1717 = vpop.f32.mrf.mxu0
  %v1718 = vadd.f32 %v1669, %v1717
  %v1719 = vpop.f32.mrf.mxu0
  %v1720 = vadd.f32 %v1671, %v1719
  %1721 = vmatmul.bf16.gmra.mxu0 %v1543
  %v1722 = vpop.f32.mrf.mxu0
  %v1723 = vadd.f32 %v1674, %v1722
  %v1724 = vpop.f32.mrf.mxu0
  %v1725 = vadd.f32 %v1676, %v1724
  %1726 = vmatmul.bf16.gmra.mxu0 %v1546
  %v1727 = vpop.f32.mrf.mxu0
  %v1728 = vadd.f32 %v1679, %v1727
  %v1729 = vpop.f32.mrf.mxu0
  %v1730 = vadd.f32 %v1681, %v1729
  %1731 = vdwg.mxu0
  %1732 = vmatpush.bf16.msra.mxu0 %v1164
  %1733 = vmatpush.bf16.msra.mxu0 %v1152
  %1734 = vmatpush.bf16.msra.mxu0 %v1140
  %1735 = vmatpush.bf16.msra.mxu0 %v1128
  %1736 = vmatpush.bf16.msra.mxu0 %v1116
  %1737 = vmatpush.bf16.msra.mxu0 %v1104
  %1738 = vmatpush.bf16.msra.mxu0 %v1092
  %1739 = vmatpush.bf16.msra.mxu0 %v1080
  %1740 = vmatmul.bf16.gmra.mxu0 %v355
  %v1741 = vpop.f32.mrf.mxu0
  %v1742 = vadd.f32 0.0, %v1741
  %v1743 = vpop.f32.mrf.mxu0
  %v1744 = vadd.f32 0.0, %v1743
  %1745 = vmatmul.bf16.gmra.mxu0 %v358
  %v1746 = vpop.f32.mrf.mxu0
  %v1747 = vadd.f32 0.0, %v1746
  %v1748 = vpop.f32.mrf.mxu0
  %v1749 = vadd.f32 0.0, %v1748
  %1750 = vmatmul.bf16.gmra.mxu0 %v361
  %v1751 = vpop.f32.mrf.mxu0
  %v1752 = vadd.f32 0.0, %v1751
  %v1753 = vpop.f32.mrf.mxu0
  %v1754 = vadd.f32 0.0, %v1753
  %1755 = vmatmul.bf16.gmra.mxu0 %v364
  %v1756 = vpop.f32.mrf.mxu0
  %v1757 = vadd.f32 0.0, %v1756
  %v1758 = vpop.f32.mrf.mxu0
  %v1759 = vadd.f32 0.0, %v1758
  %1760 = vmatmul.bf16.gmra.mxu0 %v367
  %v1761 = vpop.f32.mrf.mxu0
  %v1762 = vadd.f32 0.0, %v1761
  %v1763 = vpop.f32.mrf.mxu0
  %v1764 = vadd.f32 0.0, %v1763
  %1765 = vmatmul.bf16.gmra.mxu0 %v370
  %v1766 = vpop.f32.mrf.mxu0
  %v1767 = vadd.f32 0.0, %v1766
  %v1768 = vpop.f32.mrf.mxu0
  %v1769 = vadd.f32 0.0, %v1768
  %1770 = vmatmul.bf16.gmra.mxu0 %v373
  %v1771 = vpop.f32.mrf.mxu0
  %v1772 = vadd.f32 0.0, %v1771
  %v1773 = vpop.f32.mrf.mxu0
  %v1774 = vadd.f32 0.0, %v1773
  %1775 = vmatmul.bf16.gmra.mxu0 %v376
  %v1776 = vpop.f32.mrf.mxu0
  %v1777 = vadd.f32 0.0, %v1776
  %v1778 = vpop.f32.mrf.mxu0
  %v1779 = vadd.f32 0.0, %v1778
  %1780 = vdwg.mxu0
  %1781 = vmatpush.bf16.msra.mxu0 %v1260
  %1782 = vmatpush.bf16.msra.mxu0 %v1248
  %1783 = vmatpush.bf16.msra.mxu0 %v1236
  %1784 = vmatpush.bf16.msra.mxu0 %v1224
  %1785 = vmatpush.bf16.msra.mxu0 %v1212
  %1786 = vmatpush.bf16.msra.mxu0 %v1200
  %1787 = vmatpush.bf16.msra.mxu0 %v1188
  %1788 = vmatpush.bf16.msra.mxu0 %v1176
  %1789 = vmatmul.bf16.gmra.mxu0 %v356
  %v1790 = vpop.f32.mrf.mxu0
  %v1791 = vadd.f32 %v1742, %v1790
  %v1792 = vpop.f32.mrf.mxu0
  %v1793 = vadd.f32 %v1744, %v1792
  %1794 = vmatmul.bf16.gmra.mxu0 %v359
  %v1795 = vpop.f32.mrf.mxu0
  %v1796 = vadd.f32 %v1747, %v1795
  %v1797 = vpop.f32.mrf.mxu0
  %v1798 = vadd.f32 %v1749, %v1797
  %1799 = vmatmul.bf16.gmra.mxu0 %v362
  %v1800 = vpop.f32.mrf.mxu0
  %v1801 = vadd.f32 %v1752, %v1800
  %v1802 = vpop.f32.mrf.mxu0
  %v1803 = vadd.f32 %v1754, %v1802
  %1804 = vmatmul.bf16.gmra.mxu0 %v365
  %v1805 = vpop.f32.mrf.mxu0
  %v1806 = vadd.f32 %v1757, %v1805
  %v1807 = vpop.f32.mrf.mxu0
  %v1808 = vadd.f32 %v1759, %v1807
  %1809 = vmatmul.bf16.gmra.mxu0 %v368
  %v1810 = vpop.f32.mrf.mxu0
  %v1811 = vadd.f32 %v1762, %v1810
  %v1812 = vpop.f32.mrf.mxu0
  %v1813 = vadd.f32 %v1764, %v1812
  %1814 = vmatmul.bf16.gmra.mxu0 %v371
  %v1815 = vpop.f32.mrf.mxu0
  %v1816 = vadd.f32 %v1767, %v1815
  %v1817 = vpop.f32.mrf.mxu0
  %v1818 = vadd.f32 %v1769, %v1817
  %1819 = vmatmul.bf16.gmra.mxu0 %v374
  %v1820 = vpop.f32.mrf.mxu0
  %v1821 = vadd.f32 %v1772, %v1820
  %v1822 = vpop.f32.mrf.mxu0
  %v1823 = vadd.f32 %v1774, %v1822
  %1824 = vmatmul.bf16.gmra.mxu0 %v377
  %v1825 = vpop.f32.mrf.mxu0
  %v1826 = vadd.f32 %v1777, %v1825
  %v1827 = vpop.f32.mrf.mxu0
  %v1828 = vadd.f32 %v1779, %v1827
  %1829 = vdwg.mxu0
  %1830 = vmatpush.bf16.msra.mxu0 0
  %1831 = vmatpush.bf16.msra.mxu0 0
  %1832 = vmatpush.bf16.msra.mxu0 0
  %1833 = vmatpush.bf16.msra.mxu0 0
  %1834 = vmatpush.bf16.msra.mxu0 0
  %1835 = vmatpush.bf16.msra.mxu0 %v1553
  %1836 = vmatpush.bf16.msra.mxu0 %v1284
  %1837 = vmatpush.bf16.msra.mxu0 %v1272
  %1838 = vmatmul.bf16.gmra.mxu0 %v1525
  %v1839 = vpop.f32.mrf.mxu0
  %v1840 = vadd.f32 %v1791, %v1839
  %v1841 = vpop.f32.mrf.mxu0
  %v1842 = vadd.f32 %v1793, %v1841
  %1843 = vmatmul.bf16.gmra.mxu0 %v1528
  %v1844 = vpop.f32.mrf.mxu0
  %v1845 = vadd.f32 %v1796, %v1844
  %v1846 = vpop.f32.mrf.mxu0
  %v1847 = vadd.f32 %v1798, %v1846
  %1848 = vmatmul.bf16.gmra.mxu0 %v1531
  %v1849 = vpop.f32.mrf.mxu0
  %v1850 = vadd.f32 %v1801, %v1849
  %v1851 = vpop.f32.mrf.mxu0
  %v1852 = vadd.f32 %v1803, %v1851
  %1853 = vmatmul.bf16.gmra.mxu0 %v1534
  %v1854 = vpop.f32.mrf.mxu0
  %v1855 = vadd.f32 %v1806, %v1854
  %v1856 = vpop.f32.mrf.mxu0
  %v1857 = vadd.f32 %v1808, %v1856
  %1858 = vmatmul.bf16.gmra.mxu0 %v1537
  %v1859 = vpop.f32.mrf.mxu0
  %v1860 = vadd.f32 %v1811, %v1859
  %v1861 = vpop.f32.mrf.mxu0
  %v1862 = vadd.f32 %v1813, %v1861
  %1863 = vmatmul.bf16.gmra.mxu0 %v1540
  %v1864 = vpop.f32.mrf.mxu0
  %v1865 = vadd.f32 %v1816, %v1864
  %v1866 = vpop.f32.mrf.mxu0
  %v1867 = vadd.f32 %v1818, %v1866
  %1868 = vmatmul.bf16.gmra.mxu0 %v1543
  %v1869 = vpop.f32.mrf.mxu0
  %v1870 = vadd.f32 %v1821, %v1869
  %v1871 = vpop.f32.mrf.mxu0
  %v1872 = vadd.f32 %v1823, %v1871
  %1873 = vmatmul.bf16.gmra.mxu0 %v1546
  %v1874 = vpop.f32.mrf.mxu0
  %v1875 = vadd.f32 %v1826, %v1874
  %v1876 = vpop.f32.mrf.mxu0
  %v1877 = vadd.f32 %v1828, %v1876
  %1878 = vdwg.mxu0
  %1879 = vmatpush.bf16.msra.mxu0 %v1165
  %1880 = vmatpush.bf16.msra.mxu0 %v1153
  %1881 = vmatpush.bf16.msra.mxu0 %v1141
  %1882 = vmatpush.bf16.msra.mxu0 %v1129
  %1883 = vmatpush.bf16.msra.mxu0 %v1117
  %1884 = vmatpush.bf16.msra.mxu0 %v1105
  %1885 = vmatpush.bf16.msra.mxu0 %v1093
  %1886 = vmatpush.bf16.msra.mxu0 %v1081
  %1887 = vmatmul.bf16.gmra.mxu0 %v355
  %v1888 = vpop.f32.mrf.mxu0
  %v1889 = vadd.f32 0.0, %v1888
  %v1890 = vpop.f32.mrf.mxu0
  %v1891 = vadd.f32 0.0, %v1890
  %1892 = vmatmul.bf16.gmra.mxu0 %v358
  %v1893 = vpop.f32.mrf.mxu0
  %v1894 = vadd.f32 0.0, %v1893
  %v1895 = vpop.f32.mrf.mxu0
  %v1896 = vadd.f32 0.0, %v1895
  %1897 = vmatmul.bf16.gmra.mxu0 %v361
  %v1898 = vpop.f32.mrf.mxu0
  %v1899 = vadd.f32 0.0, %v1898
  %v1900 = vpop.f32.mrf.mxu0
  %v1901 = vadd.f32 0.0, %v1900
  %1902 = vmatmul.bf16.gmra.mxu0 %v364
  %v1903 = vpop.f32.mrf.mxu0
  %v1904 = vadd.f32 0.0, %v1903
  %v1905 = vpop.f32.mrf.mxu0
  %v1906 = vadd.f32 0.0, %v1905
  %1907 = vmatmul.bf16.gmra.mxu0 %v367
  %v1908 = vpop.f32.mrf.mxu0
  %v1909 = vadd.f32 0.0, %v1908
  %v1910 = vpop.f32.mrf.mxu0
  %v1911 = vadd.f32 0.0, %v1910
  %1912 = vmatmul.bf16.gmra.mxu0 %v370
  %v1913 = vpop.f32.mrf.mxu0
  %v1914 = vadd.f32 0.0, %v1913
  %v1915 = vpop.f32.mrf.mxu0
  %v1916 = vadd.f32 0.0, %v1915
  %1917 = vmatmul.bf16.gmra.mxu0 %v373
  %v1918 = vpop.f32.mrf.mxu0
  %v1919 = vadd.f32 0.0, %v1918
  %v1920 = vpop.f32.mrf.mxu0
  %v1921 = vadd.f32 0.0, %v1920
  %1922 = vmatmul.bf16.gmra.mxu0 %v376
  %v1923 = vpop.f32.mrf.mxu0
  %v1924 = vadd.f32 0.0, %v1923
  %v1925 = vpop.f32.mrf.mxu0
  %v1926 = vadd.f32 0.0, %v1925
  %1927 = vdwg.mxu0
  %1928 = vmatpush.bf16.msra.mxu0 %v1261
  %1929 = vmatpush.bf16.msra.mxu0 %v1249
  %1930 = vmatpush.bf16.msra.mxu0 %v1237
  %1931 = vmatpush.bf16.msra.mxu0 %v1225
  %1932 = vmatpush.bf16.msra.mxu0 %v1213
  %1933 = vmatpush.bf16.msra.mxu0 %v1201
  %1934 = vmatpush.bf16.msra.mxu0 %v1189
  %1935 = vmatpush.bf16.msra.mxu0 %v1177
  %1936 = vmatmul.bf16.gmra.mxu0 %v356
  %v1937 = vpop.f32.mrf.mxu0
  %v1938 = vadd.f32 %v1889, %v1937
  %v1939 = vpop.f32.mrf.mxu0
  %v1940 = vadd.f32 %v1891, %v1939
  %1941 = vmatmul.bf16.gmra.mxu0 %v359
  %v1942 = vpop.f32.mrf.mxu0
  %v1943 = vadd.f32 %v1894, %v1942
  %v1944 = vpop.f32.mrf.mxu0
  %v1945 = vadd.f32 %v1896, %v1944
  %1946 = vmatmul.bf16.gmra.mxu0 %v362
  %v1947 = vpop.f32.mrf.mxu0
  %v1948 = vadd.f32 %v1899, %v1947
  %v1949 = vpop.f32.mrf.mxu0
  %v1950 = vadd.f32 %v1901, %v1949
  %1951 = vmatmul.bf16.gmra.mxu0 %v365
  %v1952 = vpop.f32.mrf.mxu0
  %v1953 = vadd.f32 %v1904, %v1952
  %v1954 = vpop.f32.mrf.mxu0
  %v1955 = vadd.f32 %v1906, %v1954
  %1956 = vmatmul.bf16.gmra.mxu0 %v368
  %v1957 = vpop.f32.mrf.mxu0
  %v1958 = vadd.f32 %v1909, %v1957
  %v1959 = vpop.f32.mrf.mxu0
  %v1960 = vadd.f32 %v1911, %v1959
  %1961 = vmatmul.bf16.gmra.mxu0 %v371
  %v1962 = vpop.f32.mrf.mxu0
  %v1963 = vadd.f32 %v1914, %v1962
  %v1964 = vpop.f32.mrf.mxu0
  %v1965 = vadd.f32 %v1916, %v1964
  %1966 = vmatmul.bf16.gmra.mxu0 %v374
  %v1967 = vpop.f32.mrf.mxu0
  %v1968 = vadd.f32 %v1919, %v1967
  %v1969 = vpop.f32.mrf.mxu0
  %v1970 = vadd.f32 %v1921, %v1969
  %1971 = vmatmul.bf16.gmra.mxu0 %v377
  %v1972 = vpop.f32.mrf.mxu0
  %v1973 = vadd.f32 %v1924, %v1972
  %v1974 = vpop.f32.mrf.mxu0
  %v1975 = vadd.f32 %v1926, %v1974
  %1976 = vdwg.mxu0
  %1977 = vmatpush.bf16.msra.mxu0 0
  %1978 = vmatpush.bf16.msra.mxu0 0
  %1979 = vmatpush.bf16.msra.mxu0 0
  %1980 = vmatpush.bf16.msra.mxu0 0
  %1981 = vmatpush.bf16.msra.mxu0 0
  %1982 = vmatpush.bf16.msra.mxu0 %v1556
  %1983 = vmatpush.bf16.msra.mxu0 %v1285
  %1984 = vmatpush.bf16.msra.mxu0 %v1273
  %1985 = vmatmul.bf16.gmra.mxu0 %v1525
  %v1986 = vpop.f32.mrf.mxu0
  %v1987 = vadd.f32 %v1938, %v1986
  %v1988 = vpop.f32.mrf.mxu0
  %v1989 = vadd.f32 %v1940, %v1988
  %1990 = vmatmul.bf16.gmra.mxu0 %v1528
  %v1991 = vpop.f32.mrf.mxu0
  %v1992 = vadd.f32 %v1943, %v1991
  %v1993 = vpop.f32.mrf.mxu0
  %v1994 = vadd.f32 %v1945, %v1993
  %1995 = vmatmul.bf16.gmra.mxu0 %v1531
  %v1996 = vpop.f32.mrf.mxu0
  %v1997 = vadd.f32 %v1948, %v1996
  %v1998 = vpop.f32.mrf.mxu0
  %v1999 = vadd.f32 %v1950, %v1998
  %2000 = vmatmul.bf16.gmra.mxu0 %v1534
  %v2001 = vpop.f32.mrf.mxu0
  %v2002 = vadd.f32 %v1953, %v2001
  %v2003 = vpop.f32.mrf.mxu0
  %v2004 = vadd.f32 %v1955, %v2003
  %2005 = vmatmul.bf16.gmra.mxu0 %v1537
  %v2006 = vpop.f32.mrf.mxu0
  %v2007 = vadd.f32 %v1958, %v2006
  %v2008 = vpop.f32.mrf.mxu0
  %v2009 = vadd.f32 %v1960, %v2008
  %2010 = vmatmul.bf16.gmra.mxu0 %v1540
  %v2011 = vpop.f32.mrf.mxu0
  %v2012 = vadd.f32 %v1963, %v2011
  %v2013 = vpop.f32.mrf.mxu0
  %v2014 = vadd.f32 %v1965, %v2013
  %2015 = vmatmul.bf16.gmra.mxu0 %v1543
  %v2016 = vpop.f32.mrf.mxu0
  %v2017 = vadd.f32 %v1968, %v2016
  %v2018 = vpop.f32.mrf.mxu0
  %v2019 = vadd.f32 %v1970, %v2018
  %2020 = vmatmul.bf16.gmra.mxu0 %v1546
  %v2021 = vpop.f32.mrf.mxu0
  %v2022 = vadd.f32 %v1973, %v2021
  %v2023 = vpop.f32.mrf.mxu0
  %v2024 = vadd.f32 %v1975, %v2023
  %2025 = vdwg.mxu0
  %2026 = vmatpush.bf16.msra.mxu0 %v1166
  %2027 = vmatpush.bf16.msra.mxu0 %v1154
  %2028 = vmatpush.bf16.msra.mxu0 %v1142
  %2029 = vmatpush.bf16.msra.mxu0 %v1130
  %2030 = vmatpush.bf16.msra.mxu0 %v1118
  %2031 = vmatpush.bf16.msra.mxu0 %v1106
  %2032 = vmatpush.bf16.msra.mxu0 %v1094
  %2033 = vmatpush.bf16.msra.mxu0 %v1082
  %2034 = vmatmul.bf16.gmra.mxu0 %v355
  %v2035 = vpop.f32.mrf.mxu0
  %v2036 = vadd.f32 0.0, %v2035
  %v2037 = vpop.f32.mrf.mxu0
  %v2038 = vadd.f32 0.0, %v2037
  %2039 = vmatmul.bf16.gmra.mxu0 %v358
  %v2040 = vpop.f32.mrf.mxu0
  %v2041 = vadd.f32 0.0, %v2040
  %v2042 = vpop.f32.mrf.mxu0
  %v2043 = vadd.f32 0.0, %v2042
  %2044 = vmatmul.bf16.gmra.mxu0 %v361
  %v2045 = vpop.f32.mrf.mxu0
  %v2046 = vadd.f32 0.0, %v2045
  %v2047 = vpop.f32.mrf.mxu0
  %v2048 = vadd.f32 0.0, %v2047
  %2049 = vmatmul.bf16.gmra.mxu0 %v364
  %v2050 = vpop.f32.mrf.mxu0
  %v2051 = vadd.f32 0.0, %v2050
  %v2052 = vpop.f32.mrf.mxu0
  %v2053 = vadd.f32 0.0, %v2052
  %2054 = vmatmul.bf16.gmra.mxu0 %v367
  %v2055 = vpop.f32.mrf.mxu0
  %v2056 = vadd.f32 0.0, %v2055
  %v2057 = vpop.f32.mrf.mxu0
  %v2058 = vadd.f32 0.0, %v2057
  %2059 = vmatmul.bf16.gmra.mxu0 %v370
  %v2060 = vpop.f32.mrf.mxu0
  %v2061 = vadd.f32 0.0, %v2060
  %v2062 = vpop.f32.mrf.mxu0
  %v2063 = vadd.f32 0.0, %v2062
  %2064 = vmatmul.bf16.gmra.mxu0 %v373
  %v2065 = vpop.f32.mrf.mxu0
  %v2066 = vadd.f32 0.0, %v2065
  %v2067 = vpop.f32.mrf.mxu0
  %v2068 = vadd.f32 0.0, %v2067
  %2069 = vmatmul.bf16.gmra.mxu0 %v376
  %v2070 = vpop.f32.mrf.mxu0
  %v2071 = vadd.f32 0.0, %v2070
  %v2072 = vpop.f32.mrf.mxu0
  %v2073 = vadd.f32 0.0, %v2072
  %2074 = vdwg.mxu0
  %2075 = vmatpush.bf16.msra.mxu0 %v1262
  %2076 = vmatpush.bf16.msra.mxu0 %v1250
  %2077 = vmatpush.bf16.msra.mxu0 %v1238
  %2078 = vmatpush.bf16.msra.mxu0 %v1226
  %2079 = vmatpush.bf16.msra.mxu0 %v1214
  %2080 = vmatpush.bf16.msra.mxu0 %v1202
  %2081 = vmatpush.bf16.msra.mxu0 %v1190
  %2082 = vmatpush.bf16.msra.mxu0 %v1178
  %2083 = vmatmul.bf16.gmra.mxu0 %v356
  %v2084 = vpop.f32.mrf.mxu0
  %v2085 = vadd.f32 %v2036, %v2084
  %v2086 = vpop.f32.mrf.mxu0
  %v2087 = vadd.f32 %v2038, %v2086
  %2088 = vmatmul.bf16.gmra.mxu0 %v359
  %v2089 = vpop.f32.mrf.mxu0
  %v2090 = vadd.f32 %v2041, %v2089
  %v2091 = vpop.f32.mrf.mxu0
  %v2092 = vadd.f32 %v2043, %v2091
  %2093 = vmatmul.bf16.gmra.mxu0 %v362
  %v2094 = vpop.f32.mrf.mxu0
  %v2095 = vadd.f32 %v2046, %v2094
  %v2096 = vpop.f32.mrf.mxu0
  %v2097 = vadd.f32 %v2048, %v2096
  %2098 = vmatmul.bf16.gmra.mxu0 %v365
  %v2099 = vpop.f32.mrf.mxu0
  %v2100 = vadd.f32 %v2051, %v2099
  %v2101 = vpop.f32.mrf.mxu0
  %v2102 = vadd.f32 %v2053, %v2101
  %2103 = vmatmul.bf16.gmra.mxu0 %v368
  %v2104 = vpop.f32.mrf.mxu0
  %v2105 = vadd.f32 %v2056, %v2104
  %v2106 = vpop.f32.mrf.mxu0
  %v2107 = vadd.f32 %v2058, %v2106
  %2108 = vmatmul.bf16.gmra.mxu0 %v371
  %v2109 = vpop.f32.mrf.mxu0
  %v2110 = vadd.f32 %v2061, %v2109
  %v2111 = vpop.f32.mrf.mxu0
  %v2112 = vadd.f32 %v2063, %v2111
  %2113 = vmatmul.bf16.gmra.mxu0 %v374
  %v2114 = vpop.f32.mrf.mxu0
  %v2115 = vadd.f32 %v2066, %v2114
  %v2116 = vpop.f32.mrf.mxu0
  %v2117 = vadd.f32 %v2068, %v2116
  %2118 = vmatmul.bf16.gmra.mxu0 %v377
  %v2119 = vpop.f32.mrf.mxu0
  %v2120 = vadd.f32 %v2071, %v2119
  %v2121 = vpop.f32.mrf.mxu0
  %v2122 = vadd.f32 %v2073, %v2121
  %2123 = vdwg.mxu0
  %2124 = vmatpush.bf16.msra.mxu0 0
  %2125 = vmatpush.bf16.msra.mxu0 0
  %2126 = vmatpush.bf16.msra.mxu0 0
  %2127 = vmatpush.bf16.msra.mxu0 0
  %2128 = vmatpush.bf16.msra.mxu0 0
  %2129 = vmatpush.bf16.msra.mxu0 %v1559
  %2130 = vmatpush.bf16.msra.mxu0 %v1286
  %2131 = vmatpush.bf16.msra.mxu0 %v1274
  %2132 = vmatmul.bf16.gmra.mxu0 %v1525
  %v2133 = vpop.f32.mrf.mxu0
  %v2134 = vadd.f32 %v2085, %v2133
  %v2135 = vpop.f32.mrf.mxu0
  %v2136 = vadd.f32 %v2087, %v2135
  %2137 = vmatmul.bf16.gmra.mxu0 %v1528
  %v2138 = vpop.f32.mrf.mxu0
  %v2139 = vadd.f32 %v2090, %v2138
  %v2140 = vpop.f32.mrf.mxu0
  %v2141 = vadd.f32 %v2092, %v2140
  %2142 = vmatmul.bf16.gmra.mxu0 %v1531
  %v2143 = vpop.f32.mrf.mxu0
  %v2144 = vadd.f32 %v2095, %v2143
  %v2145 = vpop.f32.mrf.mxu0
  %v2146 = vadd.f32 %v2097, %v2145
  %2147 = vmatmul.bf16.gmra.mxu0 %v1534
  %v2148 = vpop.f32.mrf.mxu0
  %v2149 = vadd.f32 %v2100, %v2148
  %v2150 = vpop.f32.mrf.mxu0
  %v2151 = vadd.f32 %v2102, %v2150
  %2152 = vmatmul.bf16.gmra.mxu0 %v1537
  %v2153 = vpop.f32.mrf.mxu0
  %v2154 = vadd.f32 %v2105, %v2153
  %v2155 = vpop.f32.mrf.mxu0
  %v2156 = vadd.f32 %v2107, %v2155
  %2157 = vmatmul.bf16.gmra.mxu0 %v1540
  %v2158 = vpop.f32.mrf.mxu0
  %v2159 = vadd.f32 %v2110, %v2158
  %v2160 = vpop.f32.mrf.mxu0
  %v2161 = vadd.f32 %v2112, %v2160
  %2162 = vmatmul.bf16.gmra.mxu0 %v1543
  %v2163 = vpop.f32.mrf.mxu0
  %v2164 = vadd.f32 %v2115, %v2163
  %v2165 = vpop.f32.mrf.mxu0
  %v2166 = vadd.f32 %v2117, %v2165
  %2167 = vmatmul.bf16.gmra.mxu0 %v1546
  %v2168 = vpop.f32.mrf.mxu0
  %v2169 = vadd.f32 %v2120, %v2168
  %v2170 = vpop.f32.mrf.mxu0
  %v2171 = vadd.f32 %v2122, %v2170
  %2172 = vdwg.mxu0
  %2173 = vmatpush.bf16.msra.mxu0 %v1167
  %2174 = vmatpush.bf16.msra.mxu0 %v1155
  %2175 = vmatpush.bf16.msra.mxu0 %v1143
  %2176 = vmatpush.bf16.msra.mxu0 %v1131
  %2177 = vmatpush.bf16.msra.mxu0 %v1119
  %2178 = vmatpush.bf16.msra.mxu0 %v1107
  %2179 = vmatpush.bf16.msra.mxu0 %v1095
  %2180 = vmatpush.bf16.msra.mxu0 %v1083
  %2181 = vmatmul.bf16.gmra.mxu0 %v355
  %v2182 = vpop.f32.mrf.mxu0
  %v2183 = vadd.f32 0.0, %v2182
  %v2184 = vpop.f32.mrf.mxu0
  %v2185 = vadd.f32 0.0, %v2184
  %2186 = vmatmul.bf16.gmra.mxu0 %v358
  %v2187 = vpop.f32.mrf.mxu0
  %v2188 = vadd.f32 0.0, %v2187
  %v2189 = vpop.f32.mrf.mxu0
  %v2190 = vadd.f32 0.0, %v2189
  %2191 = vmatmul.bf16.gmra.mxu0 %v361
  %v2192 = vpop.f32.mrf.mxu0
  %v2193 = vadd.f32 0.0, %v2192
  %v2194 = vpop.f32.mrf.mxu0
  %v2195 = vadd.f32 0.0, %v2194
  %2196 = vmatmul.bf16.gmra.mxu0 %v364
  %v2197 = vpop.f32.mrf.mxu0
  %v2198 = vadd.f32 0.0, %v2197
  %v2199 = vpop.f32.mrf.mxu0
  %v2200 = vadd.f32 0.0, %v2199
  %2201 = vmatmul.bf16.gmra.mxu0 %v367
  %v2202 = vpop.f32.mrf.mxu0
  %v2203 = vadd.f32 0.0, %v2202
  %v2204 = vpop.f32.mrf.mxu0
  %v2205 = vadd.f32 0.0, %v2204
  %2206 = vmatmul.bf16.gmra.mxu0 %v370
  %v2207 = vpop.f32.mrf.mxu0
  %v2208 = vadd.f32 0.0, %v2207
  %v2209 = vpop.f32.mrf.mxu0
  %v2210 = vadd.f32 0.0, %v2209
  %2211 = vmatmul.bf16.gmra.mxu0 %v373
  %v2212 = vpop.f32.mrf.mxu0
  %v2213 = vadd.f32 0.0, %v2212
  %v2214 = vpop.f32.mrf.mxu0
  %v2215 = vadd.f32 0.0, %v2214
  %2216 = vmatmul.bf16.gmra.mxu0 %v376
  %v2217 = vpop.f32.mrf.mxu0
  %v2218 = vadd.f32 0.0, %v2217
  %v2219 = vpop.f32.mrf.mxu0
  %v2220 = vadd.f32 0.0, %v2219
  %2221 = vdwg.mxu0
  %2222 = vmatpush.bf16.msra.mxu0 %v1263
  %2223 = vmatpush.bf16.msra.mxu0 %v1251
  %2224 = vmatpush.bf16.msra.mxu0 %v1239
  %2225 = vmatpush.bf16.msra.mxu0 %v1227
  %2226 = vmatpush.bf16.msra.mxu0 %v1215
  %2227 = vmatpush.bf16.msra.mxu0 %v1203
  %2228 = vmatpush.bf16.msra.mxu0 %v1191
  %2229 = vmatpush.bf16.msra.mxu0 %v1179
  %2230 = vmatmul.bf16.gmra.mxu0 %v356
  %v2231 = vpop.f32.mrf.mxu0
  %v2232 = vadd.f32 %v2183, %v2231
  %v2233 = vpop.f32.mrf.mxu0
  %v2234 = vadd.f32 %v2185, %v2233
  %2235 = vmatmul.bf16.gmra.mxu0 %v359
  %v2236 = vpop.f32.mrf.mxu0
  %v2237 = vadd.f32 %v2188, %v2236
  %v2238 = vpop.f32.mrf.mxu0
  %v2239 = vadd.f32 %v2190, %v2238
  %2240 = vmatmul.bf16.gmra.mxu0 %v362
  %v2241 = vpop.f32.mrf.mxu0
  %v2242 = vadd.f32 %v2193, %v2241
  %v2243 = vpop.f32.mrf.mxu0
  %v2244 = vadd.f32 %v2195, %v2243
  %2245 = vmatmul.bf16.gmra.mxu0 %v365
  %v2246 = vpop.f32.mrf.mxu0
  %v2247 = vadd.f32 %v2198, %v2246
  %v2248 = vpop.f32.mrf.mxu0
  %v2249 = vadd.f32 %v2200, %v2248
  %2250 = vmatmul.bf16.gmra.mxu0 %v368
  %v2251 = vpop.f32.mrf.mxu0
  %v2252 = vadd.f32 %v2203, %v2251
  %v2253 = vpop.f32.mrf.mxu0
  %v2254 = vadd.f32 %v2205, %v2253
  %2255 = vmatmul.bf16.gmra.mxu0 %v371
  %v2256 = vpop.f32.mrf.mxu0
  %v2257 = vadd.f32 %v2208, %v2256
  %v2258 = vpop.f32.mrf.mxu0
  %v2259 = vadd.f32 %v2210, %v2258
  %2260 = vmatmul.bf16.gmra.mxu0 %v374
  %v2261 = vpop.f32.mrf.mxu0
  %v2262 = vadd.f32 %v2213, %v2261
  %v2263 = vpop.f32.mrf.mxu0
  %v2264 = vadd.f32 %v2215, %v2263
  %2265 = vmatmul.bf16.gmra.mxu0 %v377
  %v2266 = vpop.f32.mrf.mxu0
  %v2267 = vadd.f32 %v2218, %v2266
  %v2268 = vpop.f32.mrf.mxu0
  %v2269 = vadd.f32 %v2220, %v2268
  %2270 = vdwg.mxu0
  %2271 = vmatpush.bf16.msra.mxu0 0
  %2272 = vmatpush.bf16.msra.mxu0 0
  %2273 = vmatpush.bf16.msra.mxu0 0
  %2274 = vmatpush.bf16.msra.mxu0 0
  %2275 = vmatpush.bf16.msra.mxu0 0
  %2276 = vmatpush.bf16.msra.mxu0 %v1562
  %2277 = vmatpush.bf16.msra.mxu0 %v1287
  %2278 = vmatpush.bf16.msra.mxu0 %v1275
  %2279 = vmatmul.bf16.gmra.mxu0 %v1525
  %v2280 = vpop.f32.mrf.mxu0
  %v2281 = vadd.f32 %v2232, %v2280
  %v2282 = vpop.f32.mrf.mxu0
  %v2283 = vadd.f32 %v2234, %v2282
  %2284 = vmatmul.bf16.gmra.mxu0 %v1528
  %v2285 = vpop.f32.mrf.mxu0
  %v2286 = vadd.f32 %v2237, %v2285
  %v2287 = vpop.f32.mrf.mxu0
  %v2288 = vadd.f32 %v2239, %v2287
  %2289 = vmatmul.bf16.gmra.mxu0 %v1531
  %v2290 = vpop.f32.mrf.mxu0
  %v2291 = vadd.f32 %v2242, %v2290
  %v2292 = vpop.f32.mrf.mxu0
  %v2293 = vadd.f32 %v2244, %v2292
  %2294 = vmatmul.bf16.gmra.mxu0 %v1534
  %v2295 = vpop.f32.mrf.mxu0
  %v2296 = vadd.f32 %v2247, %v2295
  %v2297 = vpop.f32.mrf.mxu0
  %v2298 = vadd.f32 %v2249, %v2297
  %2299 = vmatmul.bf16.gmra.mxu0 %v1537
  %v2300 = vpop.f32.mrf.mxu0
  %v2301 = vadd.f32 %v2252, %v2300
  %v2302 = vpop.f32.mrf.mxu0
  %v2303 = vadd.f32 %v2254, %v2302
  %2304 = vmatmul.bf16.gmra.mxu0 %v1540
  %v2305 = vpop.f32.mrf.mxu0
  %v2306 = vadd.f32 %v2257, %v2305
  %v2307 = vpop.f32.mrf.mxu0
  %v2308 = vadd.f32 %v2259, %v2307
  %2309 = vmatmul.bf16.gmra.mxu0 %v1543
  %v2310 = vpop.f32.mrf.mxu0
  %v2311 = vadd.f32 %v2262, %v2310
  %v2312 = vpop.f32.mrf.mxu0
  %v2313 = vadd.f32 %v2264, %v2312
  %2314 = vmatmul.bf16.gmra.mxu0 %v1546
  %v2315 = vpop.f32.mrf.mxu0
  %v2316 = vadd.f32 %v2267, %v2315
  %v2317 = vpop.f32.mrf.mxu0
  %v2318 = vadd.f32 %v2269, %v2317
  %2319 = vdwg.mxu0
  %2320 = vmatpush.bf16.msra.mxu0 %v1168
  %2321 = vmatpush.bf16.msra.mxu0 %v1156
  %2322 = vmatpush.bf16.msra.mxu0 %v1144
  %2323 = vmatpush.bf16.msra.mxu0 %v1132
  %2324 = vmatpush.bf16.msra.mxu0 %v1120
  %2325 = vmatpush.bf16.msra.mxu0 %v1108
  %2326 = vmatpush.bf16.msra.mxu0 %v1096
  %2327 = vmatpush.bf16.msra.mxu0 %v1084
  %2328 = vmatmul.bf16.gmra.mxu0 %v355
  %v2329 = vpop.f32.mrf.mxu0
  %v2330 = vadd.f32 0.0, %v2329
  %v2331 = vpop.f32.mrf.mxu0
  %v2332 = vadd.f32 0.0, %v2331
  %2333 = vmatmul.bf16.gmra.mxu0 %v358
  %v2334 = vpop.f32.mrf.mxu0
  %v2335 = vadd.f32 0.0, %v2334
  %v2336 = vpop.f32.mrf.mxu0
  %v2337 = vadd.f32 0.0, %v2336
  %2338 = vmatmul.bf16.gmra.mxu0 %v361
  %v2339 = vpop.f32.mrf.mxu0
  %v2340 = vadd.f32 0.0, %v2339
  %v2341 = vpop.f32.mrf.mxu0
  %v2342 = vadd.f32 0.0, %v2341
  %2343 = vmatmul.bf16.gmra.mxu0 %v364
  %v2344 = vpop.f32.mrf.mxu0
  %v2345 = vadd.f32 0.0, %v2344
  %v2346 = vpop.f32.mrf.mxu0
  %v2347 = vadd.f32 0.0, %v2346
  %2348 = vmatmul.bf16.gmra.mxu0 %v367
  %v2349 = vpop.f32.mrf.mxu0
  %v2350 = vadd.f32 0.0, %v2349
  %v2351 = vpop.f32.mrf.mxu0
  %v2352 = vadd.f32 0.0, %v2351
  %2353 = vmatmul.bf16.gmra.mxu0 %v370
  %v2354 = vpop.f32.mrf.mxu0
  %v2355 = vadd.f32 0.0, %v2354
  %v2356 = vpop.f32.mrf.mxu0
  %v2357 = vadd.f32 0.0, %v2356
  %2358 = vmatmul.bf16.gmra.mxu0 %v373
  %v2359 = vpop.f32.mrf.mxu0
  %v2360 = vadd.f32 0.0, %v2359
  %v2361 = vpop.f32.mrf.mxu0
  %v2362 = vadd.f32 0.0, %v2361
  %2363 = vmatmul.bf16.gmra.mxu0 %v376
  %v2364 = vpop.f32.mrf.mxu0
  %v2365 = vadd.f32 0.0, %v2364
  %v2366 = vpop.f32.mrf.mxu0
  %v2367 = vadd.f32 0.0, %v2366
  %2368 = vdwg.mxu0
  %2369 = vmatpush.bf16.msra.mxu0 %v1264
  %2370 = vmatpush.bf16.msra.mxu0 %v1252
  %2371 = vmatpush.bf16.msra.mxu0 %v1240
  %2372 = vmatpush.bf16.msra.mxu0 %v1228
  %2373 = vmatpush.bf16.msra.mxu0 %v1216
  %2374 = vmatpush.bf16.msra.mxu0 %v1204
  %2375 = vmatpush.bf16.msra.mxu0 %v1192
  %2376 = vmatpush.bf16.msra.mxu0 %v1180
  %2377 = vmatmul.bf16.gmra.mxu0 %v356
  %v2378 = vpop.f32.mrf.mxu0
  %v2379 = vadd.f32 %v2330, %v2378
  %v2380 = vpop.f32.mrf.mxu0
  %v2381 = vadd.f32 %v2332, %v2380
  %2382 = vmatmul.bf16.gmra.mxu0 %v359
  %v2383 = vpop.f32.mrf.mxu0
  %v2384 = vadd.f32 %v2335, %v2383
  %v2385 = vpop.f32.mrf.mxu0
  %v2386 = vadd.f32 %v2337, %v2385
  %2387 = vmatmul.bf16.gmra.mxu0 %v362
  %v2388 = vpop.f32.mrf.mxu0
  %v2389 = vadd.f32 %v2340, %v2388
  %v2390 = vpop.f32.mrf.mxu0
  %v2391 = vadd.f32 %v2342, %v2390
  %2392 = vmatmul.bf16.gmra.mxu0 %v365
  %v2393 = vpop.f32.mrf.mxu0
  %v2394 = vadd.f32 %v2345, %v2393
  %v2395 = vpop.f32.mrf.mxu0
  %v2396 = vadd.f32 %v2347, %v2395
  %2397 = vmatmul.bf16.gmra.mxu0 %v368
  %v2398 = vpop.f32.mrf.mxu0
  %v2399 = vadd.f32 %v2350, %v2398
  %v2400 = vpop.f32.mrf.mxu0
  %v2401 = vadd.f32 %v2352, %v2400
  %2402 = vmatmul.bf16.gmra.mxu0 %v371
  %v2403 = vpop.f32.mrf.mxu0
  %v2404 = vadd.f32 %v2355, %v2403
  %v2405 = vpop.f32.mrf.mxu0
  %v2406 = vadd.f32 %v2357, %v2405
  %2407 = vmatmul.bf16.gmra.mxu0 %v374
  %v2408 = vpop.f32.mrf.mxu0
  %v2409 = vadd.f32 %v2360, %v2408
  %v2410 = vpop.f32.mrf.mxu0
  %v2411 = vadd.f32 %v2362, %v2410
  %2412 = vmatmul.bf16.gmra.mxu0 %v377
  %v2413 = vpop.f32.mrf.mxu0
  %v2414 = vadd.f32 %v2365, %v2413
  %v2415 = vpop.f32.mrf.mxu0
  %v2416 = vadd.f32 %v2367, %v2415
  %2417 = vdwg.mxu0
  %2418 = vmatpush.bf16.msra.mxu0 0
  %2419 = vmatpush.bf16.msra.mxu0 0
  %2420 = vmatpush.bf16.msra.mxu0 0
  %2421 = vmatpush.bf16.msra.mxu0 0
  %2422 = vmatpush.bf16.msra.mxu0 0
  %2423 = vmatpush.bf16.msra.mxu0 %v1565
  %2424 = vmatpush.bf16.msra.mxu0 %v1288
  %2425 = vmatpush.bf16.msra.mxu0 %v1276
  %2426 = vmatmul.bf16.gmra.mxu0 %v1525
  %v2427 = vpop.f32.mrf.mxu0
  %v2428 = vadd.f32 %v2379, %v2427
  %v2429 = vpop.f32.mrf.mxu0
  %v2430 = vadd.f32 %v2381, %v2429
  %2431 = vmatmul.bf16.gmra.mxu0 %v1528
  %v2432 = vpop.f32.mrf.mxu0
  %v2433 = vadd.f32 %v2384, %v2432
  %v2434 = vpop.f32.mrf.mxu0
  %v2435 = vadd.f32 %v2386, %v2434
  %2436 = vmatmul.bf16.gmra.mxu0 %v1531
  %v2437 = vpop.f32.mrf.mxu0
  %v2438 = vadd.f32 %v2389, %v2437
  %v2439 = vpop.f32.mrf.mxu0
  %v2440 = vadd.f32 %v2391, %v2439
  %2441 = vmatmul.bf16.gmra.mxu0 %v1534
  %v2442 = vpop.f32.mrf.mxu0
  %v2443 = vadd.f32 %v2394, %v2442
  %v2444 = vpop.f32.mrf.mxu0
  %v2445 = vadd.f32 %v2396, %v2444
  %2446 = vmatmul.bf16.gmra.mxu0 %v1537
  %v2447 = vpop.f32.mrf.mxu0
  %v2448 = vadd.f32 %v2399, %v2447
  %v2449 = vpop.f32.mrf.mxu0
  %v2450 = vadd.f32 %v2401, %v2449
  %2451 = vmatmul.bf16.gmra.mxu0 %v1540
  %v2452 = vpop.f32.mrf.mxu0
  %v2453 = vadd.f32 %v2404, %v2452
  %v2454 = vpop.f32.mrf.mxu0
  %v2455 = vadd.f32 %v2406, %v2454
  %2456 = vmatmul.bf16.gmra.mxu0 %v1543
  %v2457 = vpop.f32.mrf.mxu0
  %v2458 = vadd.f32 %v2409, %v2457
  %v2459 = vpop.f32.mrf.mxu0
  %v2460 = vadd.f32 %v2411, %v2459
  %2461 = vmatmul.bf16.gmra.mxu0 %v1546
  %v2462 = vpop.f32.mrf.mxu0
  %v2463 = vadd.f32 %v2414, %v2462
  %v2464 = vpop.f32.mrf.mxu0
  %v2465 = vadd.f32 %v2416, %v2464
  %2466 = vdwg.mxu0
  %2467 = vmatpush.bf16.msra.mxu0 %v1169
  %2468 = vmatpush.bf16.msra.mxu0 %v1157
  %2469 = vmatpush.bf16.msra.mxu0 %v1145
  %2470 = vmatpush.bf16.msra.mxu0 %v1133
  %2471 = vmatpush.bf16.msra.mxu0 %v1121
  %2472 = vmatpush.bf16.msra.mxu0 %v1109
  %2473 = vmatpush.bf16.msra.mxu0 %v1097
  %2474 = vmatpush.bf16.msra.mxu0 %v1085
  %2475 = vmatmul.bf16.gmra.mxu0 %v355
  %v2476 = vpop.f32.mrf.mxu0
  %v2477 = vadd.f32 0.0, %v2476
  %v2478 = vpop.f32.mrf.mxu0
  %v2479 = vadd.f32 0.0, %v2478
  %2480 = vmatmul.bf16.gmra.mxu0 %v358
  %v2481 = vpop.f32.mrf.mxu0
  %v2482 = vadd.f32 0.0, %v2481
  %v2483 = vpop.f32.mrf.mxu0
  %v2484 = vadd.f32 0.0, %v2483
  %2485 = vmatmul.bf16.gmra.mxu0 %v361
  %v2486 = vpop.f32.mrf.mxu0
  %v2487 = vadd.f32 0.0, %v2486
  %v2488 = vpop.f32.mrf.mxu0
  %v2489 = vadd.f32 0.0, %v2488
  %2490 = vmatmul.bf16.gmra.mxu0 %v364
  %v2491 = vpop.f32.mrf.mxu0
  %v2492 = vadd.f32 0.0, %v2491
  %v2493 = vpop.f32.mrf.mxu0
  %v2494 = vadd.f32 0.0, %v2493
  %2495 = vmatmul.bf16.gmra.mxu0 %v367
  %v2496 = vpop.f32.mrf.mxu0
  %v2497 = vadd.f32 0.0, %v2496
  %v2498 = vpop.f32.mrf.mxu0
  %v2499 = vadd.f32 0.0, %v2498
  %2500 = vmatmul.bf16.gmra.mxu0 %v370
  %v2501 = vpop.f32.mrf.mxu0
  %v2502 = vadd.f32 0.0, %v2501
  %v2503 = vpop.f32.mrf.mxu0
  %v2504 = vadd.f32 0.0, %v2503
  %2505 = vmatmul.bf16.gmra.mxu0 %v373
  %v2506 = vpop.f32.mrf.mxu0
  %v2507 = vadd.f32 0.0, %v2506
  %v2508 = vpop.f32.mrf.mxu0
  %v2509 = vadd.f32 0.0, %v2508
  %2510 = vmatmul.bf16.gmra.mxu0 %v376
  %v2511 = vpop.f32.mrf.mxu0
  %v2512 = vadd.f32 0.0, %v2511
  %v2513 = vpop.f32.mrf.mxu0
  %v2514 = vadd.f32 0.0, %v2513
  %2515 = vdwg.mxu0
  %2516 = vmatpush.bf16.msra.mxu0 %v1265
  %2517 = vmatpush.bf16.msra.mxu0 %v1253
  %2518 = vmatpush.bf16.msra.mxu0 %v1241
  %2519 = vmatpush.bf16.msra.mxu0 %v1229
  %2520 = vmatpush.bf16.msra.mxu0 %v1217
  %2521 = vmatpush.bf16.msra.mxu0 %v1205
  %2522 = vmatpush.bf16.msra.mxu0 %v1193
  %2523 = vmatpush.bf16.msra.mxu0 %v1181
  %2524 = vmatmul.bf16.gmra.mxu0 %v356
  %v2525 = vpop.f32.mrf.mxu0
  %v2526 = vadd.f32 %v2477, %v2525
  %v2527 = vpop.f32.mrf.mxu0
  %v2528 = vadd.f32 %v2479, %v2527
  %2529 = vmatmul.bf16.gmra.mxu0 %v359
  %v2530 = vpop.f32.mrf.mxu0
  %v2531 = vadd.f32 %v2482, %v2530
  %v2532 = vpop.f32.mrf.mxu0
  %v2533 = vadd.f32 %v2484, %v2532
  %2534 = vmatmul.bf16.gmra.mxu0 %v362
  %v2535 = vpop.f32.mrf.mxu0
  %v2536 = vadd.f32 %v2487, %v2535
  %v2537 = vpop.f32.mrf.mxu0
  %v2538 = vadd.f32 %v2489, %v2537
  %2539 = vmatmul.bf16.gmra.mxu0 %v365
  %v2540 = vpop.f32.mrf.mxu0
  %v2541 = vadd.f32 %v2492, %v2540
  %v2542 = vpop.f32.mrf.mxu0
  %v2543 = vadd.f32 %v2494, %v2542
  %2544 = vmatmul.bf16.gmra.mxu0 %v368
  %v2545 = vpop.f32.mrf.mxu0
  %v2546 = vadd.f32 %v2497, %v2545
  %v2547 = vpop.f32.mrf.mxu0
  %v2548 = vadd.f32 %v2499, %v2547
  %2549 = vmatmul.bf16.gmra.mxu0 %v371
  %v2550 = vpop.f32.mrf.mxu0
  %v2551 = vadd.f32 %v2502, %v2550
  %v2552 = vpop.f32.mrf.mxu0
  %v2553 = vadd.f32 %v2504, %v2552
  %2554 = vmatmul.bf16.gmra.mxu0 %v374
  %v2555 = vpop.f32.mrf.mxu0
  %v2556 = vadd.f32 %v2507, %v2555
  %v2557 = vpop.f32.mrf.mxu0
  %v2558 = vadd.f32 %v2509, %v2557
  %2559 = vmatmul.bf16.gmra.mxu0 %v377
  %v2560 = vpop.f32.mrf.mxu0
  %v2561 = vadd.f32 %v2512, %v2560
  %v2562 = vpop.f32.mrf.mxu0
  %v2563 = vadd.f32 %v2514, %v2562
  %2564 = vdwg.mxu0
  %2565 = vmatpush.bf16.msra.mxu0 0
  %2566 = vmatpush.bf16.msra.mxu0 0
  %2567 = vmatpush.bf16.msra.mxu0 0
  %2568 = vmatpush.bf16.msra.mxu0 0
  %2569 = vmatpush.bf16.msra.mxu0 0
  %2570 = vmatpush.bf16.msra.mxu0 %v1568
  %2571 = vmatpush.bf16.msra.mxu0 %v1289
  %2572 = vmatpush.bf16.msra.mxu0 %v1277
  %2573 = vmatmul.bf16.gmra.mxu0 %v1525
  %v2574 = vpop.f32.mrf.mxu0
  %v2575 = vadd.f32 %v2526, %v2574
  %v2576 = vpop.f32.mrf.mxu0
  %v2577 = vadd.f32 %v2528, %v2576
  %2578 = vmatmul.bf16.gmra.mxu0 %v1528
  %v2579 = vpop.f32.mrf.mxu0
  %v2580 = vadd.f32 %v2531, %v2579
  %v2581 = vpop.f32.mrf.mxu0
  %v2582 = vadd.f32 %v2533, %v2581
  %2583 = vmatmul.bf16.gmra.mxu0 %v1531
  %v2584 = vpop.f32.mrf.mxu0
  %v2585 = vadd.f32 %v2536, %v2584
  %v2586 = vpop.f32.mrf.mxu0
  %v2587 = vadd.f32 %v2538, %v2586
  %2588 = vmatmul.bf16.gmra.mxu0 %v1534
  %v2589 = vpop.f32.mrf.mxu0
  %v2590 = vadd.f32 %v2541, %v2589
  %v2591 = vpop.f32.mrf.mxu0
  %v2592 = vadd.f32 %v2543, %v2591
  %2593 = vmatmul.bf16.gmra.mxu0 %v1537
  %v2594 = vpop.f32.mrf.mxu0
  %v2595 = vadd.f32 %v2546, %v2594
  %v2596 = vpop.f32.mrf.mxu0
  %v2597 = vadd.f32 %v2548, %v2596
  %2598 = vmatmul.bf16.gmra.mxu0 %v1540
  %v2599 = vpop.f32.mrf.mxu0
  %v2600 = vadd.f32 %v2551, %v2599
  %v2601 = vpop.f32.mrf.mxu0
  %v2602 = vadd.f32 %v2553, %v2601
  %2603 = vmatmul.bf16.gmra.mxu0 %v1543
  %v2604 = vpop.f32.mrf.mxu0
  %v2605 = vadd.f32 %v2556, %v2604
  %v2606 = vpop.f32.mrf.mxu0
  %v2607 = vadd.f32 %v2558, %v2606
  %2608 = vmatmul.bf16.gmra.mxu0 %v1546
  %v2609 = vpop.f32.mrf.mxu0
  %v2610 = vadd.f32 %v2561, %v2609
  %v2611 = vpop.f32.mrf.mxu0
  %v2612 = vadd.f32 %v2563, %v2611
  %2613 = vdwg.mxu0
  %2614 = vmatpush.bf16.msra.mxu0 %v1170
  %2615 = vmatpush.bf16.msra.mxu0 %v1158
  %2616 = vmatpush.bf16.msra.mxu0 %v1146
  %2617 = vmatpush.bf16.msra.mxu0 %v1134
  %2618 = vmatpush.bf16.msra.mxu0 %v1122
  %2619 = vmatpush.bf16.msra.mxu0 %v1110
  %2620 = vmatpush.bf16.msra.mxu0 %v1098
  %2621 = vmatpush.bf16.msra.mxu0 %v1086
  %2622 = vmatmul.bf16.gmra.mxu0 %v355
  %v2623 = vpop.f32.mrf.mxu0
  %v2624 = vadd.f32 0.0, %v2623
  %v2625 = vpop.f32.mrf.mxu0
  %v2626 = vadd.f32 0.0, %v2625
  %2627 = vmatmul.bf16.gmra.mxu0 %v358
  %v2628 = vpop.f32.mrf.mxu0
  %v2629 = vadd.f32 0.0, %v2628
  %v2630 = vpop.f32.mrf.mxu0
  %v2631 = vadd.f32 0.0, %v2630
  %2632 = vmatmul.bf16.gmra.mxu0 %v361
  %v2633 = vpop.f32.mrf.mxu0
  %v2634 = vadd.f32 0.0, %v2633
  %v2635 = vpop.f32.mrf.mxu0
  %v2636 = vadd.f32 0.0, %v2635
  %2637 = vmatmul.bf16.gmra.mxu0 %v364
  %v2638 = vpop.f32.mrf.mxu0
  %v2639 = vadd.f32 0.0, %v2638
  %v2640 = vpop.f32.mrf.mxu0
  %v2641 = vadd.f32 0.0, %v2640
  %2642 = vmatmul.bf16.gmra.mxu0 %v367
  %v2643 = vpop.f32.mrf.mxu0
  %v2644 = vadd.f32 0.0, %v2643
  %v2645 = vpop.f32.mrf.mxu0
  %v2646 = vadd.f32 0.0, %v2645
  %2647 = vmatmul.bf16.gmra.mxu0 %v370
  %v2648 = vpop.f32.mrf.mxu0
  %v2649 = vadd.f32 0.0, %v2648
  %v2650 = vpop.f32.mrf.mxu0
  %v2651 = vadd.f32 0.0, %v2650
  %2652 = vmatmul.bf16.gmra.mxu0 %v373
  %v2653 = vpop.f32.mrf.mxu0
  %v2654 = vadd.f32 0.0, %v2653
  %v2655 = vpop.f32.mrf.mxu0
  %v2656 = vadd.f32 0.0, %v2655
  %2657 = vmatmul.bf16.gmra.mxu0 %v376
  %v2658 = vpop.f32.mrf.mxu0
  %v2659 = vadd.f32 0.0, %v2658
  %v2660 = vpop.f32.mrf.mxu0
  %v2661 = vadd.f32 0.0, %v2660
  %2662 = vdwg.mxu0
  %2663 = vmatpush.bf16.msra.mxu0 %v1266
  %2664 = vmatpush.bf16.msra.mxu0 %v1254
  %2665 = vmatpush.bf16.msra.mxu0 %v1242
  %2666 = vmatpush.bf16.msra.mxu0 %v1230
  %2667 = vmatpush.bf16.msra.mxu0 %v1218
  %2668 = vmatpush.bf16.msra.mxu0 %v1206
  %2669 = vmatpush.bf16.msra.mxu0 %v1194
  %2670 = vmatpush.bf16.msra.mxu0 %v1182
  %2671 = vmatmul.bf16.gmra.mxu0 %v356
  %v2672 = vpop.f32.mrf.mxu0
  %v2673 = vadd.f32 %v2624, %v2672
  %v2674 = vpop.f32.mrf.mxu0
  %v2675 = vadd.f32 %v2626, %v2674
  %2676 = vmatmul.bf16.gmra.mxu0 %v359
  %v2677 = vpop.f32.mrf.mxu0
  %v2678 = vadd.f32 %v2629, %v2677
  %v2679 = vpop.f32.mrf.mxu0
  %v2680 = vadd.f32 %v2631, %v2679
  %2681 = vmatmul.bf16.gmra.mxu0 %v362
  %v2682 = vpop.f32.mrf.mxu0
  %v2683 = vadd.f32 %v2634, %v2682
  %v2684 = vpop.f32.mrf.mxu0
  %v2685 = vadd.f32 %v2636, %v2684
  %2686 = vmatmul.bf16.gmra.mxu0 %v365
  %v2687 = vpop.f32.mrf.mxu0
  %v2688 = vadd.f32 %v2639, %v2687
  %v2689 = vpop.f32.mrf.mxu0
  %v2690 = vadd.f32 %v2641, %v2689
  %2691 = vmatmul.bf16.gmra.mxu0 %v368
  %v2692 = vpop.f32.mrf.mxu0
  %v2693 = vadd.f32 %v2644, %v2692
  %v2694 = vpop.f32.mrf.mxu0
  %v2695 = vadd.f32 %v2646, %v2694
  %2696 = vmatmul.bf16.gmra.mxu0 %v371
  %v2697 = vpop.f32.mrf.mxu0
  %v2698 = vadd.f32 %v2649, %v2697
  %v2699 = vpop.f32.mrf.mxu0
  %v2700 = vadd.f32 %v2651, %v2699
  %2701 = vmatmul.bf16.gmra.mxu0 %v374
  %v2702 = vpop.f32.mrf.mxu0
  %v2703 = vadd.f32 %v2654, %v2702
  %v2704 = vpop.f32.mrf.mxu0
  %v2705 = vadd.f32 %v2656, %v2704
  %2706 = vmatmul.bf16.gmra.mxu0 %v377
  %v2707 = vpop.f32.mrf.mxu0
  %v2708 = vadd.f32 %v2659, %v2707
  %v2709 = vpop.f32.mrf.mxu0
  %v2710 = vadd.f32 %v2661, %v2709
  %2711 = vdwg.mxu0
  %2712 = vmatpush.bf16.msra.mxu0 0
  %2713 = vmatpush.bf16.msra.mxu0 0
  %2714 = vmatpush.bf16.msra.mxu0 0
  %2715 = vmatpush.bf16.msra.mxu0 0
  %2716 = vmatpush.bf16.msra.mxu0 0
  %2717 = vmatpush.bf16.msra.mxu0 %v1571
  %2718 = vmatpush.bf16.msra.mxu0 %v1290
  %2719 = vmatpush.bf16.msra.mxu0 %v1278
  %2720 = vmatmul.bf16.gmra.mxu0 %v1525
  %v2721 = vpop.f32.mrf.mxu0
  %v2722 = vadd.f32 %v2673, %v2721
  %v2723 = vpop.f32.mrf.mxu0
  %v2724 = vadd.f32 %v2675, %v2723
  %2725 = vmatmul.bf16.gmra.mxu0 %v1528
  %v2726 = vpop.f32.mrf.mxu0
  %v2727 = vadd.f32 %v2678, %v2726
  %v2728 = vpop.f32.mrf.mxu0
  %v2729 = vadd.f32 %v2680, %v2728
  %2730 = vmatmul.bf16.gmra.mxu0 %v1531
  %v2731 = vpop.f32.mrf.mxu0
  %v2732 = vadd.f32 %v2683, %v2731
  %v2733 = vpop.f32.mrf.mxu0
  %v2734 = vadd.f32 %v2685, %v2733
  %2735 = vmatmul.bf16.gmra.mxu0 %v1534
  %v2736 = vpop.f32.mrf.mxu0
  %v2737 = vadd.f32 %v2688, %v2736
  %v2738 = vpop.f32.mrf.mxu0
  %v2739 = vadd.f32 %v2690, %v2738
  %2740 = vmatmul.bf16.gmra.mxu0 %v1537
  %v2741 = vpop.f32.mrf.mxu0
  %v2742 = vadd.f32 %v2693, %v2741
  %v2743 = vpop.f32.mrf.mxu0
  %v2744 = vadd.f32 %v2695, %v2743
  %2745 = vmatmul.bf16.gmra.mxu0 %v1540
  %v2746 = vpop.f32.mrf.mxu0
  %v2747 = vadd.f32 %v2698, %v2746
  %v2748 = vpop.f32.mrf.mxu0
  %v2749 = vadd.f32 %v2700, %v2748
  %2750 = vmatmul.bf16.gmra.mxu0 %v1543
  %v2751 = vpop.f32.mrf.mxu0
  %v2752 = vadd.f32 %v2703, %v2751
  %v2753 = vpop.f32.mrf.mxu0
  %v2754 = vadd.f32 %v2705, %v2753
  %2755 = vmatmul.bf16.gmra.mxu0 %v1546
  %v2756 = vpop.f32.mrf.mxu0
  %v2757 = vadd.f32 %v2708, %v2756
  %v2758 = vpop.f32.mrf.mxu0
  %v2759 = vadd.f32 %v2710, %v2758
  %2760 = vdwg.mxu0
  %2761 = vmatpush.bf16.msra.mxu0 %v1171
  %2762 = vmatpush.bf16.msra.mxu0 %v1159
  %2763 = vmatpush.bf16.msra.mxu0 %v1147
  %2764 = vmatpush.bf16.msra.mxu0 %v1135
  %2765 = vmatpush.bf16.msra.mxu0 %v1123
  %2766 = vmatpush.bf16.msra.mxu0 %v1111
  %2767 = vmatpush.bf16.msra.mxu0 %v1099
  %2768 = vmatpush.bf16.msra.mxu0 %v1087
  %2769 = vmatmul.bf16.gmra.mxu0 %v355
  %v2770 = vpop.f32.mrf.mxu0
  %v2771 = vadd.f32 0.0, %v2770
  %v2772 = vpop.f32.mrf.mxu0
  %v2773 = vadd.f32 0.0, %v2772
  %2774 = vmatmul.bf16.gmra.mxu0 %v358
  %v2775 = vpop.f32.mrf.mxu0
  %v2776 = vadd.f32 0.0, %v2775
  %v2777 = vpop.f32.mrf.mxu0
  %v2778 = vadd.f32 0.0, %v2777
  %2779 = vmatmul.bf16.gmra.mxu0 %v361
  %v2780 = vpop.f32.mrf.mxu0
  %v2781 = vadd.f32 0.0, %v2780
  %v2782 = vpop.f32.mrf.mxu0
  %v2783 = vadd.f32 0.0, %v2782
  %2784 = vmatmul.bf16.gmra.mxu0 %v364
  %v2785 = vpop.f32.mrf.mxu0
  %v2786 = vadd.f32 0.0, %v2785
  %v2787 = vpop.f32.mrf.mxu0
  %v2788 = vadd.f32 0.0, %v2787
  %2789 = vmatmul.bf16.gmra.mxu0 %v367
  %v2790 = vpop.f32.mrf.mxu0
  %v2791 = vadd.f32 0.0, %v2790
  %v2792 = vpop.f32.mrf.mxu0
  %v2793 = vadd.f32 0.0, %v2792
  %2794 = vmatmul.bf16.gmra.mxu0 %v370
  %v2795 = vpop.f32.mrf.mxu0
  %v2796 = vadd.f32 0.0, %v2795
  %v2797 = vpop.f32.mrf.mxu0
  %v2798 = vadd.f32 0.0, %v2797
  %2799 = vmatmul.bf16.gmra.mxu0 %v373
  %v2800 = vpop.f32.mrf.mxu0
  %v2801 = vadd.f32 0.0, %v2800
  %v2802 = vpop.f32.mrf.mxu0
  %v2803 = vadd.f32 0.0, %v2802
  %2804 = vmatmul.bf16.gmra.mxu0 %v376
  %v2805 = vpop.f32.mrf.mxu0
  %v2806 = vadd.f32 0.0, %v2805
  %v2807 = vpop.f32.mrf.mxu0
  %v2808 = vadd.f32 0.0, %v2807
  %2809 = vdwg.mxu0
  %2810 = vmatpush.bf16.msra.mxu0 %v1267
  %2811 = vmatpush.bf16.msra.mxu0 %v1255
  %2812 = vmatpush.bf16.msra.mxu0 %v1243
  %2813 = vmatpush.bf16.msra.mxu0 %v1231
  %2814 = vmatpush.bf16.msra.mxu0 %v1219
  %2815 = vmatpush.bf16.msra.mxu0 %v1207
  %2816 = vmatpush.bf16.msra.mxu0 %v1195
  %2817 = vmatpush.bf16.msra.mxu0 %v1183
  %2818 = vmatmul.bf16.gmra.mxu0 %v356
  %v2819 = vpop.f32.mrf.mxu0
  %v2820 = vadd.f32 %v2771, %v2819
  %v2821 = vpop.f32.mrf.mxu0
  %v2822 = vadd.f32 %v2773, %v2821
  %2823 = vmatmul.bf16.gmra.mxu0 %v359
  %v2824 = vpop.f32.mrf.mxu0
  %v2825 = vadd.f32 %v2776, %v2824
  %v2826 = vpop.f32.mrf.mxu0
  %v2827 = vadd.f32 %v2778, %v2826
  %2828 = vmatmul.bf16.gmra.mxu0 %v362
  %v2829 = vpop.f32.mrf.mxu0
  %v2830 = vadd.f32 %v2781, %v2829
  %v2831 = vpop.f32.mrf.mxu0
  %v2832 = vadd.f32 %v2783, %v2831
  %2833 = vmatmul.bf16.gmra.mxu0 %v365
  %v2834 = vpop.f32.mrf.mxu0
  %v2835 = vadd.f32 %v2786, %v2834
  %v2836 = vpop.f32.mrf.mxu0
  %v2837 = vadd.f32 %v2788, %v2836
  %2838 = vmatmul.bf16.gmra.mxu0 %v368
  %v2839 = vpop.f32.mrf.mxu0
  %v2840 = vadd.f32 %v2791, %v2839
  %v2841 = vpop.f32.mrf.mxu0
  %v2842 = vadd.f32 %v2793, %v2841
  %2843 = vmatmul.bf16.gmra.mxu0 %v371
  %v2844 = vpop.f32.mrf.mxu0
  %v2845 = vadd.f32 %v2796, %v2844
  %v2846 = vpop.f32.mrf.mxu0
  %v2847 = vadd.f32 %v2798, %v2846
  %2848 = vmatmul.bf16.gmra.mxu0 %v374
  %v2849 = vpop.f32.mrf.mxu0
  %v2850 = vadd.f32 %v2801, %v2849
  %v2851 = vpop.f32.mrf.mxu0
  %v2852 = vadd.f32 %v2803, %v2851
  %2853 = vmatmul.bf16.gmra.mxu0 %v377
  %v2854 = vpop.f32.mrf.mxu0
  %v2855 = vadd.f32 %v2806, %v2854
  %v2856 = vpop.f32.mrf.mxu0
  %v2857 = vadd.f32 %v2808, %v2856
  %2858 = vdwg.mxu0
  %2859 = vmatpush.bf16.msra.mxu0 0
  %2860 = vmatpush.bf16.msra.mxu0 0
  %2861 = vmatpush.bf16.msra.mxu0 0
  %2862 = vmatpush.bf16.msra.mxu0 0
  %2863 = vmatpush.bf16.msra.mxu0 0
  %2864 = vmatpush.bf16.msra.mxu0 %v1574
  %2865 = vmatpush.bf16.msra.mxu0 %v1291
  %2866 = vmatpush.bf16.msra.mxu0 %v1279
  %2867 = vmatmul.bf16.gmra.mxu0 %v1525
  %v2868 = vpop.f32.mrf.mxu0
  %v2869 = vadd.f32 %v2820, %v2868
  %v2870 = vpop.f32.mrf.mxu0
  %v2871 = vadd.f32 %v2822, %v2870
  %2872 = vmatmul.bf16.gmra.mxu0 %v1528
  %v2873 = vpop.f32.mrf.mxu0
  %v2874 = vadd.f32 %v2825, %v2873
  %v2875 = vpop.f32.mrf.mxu0
  %v2876 = vadd.f32 %v2827, %v2875
  %2877 = vmatmul.bf16.gmra.mxu0 %v1531
  %v2878 = vpop.f32.mrf.mxu0
  %v2879 = vadd.f32 %v2830, %v2878
  %v2880 = vpop.f32.mrf.mxu0
  %v2881 = vadd.f32 %v2832, %v2880
  %2882 = vmatmul.bf16.gmra.mxu0 %v1534
  %v2883 = vpop.f32.mrf.mxu0
  %v2884 = vadd.f32 %v2835, %v2883
  %v2885 = vpop.f32.mrf.mxu0
  %v2886 = vadd.f32 %v2837, %v2885
  %2887 = vmatmul.bf16.gmra.mxu0 %v1537
  %v2888 = vpop.f32.mrf.mxu0
  %v2889 = vadd.f32 %v2840, %v2888
  %v2890 = vpop.f32.mrf.mxu0
  %v2891 = vadd.f32 %v2842, %v2890
  %2892 = vmatmul.bf16.gmra.mxu0 %v1540
  %v2893 = vpop.f32.mrf.mxu0
  %v2894 = vadd.f32 %v2845, %v2893
  %v2895 = vpop.f32.mrf.mxu0
  %v2896 = vadd.f32 %v2847, %v2895
  %2897 = vmatmul.bf16.gmra.mxu0 %v1543
  %v2898 = vpop.f32.mrf.mxu0
  %v2899 = vadd.f32 %v2850, %v2898
  %v2900 = vpop.f32.mrf.mxu0
  %v2901 = vadd.f32 %v2852, %v2900
  %2902 = vmatmul.bf16.gmra.mxu0 %v1546
  %v2903 = vpop.f32.mrf.mxu0
  %v2904 = vadd.f32 %v2855, %v2903
  %v2905 = vpop.f32.mrf.mxu0
  %v2906 = vadd.f32 %v2857, %v2905
  %2907 = vdwg.mxu0
  %2908 = vmatpush.bf16.msra.mxu0 %v1172
  %2909 = vmatpush.bf16.msra.mxu0 %v1160
  %2910 = vmatpush.bf16.msra.mxu0 %v1148
  %2911 = vmatpush.bf16.msra.mxu0 %v1136
  %2912 = vmatpush.bf16.msra.mxu0 %v1124
  %2913 = vmatpush.bf16.msra.mxu0 %v1112
  %2914 = vmatpush.bf16.msra.mxu0 %v1100
  %2915 = vmatpush.bf16.msra.mxu0 %v1088
  %2916 = vmatmul.bf16.gmra.mxu0 %v355
  %v2917 = vpop.f32.mrf.mxu0
  %v2918 = vadd.f32 0.0, %v2917
  %v2919 = vpop.f32.mrf.mxu0
  %v2920 = vadd.f32 0.0, %v2919
  %2921 = vmatmul.bf16.gmra.mxu0 %v358
  %v2922 = vpop.f32.mrf.mxu0
  %v2923 = vadd.f32 0.0, %v2922
  %v2924 = vpop.f32.mrf.mxu0
  %v2925 = vadd.f32 0.0, %v2924
  %2926 = vmatmul.bf16.gmra.mxu0 %v361
  %v2927 = vpop.f32.mrf.mxu0
  %v2928 = vadd.f32 0.0, %v2927
  %v2929 = vpop.f32.mrf.mxu0
  %v2930 = vadd.f32 0.0, %v2929
  %2931 = vmatmul.bf16.gmra.mxu0 %v364
  %v2932 = vpop.f32.mrf.mxu0
  %v2933 = vadd.f32 0.0, %v2932
  %v2934 = vpop.f32.mrf.mxu0
  %v2935 = vadd.f32 0.0, %v2934
  %2936 = vmatmul.bf16.gmra.mxu0 %v367
  %v2937 = vpop.f32.mrf.mxu0
  %v2938 = vadd.f32 0.0, %v2937
  %v2939 = vpop.f32.mrf.mxu0
  %v2940 = vadd.f32 0.0, %v2939
  %2941 = vmatmul.bf16.gmra.mxu0 %v370
  %v2942 = vpop.f32.mrf.mxu0
  %v2943 = vadd.f32 0.0, %v2942
  %v2944 = vpop.f32.mrf.mxu0
  %v2945 = vadd.f32 0.0, %v2944
  %2946 = vmatmul.bf16.gmra.mxu0 %v373
  %v2947 = vpop.f32.mrf.mxu0
  %v2948 = vadd.f32 0.0, %v2947
  %v2949 = vpop.f32.mrf.mxu0
  %v2950 = vadd.f32 0.0, %v2949
  %2951 = vmatmul.bf16.gmra.mxu0 %v376
  %v2952 = vpop.f32.mrf.mxu0
  %v2953 = vadd.f32 0.0, %v2952
  %v2954 = vpop.f32.mrf.mxu0
  %v2955 = vadd.f32 0.0, %v2954
  %2956 = vdwg.mxu0
  %2957 = vmatpush.bf16.msra.mxu0 %v1268
  %2958 = vmatpush.bf16.msra.mxu0 %v1256
  %2959 = vmatpush.bf16.msra.mxu0 %v1244
  %2960 = vmatpush.bf16.msra.mxu0 %v1232
  %2961 = vmatpush.bf16.msra.mxu0 %v1220
  %2962 = vmatpush.bf16.msra.mxu0 %v1208
  %2963 = vmatpush.bf16.msra.mxu0 %v1196
  %2964 = vmatpush.bf16.msra.mxu0 %v1184
  %2965 = vmatmul.bf16.gmra.mxu0 %v356
  %v2966 = vpop.f32.mrf.mxu0
  %v2967 = vadd.f32 %v2918, %v2966
  %v2968 = vpop.f32.mrf.mxu0
  %v2969 = vadd.f32 %v2920, %v2968
  %2970 = vmatmul.bf16.gmra.mxu0 %v359
  %v2971 = vpop.f32.mrf.mxu0
  %v2972 = vadd.f32 %v2923, %v2971
  %v2973 = vpop.f32.mrf.mxu0
  %v2974 = vadd.f32 %v2925, %v2973
  %2975 = vmatmul.bf16.gmra.mxu0 %v362
  %v2976 = vpop.f32.mrf.mxu0
  %v2977 = vadd.f32 %v2928, %v2976
  %v2978 = vpop.f32.mrf.mxu0
  %v2979 = vadd.f32 %v2930, %v2978
  %2980 = vmatmul.bf16.gmra.mxu0 %v365
  %v2981 = vpop.f32.mrf.mxu0
  %v2982 = vadd.f32 %v2933, %v2981
  %v2983 = vpop.f32.mrf.mxu0
  %v2984 = vadd.f32 %v2935, %v2983
  %2985 = vmatmul.bf16.gmra.mxu0 %v368
  %v2986 = vpop.f32.mrf.mxu0
  %v2987 = vadd.f32 %v2938, %v2986
  %v2988 = vpop.f32.mrf.mxu0
  %v2989 = vadd.f32 %v2940, %v2988
  %2990 = vmatmul.bf16.gmra.mxu0 %v371
  %v2991 = vpop.f32.mrf.mxu0
  %v2992 = vadd.f32 %v2943, %v2991
  %v2993 = vpop.f32.mrf.mxu0
  %v2994 = vadd.f32 %v2945, %v2993
  %2995 = vmatmul.bf16.gmra.mxu0 %v374
  %v2996 = vpop.f32.mrf.mxu0
  %v2997 = vadd.f32 %v2948, %v2996
  %v2998 = vpop.f32.mrf.mxu0
  %v2999 = vadd.f32 %v2950, %v2998
  %3000 = vmatmul.bf16.gmra.mxu0 %v377
  %v3001 = vpop.f32.mrf.mxu0
  %v3002 = vadd.f32 %v2953, %v3001
  %v3003 = vpop.f32.mrf.mxu0
  %v3004 = vadd.f32 %v2955, %v3003
  %3005 = vdwg.mxu0
  %3006 = vmatpush.bf16.msra.mxu0 0
  %3007 = vmatpush.bf16.msra.mxu0 0
  %3008 = vmatpush.bf16.msra.mxu0 0
  %3009 = vmatpush.bf16.msra.mxu0 0
  %3010 = vmatpush.bf16.msra.mxu0 0
  %3011 = vmatpush.bf16.msra.mxu0 %v1577
  %3012 = vmatpush.bf16.msra.mxu0 %v1292
  %3013 = vmatpush.bf16.msra.mxu0 %v1280
  %3014 = vmatmul.bf16.gmra.mxu0 %v1525
  %v3015 = vpop.f32.mrf.mxu0
  %v3016 = vadd.f32 %v2967, %v3015
  %v3017 = vpop.f32.mrf.mxu0
  %v3018 = vadd.f32 %v2969, %v3017
  %3019 = vmatmul.bf16.gmra.mxu0 %v1528
  %v3020 = vpop.f32.mrf.mxu0
  %v3021 = vadd.f32 %v2972, %v3020
  %v3022 = vpop.f32.mrf.mxu0
  %v3023 = vadd.f32 %v2974, %v3022
  %3024 = vmatmul.bf16.gmra.mxu0 %v1531
  %v3025 = vpop.f32.mrf.mxu0
  %v3026 = vadd.f32 %v2977, %v3025
  %v3027 = vpop.f32.mrf.mxu0
  %v3028 = vadd.f32 %v2979, %v3027
  %3029 = vmatmul.bf16.gmra.mxu0 %v1534
  %v3030 = vpop.f32.mrf.mxu0
  %v3031 = vadd.f32 %v2982, %v3030
  %v3032 = vpop.f32.mrf.mxu0
  %v3033 = vadd.f32 %v2984, %v3032
  %3034 = vmatmul.bf16.gmra.mxu0 %v1537
  %v3035 = vpop.f32.mrf.mxu0
  %v3036 = vadd.f32 %v2987, %v3035
  %v3037 = vpop.f32.mrf.mxu0
  %v3038 = vadd.f32 %v2989, %v3037
  %3039 = vmatmul.bf16.gmra.mxu0 %v1540
  %v3040 = vpop.f32.mrf.mxu0
  %v3041 = vadd.f32 %v2992, %v3040
  %v3042 = vpop.f32.mrf.mxu0
  %v3043 = vadd.f32 %v2994, %v3042
  %3044 = vmatmul.bf16.gmra.mxu0 %v1543
  %v3045 = vpop.f32.mrf.mxu0
  %v3046 = vadd.f32 %v2997, %v3045
  %v3047 = vpop.f32.mrf.mxu0
  %v3048 = vadd.f32 %v2999, %v3047
  %3049 = vmatmul.bf16.gmra.mxu0 %v1546
  %v3050 = vpop.f32.mrf.mxu0
  %v3051 = vadd.f32 %v3002, %v3050
  %v3052 = vpop.f32.mrf.mxu0
  %v3053 = vadd.f32 %v3004, %v3052
  %3054 = vdwg.mxu0
  %3055 = vmatpush.bf16.msra.mxu0 %v1173
  %3056 = vmatpush.bf16.msra.mxu0 %v1161
  %3057 = vmatpush.bf16.msra.mxu0 %v1149
  %3058 = vmatpush.bf16.msra.mxu0 %v1137
  %3059 = vmatpush.bf16.msra.mxu0 %v1125
  %3060 = vmatpush.bf16.msra.mxu0 %v1113
  %3061 = vmatpush.bf16.msra.mxu0 %v1101
  %3062 = vmatpush.bf16.msra.mxu0 %v1089
  %3063 = vmatmul.bf16.gmra.mxu0 %v355
  %v3064 = vpop.f32.mrf.mxu0
  %v3065 = vadd.f32 0.0, %v3064
  %v3066 = vpop.f32.mrf.mxu0
  %v3067 = vadd.f32 0.0, %v3066
  %3068 = vmatmul.bf16.gmra.mxu0 %v358
  %v3069 = vpop.f32.mrf.mxu0
  %v3070 = vadd.f32 0.0, %v3069
  %v3071 = vpop.f32.mrf.mxu0
  %v3072 = vadd.f32 0.0, %v3071
  %3073 = vmatmul.bf16.gmra.mxu0 %v361
  %v3074 = vpop.f32.mrf.mxu0
  %v3075 = vadd.f32 0.0, %v3074
  %v3076 = vpop.f32.mrf.mxu0
  %v3077 = vadd.f32 0.0, %v3076
  %3078 = vmatmul.bf16.gmra.mxu0 %v364
  %v3079 = vpop.f32.mrf.mxu0
  %v3080 = vadd.f32 0.0, %v3079
  %v3081 = vpop.f32.mrf.mxu0
  %v3082 = vadd.f32 0.0, %v3081
  %3083 = vmatmul.bf16.gmra.mxu0 %v367
  %v3084 = vpop.f32.mrf.mxu0
  %v3085 = vadd.f32 0.0, %v3084
  %v3086 = vpop.f32.mrf.mxu0
  %v3087 = vadd.f32 0.0, %v3086
  %3088 = vmatmul.bf16.gmra.mxu0 %v370
  %v3089 = vpop.f32.mrf.mxu0
  %v3090 = vadd.f32 0.0, %v3089
  %v3091 = vpop.f32.mrf.mxu0
  %v3092 = vadd.f32 0.0, %v3091
  %3093 = vmatmul.bf16.gmra.mxu0 %v373
  %v3094 = vpop.f32.mrf.mxu0
  %v3095 = vadd.f32 0.0, %v3094
  %v3096 = vpop.f32.mrf.mxu0
  %v3097 = vadd.f32 0.0, %v3096
  %3098 = vmatmul.bf16.gmra.mxu0 %v376
  %v3099 = vpop.f32.mrf.mxu0
  %v3100 = vadd.f32 0.0, %v3099
  %v3101 = vpop.f32.mrf.mxu0
  %v3102 = vadd.f32 0.0, %v3101
  %3103 = vdwg.mxu0
  %3104 = vmatpush.bf16.msra.mxu0 %v1269
  %3105 = vmatpush.bf16.msra.mxu0 %v1257
  %3106 = vmatpush.bf16.msra.mxu0 %v1245
  %3107 = vmatpush.bf16.msra.mxu0 %v1233
  %3108 = vmatpush.bf16.msra.mxu0 %v1221
  %3109 = vmatpush.bf16.msra.mxu0 %v1209
  %3110 = vmatpush.bf16.msra.mxu0 %v1197
  %3111 = vmatpush.bf16.msra.mxu0 %v1185
  %3112 = vmatmul.bf16.gmra.mxu0 %v356
  %v3113 = vpop.f32.mrf.mxu0
  %v3114 = vadd.f32 %v3065, %v3113
  %v3115 = vpop.f32.mrf.mxu0
  %v3116 = vadd.f32 %v3067, %v3115
  %3117 = vmatmul.bf16.gmra.mxu0 %v359
  %v3118 = vpop.f32.mrf.mxu0
  %v3119 = vadd.f32 %v3070, %v3118
  %v3120 = vpop.f32.mrf.mxu0
  %v3121 = vadd.f32 %v3072, %v3120
  %3122 = vmatmul.bf16.gmra.mxu0 %v362
  %v3123 = vpop.f32.mrf.mxu0
  %v3124 = vadd.f32 %v3075, %v3123
  %v3125 = vpop.f32.mrf.mxu0
  %v3126 = vadd.f32 %v3077, %v3125
  %3127 = vmatmul.bf16.gmra.mxu0 %v365
  %v3128 = vpop.f32.mrf.mxu0
  %v3129 = vadd.f32 %v3080, %v3128
  %v3130 = vpop.f32.mrf.mxu0
  %v3131 = vadd.f32 %v3082, %v3130
  %3132 = vmatmul.bf16.gmra.mxu0 %v368
  %v3133 = vpop.f32.mrf.mxu0
  %v3134 = vadd.f32 %v3085, %v3133
  %v3135 = vpop.f32.mrf.mxu0
  %v3136 = vadd.f32 %v3087, %v3135
  %3137 = vmatmul.bf16.gmra.mxu0 %v371
  %v3138 = vpop.f32.mrf.mxu0
  %v3139 = vadd.f32 %v3090, %v3138
  %v3140 = vpop.f32.mrf.mxu0
  %v3141 = vadd.f32 %v3092, %v3140
  %3142 = vmatmul.bf16.gmra.mxu0 %v374
  %v3143 = vpop.f32.mrf.mxu0
  %v3144 = vadd.f32 %v3095, %v3143
  %v3145 = vpop.f32.mrf.mxu0
  %v3146 = vadd.f32 %v3097, %v3145
  %3147 = vmatmul.bf16.gmra.mxu0 %v377
  %v3148 = vpop.f32.mrf.mxu0
  %v3149 = vadd.f32 %v3100, %v3148
  %v3150 = vpop.f32.mrf.mxu0
  %v3151 = vadd.f32 %v3102, %v3150
  %3152 = vdwg.mxu0
  %3153 = vmatpush.bf16.msra.mxu0 0
  %3154 = vmatpush.bf16.msra.mxu0 0
  %3155 = vmatpush.bf16.msra.mxu0 0
  %3156 = vmatpush.bf16.msra.mxu0 0
  %3157 = vmatpush.bf16.msra.mxu0 0
  %3158 = vmatpush.bf16.msra.mxu0 %v1580
  %3159 = vmatpush.bf16.msra.mxu0 %v1293
  %3160 = vmatpush.bf16.msra.mxu0 %v1281
  %3161 = vmatmul.bf16.gmra.mxu0 %v1525
  %v3162 = vpop.f32.mrf.mxu0
  %v3163 = vadd.f32 %v3114, %v3162
  %v3164 = vpop.f32.mrf.mxu0
  %v3165 = vadd.f32 %v3116, %v3164
  %3166 = vmatmul.bf16.gmra.mxu0 %v1528
  %v3167 = vpop.f32.mrf.mxu0
  %v3168 = vadd.f32 %v3119, %v3167
  %v3169 = vpop.f32.mrf.mxu0
  %v3170 = vadd.f32 %v3121, %v3169
  %3171 = vmatmul.bf16.gmra.mxu0 %v1531
  %v3172 = vpop.f32.mrf.mxu0
  %v3173 = vadd.f32 %v3124, %v3172
  %v3174 = vpop.f32.mrf.mxu0
  %v3175 = vadd.f32 %v3126, %v3174
  %3176 = vmatmul.bf16.gmra.mxu0 %v1534
  %v3177 = vpop.f32.mrf.mxu0
  %v3178 = vadd.f32 %v3129, %v3177
  %v3179 = vpop.f32.mrf.mxu0
  %v3180 = vadd.f32 %v3131, %v3179
  %3181 = vmatmul.bf16.gmra.mxu0 %v1537
  %v3182 = vpop.f32.mrf.mxu0
  %v3183 = vadd.f32 %v3134, %v3182
  %v3184 = vpop.f32.mrf.mxu0
  %v3185 = vadd.f32 %v3136, %v3184
  %3186 = vmatmul.bf16.gmra.mxu0 %v1540
  %v3187 = vpop.f32.mrf.mxu0
  %v3188 = vadd.f32 %v3139, %v3187
  %v3189 = vpop.f32.mrf.mxu0
  %v3190 = vadd.f32 %v3141, %v3189
  %3191 = vmatmul.bf16.gmra.mxu0 %v1543
  %v3192 = vpop.f32.mrf.mxu0
  %v3193 = vadd.f32 %v3144, %v3192
  %v3194 = vpop.f32.mrf.mxu0
  %v3195 = vadd.f32 %v3146, %v3194
  %3196 = vmatmul.bf16.gmra.mxu0 %v1546
  %v3197 = vpop.f32.mrf.mxu0
  %v3198 = vadd.f32 %v3149, %v3197
  %v3199 = vpop.f32.mrf.mxu0
  %v3200 = vadd.f32 %v3151, %v3199
  %3201 = vdwg.mxu0
  %3202 = vmatpush.bf16.msra.mxu0 %v1174
  %3203 = vmatpush.bf16.msra.mxu0 %v1162
  %3204 = vmatpush.bf16.msra.mxu0 %v1150
  %3205 = vmatpush.bf16.msra.mxu0 %v1138
  %3206 = vmatpush.bf16.msra.mxu0 %v1126
  %3207 = vmatpush.bf16.msra.mxu0 %v1114
  %3208 = vmatpush.bf16.msra.mxu0 %v1102
  %3209 = vmatpush.bf16.msra.mxu0 %v1090
  %3210 = vmatmul.bf16.gmra.mxu0 %v355
  %v3211 = vpop.f32.mrf.mxu0
  %v3212 = vadd.f32 0.0, %v3211
  %v3213 = vpop.f32.mrf.mxu0
  %v3214 = vadd.f32 0.0, %v3213
  %3215 = vmatmul.bf16.gmra.mxu0 %v358
  %v3216 = vpop.f32.mrf.mxu0
  %v3217 = vadd.f32 0.0, %v3216
  %v3218 = vpop.f32.mrf.mxu0
  %v3219 = vadd.f32 0.0, %v3218
  %3220 = vmatmul.bf16.gmra.mxu0 %v361
  %v3221 = vpop.f32.mrf.mxu0
  %v3222 = vadd.f32 0.0, %v3221
  %v3223 = vpop.f32.mrf.mxu0
  %v3224 = vadd.f32 0.0, %v3223
  %3225 = vmatmul.bf16.gmra.mxu0 %v364
  %v3226 = vpop.f32.mrf.mxu0
  %v3227 = vadd.f32 0.0, %v3226
  %v3228 = vpop.f32.mrf.mxu0
  %v3229 = vadd.f32 0.0, %v3228
  %3230 = vmatmul.bf16.gmra.mxu0 %v367
  %v3231 = vpop.f32.mrf.mxu0
  %v3232 = vadd.f32 0.0, %v3231
  %v3233 = vpop.f32.mrf.mxu0
  %v3234 = vadd.f32 0.0, %v3233
  %3235 = vmatmul.bf16.gmra.mxu0 %v370
  %v3236 = vpop.f32.mrf.mxu0
  %v3237 = vadd.f32 0.0, %v3236
  %v3238 = vpop.f32.mrf.mxu0
  %v3239 = vadd.f32 0.0, %v3238
  %3240 = vmatmul.bf16.gmra.mxu0 %v373
  %v3241 = vpop.f32.mrf.mxu0
  %v3242 = vadd.f32 0.0, %v3241
  %v3243 = vpop.f32.mrf.mxu0
  %v3244 = vadd.f32 0.0, %v3243
  %3245 = vmatmul.bf16.gmra.mxu0 %v376
  %v3246 = vpop.f32.mrf.mxu0
  %v3247 = vadd.f32 0.0, %v3246
  %v3248 = vpop.f32.mrf.mxu0
  %v3249 = vadd.f32 0.0, %v3248
  %3250 = vdwg.mxu0
  %3251 = vmatpush.bf16.msra.mxu0 %v1270
  %3252 = vmatpush.bf16.msra.mxu0 %v1258
  %3253 = vmatpush.bf16.msra.mxu0 %v1246
  %3254 = vmatpush.bf16.msra.mxu0 %v1234
  %3255 = vmatpush.bf16.msra.mxu0 %v1222
  %3256 = vmatpush.bf16.msra.mxu0 %v1210
  %3257 = vmatpush.bf16.msra.mxu0 %v1198
  %3258 = vmatpush.bf16.msra.mxu0 %v1186
  %3259 = vmatmul.bf16.gmra.mxu0 %v356
  %v3260 = vpop.f32.mrf.mxu0
  %v3261 = vadd.f32 %v3212, %v3260
  %v3262 = vpop.f32.mrf.mxu0
  %v3263 = vadd.f32 %v3214, %v3262
  %3264 = vmatmul.bf16.gmra.mxu0 %v359
  %v3265 = vpop.f32.mrf.mxu0
  %v3266 = vadd.f32 %v3217, %v3265
  %v3267 = vpop.f32.mrf.mxu0
  %v3268 = vadd.f32 %v3219, %v3267
  %3269 = vmatmul.bf16.gmra.mxu0 %v362
  %v3270 = vpop.f32.mrf.mxu0
  %v3271 = vadd.f32 %v3222, %v3270
  %v3272 = vpop.f32.mrf.mxu0
  %v3273 = vadd.f32 %v3224, %v3272
  %3274 = vmatmul.bf16.gmra.mxu0 %v365
  %v3275 = vpop.f32.mrf.mxu0
  %v3276 = vadd.f32 %v3227, %v3275
  %v3277 = vpop.f32.mrf.mxu0
  %v3278 = vadd.f32 %v3229, %v3277
  %3279 = vmatmul.bf16.gmra.mxu0 %v368
  %v3280 = vpop.f32.mrf.mxu0
  %v3281 = vadd.f32 %v3232, %v3280
  %v3282 = vpop.f32.mrf.mxu0
  %v3283 = vadd.f32 %v3234, %v3282
  %3284 = vmatmul.bf16.gmra.mxu0 %v371
  %v3285 = vpop.f32.mrf.mxu0
  %v3286 = vadd.f32 %v3237, %v3285
  %v3287 = vpop.f32.mrf.mxu0
  %v3288 = vadd.f32 %v3239, %v3287
  %3289 = vmatmul.bf16.gmra.mxu0 %v374
  %v3290 = vpop.f32.mrf.mxu0
  %v3291 = vadd.f32 %v3242, %v3290
  %v3292 = vpop.f32.mrf.mxu0
  %v3293 = vadd.f32 %v3244, %v3292
  %3294 = vmatmul.bf16.gmra.mxu0 %v377
  %v3295 = vpop.f32.mrf.mxu0
  %v3296 = vadd.f32 %v3247, %v3295
  %v3297 = vpop.f32.mrf.mxu0
  %v3298 = vadd.f32 %v3249, %v3297
  %3299 = vdwg.mxu0
  %3300 = vmatpush.bf16.msra.mxu0 0
  %3301 = vmatpush.bf16.msra.mxu0 0
  %3302 = vmatpush.bf16.msra.mxu0 0
  %3303 = vmatpush.bf16.msra.mxu0 0
  %3304 = vmatpush.bf16.msra.mxu0 0
  %3305 = vmatpush.bf16.msra.mxu0 %v1583
  %3306 = vmatpush.bf16.msra.mxu0 %v1294
  %3307 = vmatpush.bf16.msra.mxu0 %v1282
  %3308 = vmatmul.bf16.gmra.mxu0 %v1525
  %v3309 = vpop.f32.mrf.mxu0
  %v3310 = vadd.f32 %v3261, %v3309
  %v3311 = vpop.f32.mrf.mxu0
  %v3312 = vadd.f32 %v3263, %v3311
  %3313 = vmatmul.bf16.gmra.mxu0 %v1528
  %v3314 = vpop.f32.mrf.mxu0
  %v3315 = vadd.f32 %v3266, %v3314
  %v3316 = vpop.f32.mrf.mxu0
  %v3317 = vadd.f32 %v3268, %v3316
  %3318 = vmatmul.bf16.gmra.mxu0 %v1531
  %v3319 = vpop.f32.mrf.mxu0
  %v3320 = vadd.f32 %v3271, %v3319
  %v3321 = vpop.f32.mrf.mxu0
  %v3322 = vadd.f32 %v3273, %v3321
  %3323 = vmatmul.bf16.gmra.mxu0 %v1534
  %v3324 = vpop.f32.mrf.mxu0
  %v3325 = vadd.f32 %v3276, %v3324
  %v3326 = vpop.f32.mrf.mxu0
  %v3327 = vadd.f32 %v3278, %v3326
  %3328 = vmatmul.bf16.gmra.mxu0 %v1537
  %v3329 = vpop.f32.mrf.mxu0
  %v3330 = vadd.f32 %v3281, %v3329
  %v3331 = vpop.f32.mrf.mxu0
  %v3332 = vadd.f32 %v3283, %v3331
  %3333 = vmatmul.bf16.gmra.mxu0 %v1540
  %v3334 = vpop.f32.mrf.mxu0
  %v3335 = vadd.f32 %v3286, %v3334
  %v3336 = vpop.f32.mrf.mxu0
  %v3337 = vadd.f32 %v3288, %v3336
  %3338 = vmatmul.bf16.gmra.mxu0 %v1543
  %v3339 = vpop.f32.mrf.mxu0
  %v3340 = vadd.f32 %v3291, %v3339
  %v3341 = vpop.f32.mrf.mxu0
  %v3342 = vadd.f32 %v3293, %v3341
  %3343 = vmatmul.bf16.gmra.mxu0 %v1546
  %v3344 = vpop.f32.mrf.mxu0
  %v3345 = vadd.f32 %v3296, %v3344
  %v3346 = vpop.f32.mrf.mxu0
  %v3347 = vadd.f32 %v3298, %v3346
  %3348 = vdwg.mxu0
  %v3349 = vld [vmem:[%s2] sm:$0x7]
  %vm3366 = vcmask 1046528
  %v3367 = vrot.slane %v1840, 1
  %v3368 = vrot.slane %v1842, 1
  %v3369 = vsel %vm3366, %v3367, %v3368
  %v3370 = vrot.slane %v1845, 1
  %v3371 = vrot.slane %v1847, 1
  %v3372 = vsel %vm3366, %v3370, %v3371
  %v3373 = vrot.slane %v1850, 1
  %v3374 = vrot.slane %v1852, 1
  %v3375 = vsel %vm3366, %v3373, %v3374
  %v3376 = vrot.slane %v1855, 1
  %v3377 = vrot.slane %v1857, 1
  %v3378 = vsel %vm3366, %v3376, %v3377
  %v3379 = vrot.slane %v1860, 1
  %v3380 = vrot.slane %v1862, 1
  %v3381 = vsel %vm3366, %v3379, %v3380
  %v3382 = vrot.slane %v1865, 1
  %v3383 = vrot.slane %v1867, 1
  %v3384 = vsel %vm3366, %v3382, %v3383
  %v3385 = vrot.slane %v1870, 1
  %v3386 = vrot.slane %v1872, 1
  %v3387 = vsel %vm3366, %v3385, %v3386
  %v3388 = vrot.slane %v1875, 1
  %v3389 = vrot.slane %v1877, 1
  %v3390 = vsel %vm3366, %v3388, %v3389
  %v3407 = vadd.f32 %v1693, %v3369
  %v3408 = vadd.f32 %v1695, %v3368
  %v3409 = vadd.f32 %v1698, %v3372
  %v3410 = vadd.f32 %v1700, %v3371
  %v3411 = vadd.f32 %v1703, %v3375
  %v3412 = vadd.f32 %v1705, %v3374
  %v3413 = vadd.f32 %v1708, %v3378
  %v3414 = vadd.f32 %v1710, %v3377
  %v3415 = vadd.f32 %v1713, %v3381
  %v3416 = vadd.f32 %v1715, %v3380
  %v3417 = vadd.f32 %v1718, %v3384
  %v3418 = vadd.f32 %v1720, %v3383
  %v3419 = vadd.f32 %v1723, %v3387
  %v3420 = vadd.f32 %v1725, %v3386
  %v3421 = vadd.f32 %v1728, %v3390
  %v3422 = vadd.f32 %v1730, %v3389
  %v3439 = vrot.slane %v1987, 2
  %v3440 = vrot.slane %v1989, 2
  %v3441 = vsel %vm1548, %v3439, %v3440
  %v3442 = vrot.slane %v1992, 2
  %v3443 = vrot.slane %v1994, 2
  %v3444 = vsel %vm1548, %v3442, %v3443
  %v3445 = vrot.slane %v1997, 2
  %v3446 = vrot.slane %v1999, 2
  %v3447 = vsel %vm1548, %v3445, %v3446
  %v3448 = vrot.slane %v2002, 2
  %v3449 = vrot.slane %v2004, 2
  %v3450 = vsel %vm1548, %v3448, %v3449
  %v3451 = vrot.slane %v2007, 2
  %v3452 = vrot.slane %v2009, 2
  %v3453 = vsel %vm1548, %v3451, %v3452
  %v3454 = vrot.slane %v2012, 2
  %v3455 = vrot.slane %v2014, 2
  %v3456 = vsel %vm1548, %v3454, %v3455
  %v3457 = vrot.slane %v2017, 2
  %v3458 = vrot.slane %v2019, 2
  %v3459 = vsel %vm1548, %v3457, %v3458
  %v3460 = vrot.slane %v2022, 2
  %v3461 = vrot.slane %v2024, 2
  %v3462 = vsel %vm1548, %v3460, %v3461
  %v3479 = vadd.f32 %v3407, %v3441
  %v3480 = vadd.f32 %v3408, %v3440
  %v3481 = vadd.f32 %v3409, %v3444
  %v3482 = vadd.f32 %v3410, %v3443
  %v3483 = vadd.f32 %v3411, %v3447
  %v3484 = vadd.f32 %v3412, %v3446
  %v3485 = vadd.f32 %v3413, %v3450
  %v3486 = vadd.f32 %v3414, %v3449
  %v3487 = vadd.f32 %v3415, %v3453
  %v3488 = vadd.f32 %v3416, %v3452
  %v3489 = vadd.f32 %v3417, %v3456
  %v3490 = vadd.f32 %v3418, %v3455
  %v3491 = vadd.f32 %v3419, %v3459
  %v3492 = vadd.f32 %v3420, %v3458
  %v3493 = vadd.f32 %v3421, %v3462
  %v3494 = vadd.f32 %v3422, %v3461
  %v3496 = vperm.slane %v3349, 0
  %v3498 = vadd.f32 %v3479, %v3496
  %v3499 = vadd.f32 %v3480, %v3496
  %v3500 = vadd.f32 %v3481, %v3496
  %v3501 = vadd.f32 %v3482, %v3496
  %v3502 = vadd.f32 %v3483, %v3496
  %v3503 = vadd.f32 %v3484, %v3496
  %v3504 = vadd.f32 %v3485, %v3496
  %v3505 = vadd.f32 %v3486, %v3496
  %v3506 = vadd.f32 %v3487, %v3496
  %v3507 = vadd.f32 %v3488, %v3496
  %v3508 = vadd.f32 %v3489, %v3496
  %v3509 = vadd.f32 %v3490, %v3496
  %v3510 = vadd.f32 %v3491, %v3496
  %v3511 = vadd.f32 %v3492, %v3496
  %v3512 = vadd.f32 %v3493, %v3496
  %v3513 = vadd.f32 %v3494, %v3496
  %v3514 = vmax.f32 %v3498, 0.0
  %v3515 = vmax.f32 %v3499, 0.0
  %v3516 = vmax.f32 %v3500, 0.0
  %v3517 = vmax.f32 %v3501, 0.0
  %v3518 = vmax.f32 %v3502, 0.0
  %v3519 = vmax.f32 %v3503, 0.0
  %v3520 = vmax.f32 %v3504, 0.0
  %v3521 = vmax.f32 %v3505, 0.0
  %v3522 = vmax.f32 %v3506, 0.0
  %v3523 = vmax.f32 %v3507, 0.0
  %v3524 = vmax.f32 %v3508, 0.0
  %v3525 = vmax.f32 %v3509, 0.0
  %v3526 = vmax.f32 %v3510, 0.0
  %v3527 = vmax.f32 %v3511, 0.0
  %v3528 = vmax.f32 %v3512, 0.0
  %v3529 = vmax.f32 %v3513, 0.0
  %v3530 = vsel %vm1548, %v3515, -inf
  %v3531 = vmax.f32 %v3514, %v3530
  %v3532 = vrot.slane %v3531, 4
  %v3533 = vmax.f32 %v3531, %v3532
  %v3534 = vrot.slane %v3533, 2
  %v3535 = vmax.f32 %v3533, %v3534
  %v3536 = vrot.slane %v3535, 1
  %v3537 = vmax.f32 %v3535, %v3536
  %v3538 = vsel %vm1548, %v3517, -inf
  %v3539 = vmax.f32 %v3516, %v3538
  %v3540 = vrot.slane %v3539, 4
  %v3541 = vmax.f32 %v3539, %v3540
  %v3542 = vrot.slane %v3541, 2
  %v3543 = vmax.f32 %v3541, %v3542
  %v3544 = vrot.slane %v3543, 1
  %v3545 = vmax.f32 %v3543, %v3544
  %v3546 = vsel %vm1548, %v3519, -inf
  %v3547 = vmax.f32 %v3518, %v3546
  %v3548 = vrot.slane %v3547, 4
  %v3549 = vmax.f32 %v3547, %v3548
  %v3550 = vrot.slane %v3549, 2
  %v3551 = vmax.f32 %v3549, %v3550
  %v3552 = vrot.slane %v3551, 1
  %v3553 = vmax.f32 %v3551, %v3552
  %v3554 = vsel %vm1548, %v3521, -inf
  %v3555 = vmax.f32 %v3520, %v3554
  %v3556 = vrot.slane %v3555, 4
  %v3557 = vmax.f32 %v3555, %v3556
  %v3558 = vrot.slane %v3557, 2
  %v3559 = vmax.f32 %v3557, %v3558
  %v3560 = vrot.slane %v3559, 1
  %v3561 = vmax.f32 %v3559, %v3560
  %v3562 = vsel %vm1548, %v3523, -inf
  %v3563 = vmax.f32 %v3522, %v3562
  %v3564 = vrot.slane %v3563, 4
  %v3565 = vmax.f32 %v3563, %v3564
  %v3566 = vrot.slane %v3565, 2
  %v3567 = vmax.f32 %v3565, %v3566
  %v3568 = vrot.slane %v3567, 1
  %v3569 = vmax.f32 %v3567, %v3568
  %v3570 = vsel %vm1548, %v3525, -inf
  %v3571 = vmax.f32 %v3524, %v3570
  %v3572 = vrot.slane %v3571, 4
  %v3573 = vmax.f32 %v3571, %v3572
  %v3574 = vrot.slane %v3573, 2
  %v3575 = vmax.f32 %v3573, %v3574
  %v3576 = vrot.slane %v3575, 1
  %v3577 = vmax.f32 %v3575, %v3576
  %v3578 = vsel %vm1548, %v3527, -inf
  %v3579 = vmax.f32 %v3526, %v3578
  %v3580 = vrot.slane %v3579, 4
  %v3581 = vmax.f32 %v3579, %v3580
  %v3582 = vrot.slane %v3581, 2
  %v3583 = vmax.f32 %v3581, %v3582
  %v3584 = vrot.slane %v3583, 1
  %v3585 = vmax.f32 %v3583, %v3584
  %v3586 = vsel %vm1548, %v3529, -inf
  %v3587 = vmax.f32 %v3528, %v3586
  %v3588 = vrot.slane %v3587, 4
  %v3589 = vmax.f32 %v3587, %v3588
  %v3590 = vrot.slane %v3589, 2
  %v3591 = vmax.f32 %v3589, %v3590
  %v3592 = vrot.slane %v3591, 1
  %v3593 = vmax.f32 %v3591, %v3592
  %vm3602 = vcmask 1041409
  %v3603 = vsel %vm3602, %v3545, %v3537
  %vm3604 = vcmask 1042434
  %v3605 = vsel %vm3604, %v3553, %v3603
  %vm3606 = vcmask 1043459
  %v3607 = vsel %vm3606, %v3561, %v3605
  %vm3608 = vcmask 1044484
  %v3609 = vsel %vm3608, %v3569, %v3607
  %vm3610 = vcmask 1045509
  %v3611 = vsel %vm3610, %v3577, %v3609
  %vm3612 = vcmask 1046534
  %v3613 = vsel %vm3612, %v3585, %v3611
  %vm3614 = vcmask 1047559
  %v3615 = vsel %vm3614, %v3593, %v3613
  %3617 = vst [vmem:[%s3] sm:$0xff] %v3615
  %v3634 = vrot.slane %v2281, 1
  %v3635 = vrot.slane %v2283, 1
  %v3636 = vsel %vm3366, %v3634, %v3635
  %v3637 = vrot.slane %v2286, 1
  %v3638 = vrot.slane %v2288, 1
  %v3639 = vsel %vm3366, %v3637, %v3638
  %v3640 = vrot.slane %v2291, 1
  %v3641 = vrot.slane %v2293, 1
  %v3642 = vsel %vm3366, %v3640, %v3641
  %v3643 = vrot.slane %v2296, 1
  %v3644 = vrot.slane %v2298, 1
  %v3645 = vsel %vm3366, %v3643, %v3644
  %v3646 = vrot.slane %v2301, 1
  %v3647 = vrot.slane %v2303, 1
  %v3648 = vsel %vm3366, %v3646, %v3647
  %v3649 = vrot.slane %v2306, 1
  %v3650 = vrot.slane %v2308, 1
  %v3651 = vsel %vm3366, %v3649, %v3650
  %v3652 = vrot.slane %v2311, 1
  %v3653 = vrot.slane %v2313, 1
  %v3654 = vsel %vm3366, %v3652, %v3653
  %v3655 = vrot.slane %v2316, 1
  %v3656 = vrot.slane %v2318, 1
  %v3657 = vsel %vm3366, %v3655, %v3656
  %v3674 = vadd.f32 %v2134, %v3636
  %v3675 = vadd.f32 %v2136, %v3635
  %v3676 = vadd.f32 %v2139, %v3639
  %v3677 = vadd.f32 %v2141, %v3638
  %v3678 = vadd.f32 %v2144, %v3642
  %v3679 = vadd.f32 %v2146, %v3641
  %v3680 = vadd.f32 %v2149, %v3645
  %v3681 = vadd.f32 %v2151, %v3644
  %v3682 = vadd.f32 %v2154, %v3648
  %v3683 = vadd.f32 %v2156, %v3647
  %v3684 = vadd.f32 %v2159, %v3651
  %v3685 = vadd.f32 %v2161, %v3650
  %v3686 = vadd.f32 %v2164, %v3654
  %v3687 = vadd.f32 %v2166, %v3653
  %v3688 = vadd.f32 %v2169, %v3657
  %v3689 = vadd.f32 %v2171, %v3656
  %v3706 = vrot.slane %v2428, 2
  %v3707 = vrot.slane %v2430, 2
  %v3708 = vsel %vm1548, %v3706, %v3707
  %v3709 = vrot.slane %v2433, 2
  %v3710 = vrot.slane %v2435, 2
  %v3711 = vsel %vm1548, %v3709, %v3710
  %v3712 = vrot.slane %v2438, 2
  %v3713 = vrot.slane %v2440, 2
  %v3714 = vsel %vm1548, %v3712, %v3713
  %v3715 = vrot.slane %v2443, 2
  %v3716 = vrot.slane %v2445, 2
  %v3717 = vsel %vm1548, %v3715, %v3716
  %v3718 = vrot.slane %v2448, 2
  %v3719 = vrot.slane %v2450, 2
  %v3720 = vsel %vm1548, %v3718, %v3719
  %v3721 = vrot.slane %v2453, 2
  %v3722 = vrot.slane %v2455, 2
  %v3723 = vsel %vm1548, %v3721, %v3722
  %v3724 = vrot.slane %v2458, 2
  %v3725 = vrot.slane %v2460, 2
  %v3726 = vsel %vm1548, %v3724, %v3725
  %v3727 = vrot.slane %v2463, 2
  %v3728 = vrot.slane %v2465, 2
  %v3729 = vsel %vm1548, %v3727, %v3728
  %v3746 = vadd.f32 %v3674, %v3708
  %v3747 = vadd.f32 %v3675, %v3707
  %v3748 = vadd.f32 %v3676, %v3711
  %v3749 = vadd.f32 %v3677, %v3710
  %v3750 = vadd.f32 %v3678, %v3714
  %v3751 = vadd.f32 %v3679, %v3713
  %v3752 = vadd.f32 %v3680, %v3717
  %v3753 = vadd.f32 %v3681, %v3716
  %v3754 = vadd.f32 %v3682, %v3720
  %v3755 = vadd.f32 %v3683, %v3719
  %v3756 = vadd.f32 %v3684, %v3723
  %v3757 = vadd.f32 %v3685, %v3722
  %v3758 = vadd.f32 %v3686, %v3726
  %v3759 = vadd.f32 %v3687, %v3725
  %v3760 = vadd.f32 %v3688, %v3729
  %v3761 = vadd.f32 %v3689, %v3728
  %vm3778 = vcmask 1044480
  %v3779 = vrot.slane %v2575, 3
  %v3780 = vrot.slane %v2577, 3
  %v3781 = vsel %vm3778, %v3779, %v3780
  %v3782 = vrot.slane %v2580, 3
  %v3783 = vrot.slane %v2582, 3
  %v3784 = vsel %vm3778, %v3782, %v3783
  %v3785 = vrot.slane %v2585, 3
  %v3786 = vrot.slane %v2587, 3
  %v3787 = vsel %vm3778, %v3785, %v3786
  %v3788 = vrot.slane %v2590, 3
  %v3789 = vrot.slane %v2592, 3
  %v3790 = vsel %vm3778, %v3788, %v3789
  %v3791 = vrot.slane %v2595, 3
  %v3792 = vrot.slane %v2597, 3
  %v3793 = vsel %vm3778, %v3791, %v3792
  %v3794 = vrot.slane %v2600, 3
  %v3795 = vrot.slane %v2602, 3
  %v3796 = vsel %vm3778, %v3794, %v3795
  %v3797 = vrot.slane %v2605, 3
  %v3798 = vrot.slane %v2607, 3
  %v3799 = vsel %vm3778, %v3797, %v3798
  %v3800 = vrot.slane %v2610, 3
  %v3801 = vrot.slane %v2612, 3
  %v3802 = vsel %vm3778, %v3800, %v3801
  %v3819 = vadd.f32 %v3746, %v3781
  %v3820 = vadd.f32 %v3747, %v3780
  %v3821 = vadd.f32 %v3748, %v3784
  %v3822 = vadd.f32 %v3749, %v3783
  %v3823 = vadd.f32 %v3750, %v3787
  %v3824 = vadd.f32 %v3751, %v3786
  %v3825 = vadd.f32 %v3752, %v3790
  %v3826 = vadd.f32 %v3753, %v3789
  %v3827 = vadd.f32 %v3754, %v3793
  %v3828 = vadd.f32 %v3755, %v3792
  %v3829 = vadd.f32 %v3756, %v3796
  %v3830 = vadd.f32 %v3757, %v3795
  %v3831 = vadd.f32 %v3758, %v3799
  %v3832 = vadd.f32 %v3759, %v3798
  %v3833 = vadd.f32 %v3760, %v3802
  %v3834 = vadd.f32 %v3761, %v3801
  %v3835 = vrot.slane %v3349, 1
  %v3836 = vperm.slane %v3835, 0
  %v3838 = vadd.f32 %v3819, %v3836
  %v3839 = vadd.f32 %v3820, %v3836
  %v3840 = vadd.f32 %v3821, %v3836
  %v3841 = vadd.f32 %v3822, %v3836
  %v3842 = vadd.f32 %v3823, %v3836
  %v3843 = vadd.f32 %v3824, %v3836
  %v3844 = vadd.f32 %v3825, %v3836
  %v3845 = vadd.f32 %v3826, %v3836
  %v3846 = vadd.f32 %v3827, %v3836
  %v3847 = vadd.f32 %v3828, %v3836
  %v3848 = vadd.f32 %v3829, %v3836
  %v3849 = vadd.f32 %v3830, %v3836
  %v3850 = vadd.f32 %v3831, %v3836
  %v3851 = vadd.f32 %v3832, %v3836
  %v3852 = vadd.f32 %v3833, %v3836
  %v3853 = vadd.f32 %v3834, %v3836
  %v3854 = vmax.f32 %v3838, 0.0
  %v3855 = vmax.f32 %v3839, 0.0
  %v3856 = vmax.f32 %v3840, 0.0
  %v3857 = vmax.f32 %v3841, 0.0
  %v3858 = vmax.f32 %v3842, 0.0
  %v3859 = vmax.f32 %v3843, 0.0
  %v3860 = vmax.f32 %v3844, 0.0
  %v3861 = vmax.f32 %v3845, 0.0
  %v3862 = vmax.f32 %v3846, 0.0
  %v3863 = vmax.f32 %v3847, 0.0
  %v3864 = vmax.f32 %v3848, 0.0
  %v3865 = vmax.f32 %v3849, 0.0
  %v3866 = vmax.f32 %v3850, 0.0
  %v3867 = vmax.f32 %v3851, 0.0
  %v3868 = vmax.f32 %v3852, 0.0
  %v3869 = vmax.f32 %v3853, 0.0
  %v3870 = vsel %vm3778, %v3855, -inf
  %v3871 = vmax.f32 %v3854, %v3870
  %v3872 = vrot.slane %v3871, 4
  %v3873 = vmax.f32 %v3871, %v3872
  %v3874 = vrot.slane %v3873, 2
  %v3875 = vmax.f32 %v3873, %v3874
  %v3876 = vrot.slane %v3875, 1
  %v3877 = vmax.f32 %v3875, %v3876
  %v3878 = vsel %vm3778, %v3857, -inf
  %v3879 = vmax.f32 %v3856, %v3878
  %v3880 = vrot.slane %v3879, 4
  %v3881 = vmax.f32 %v3879, %v3880
  %v3882 = vrot.slane %v3881, 2
  %v3883 = vmax.f32 %v3881, %v3882
  %v3884 = vrot.slane %v3883, 1
  %v3885 = vmax.f32 %v3883, %v3884
  %v3886 = vsel %vm3778, %v3859, -inf
  %v3887 = vmax.f32 %v3858, %v3886
  %v3888 = vrot.slane %v3887, 4
  %v3889 = vmax.f32 %v3887, %v3888
  %v3890 = vrot.slane %v3889, 2
  %v3891 = vmax.f32 %v3889, %v3890
  %v3892 = vrot.slane %v3891, 1
  %v3893 = vmax.f32 %v3891, %v3892
  %v3894 = vsel %vm3778, %v3861, -inf
  %v3895 = vmax.f32 %v3860, %v3894
  %v3896 = vrot.slane %v3895, 4
  %v3897 = vmax.f32 %v3895, %v3896
  %v3898 = vrot.slane %v3897, 2
  %v3899 = vmax.f32 %v3897, %v3898
  %v3900 = vrot.slane %v3899, 1
  %v3901 = vmax.f32 %v3899, %v3900
  %v3902 = vsel %vm3778, %v3863, -inf
  %v3903 = vmax.f32 %v3862, %v3902
  %v3904 = vrot.slane %v3903, 4
  %v3905 = vmax.f32 %v3903, %v3904
  %v3906 = vrot.slane %v3905, 2
  %v3907 = vmax.f32 %v3905, %v3906
  %v3908 = vrot.slane %v3907, 1
  %v3909 = vmax.f32 %v3907, %v3908
  %v3910 = vsel %vm3778, %v3865, -inf
  %v3911 = vmax.f32 %v3864, %v3910
  %v3912 = vrot.slane %v3911, 4
  %v3913 = vmax.f32 %v3911, %v3912
  %v3914 = vrot.slane %v3913, 2
  %v3915 = vmax.f32 %v3913, %v3914
  %v3916 = vrot.slane %v3915, 1
  %v3917 = vmax.f32 %v3915, %v3916
  %v3918 = vsel %vm3778, %v3867, -inf
  %v3919 = vmax.f32 %v3866, %v3918
  %v3920 = vrot.slane %v3919, 4
  %v3921 = vmax.f32 %v3919, %v3920
  %v3922 = vrot.slane %v3921, 2
  %v3923 = vmax.f32 %v3921, %v3922
  %v3924 = vrot.slane %v3923, 1
  %v3925 = vmax.f32 %v3923, %v3924
  %v3926 = vsel %vm3778, %v3869, -inf
  %v3927 = vmax.f32 %v3868, %v3926
  %v3928 = vrot.slane %v3927, 4
  %v3929 = vmax.f32 %v3927, %v3928
  %v3930 = vrot.slane %v3929, 2
  %v3931 = vmax.f32 %v3929, %v3930
  %v3932 = vrot.slane %v3931, 1
  %v3933 = vmax.f32 %v3931, %v3932
  %v3942 = vsel %vm3602, %v3885, %v3877
  %v3943 = vsel %vm3604, %v3893, %v3942
  %v3944 = vsel %vm3606, %v3901, %v3943
  %v3945 = vsel %vm3608, %v3909, %v3944
  %v3946 = vsel %vm3610, %v3917, %v3945
  %v3947 = vsel %vm3612, %v3925, %v3946
  %v3948 = vsel %vm3614, %v3933, %v3947
  %3950 = vst [vmem:[%s3 + $0x8] sm:$0xff] %v3948
  %v3967 = vrot.slane %v2869, 1
  %v3968 = vrot.slane %v2871, 1
  %v3969 = vsel %vm3366, %v3967, %v3968
  %v3970 = vrot.slane %v2874, 1
  %v3971 = vrot.slane %v2876, 1
  %v3972 = vsel %vm3366, %v3970, %v3971
  %v3973 = vrot.slane %v2879, 1
  %v3974 = vrot.slane %v2881, 1
  %v3975 = vsel %vm3366, %v3973, %v3974
  %v3976 = vrot.slane %v2884, 1
  %v3977 = vrot.slane %v2886, 1
  %v3978 = vsel %vm3366, %v3976, %v3977
  %v3979 = vrot.slane %v2889, 1
  %v3980 = vrot.slane %v2891, 1
  %v3981 = vsel %vm3366, %v3979, %v3980
  %v3982 = vrot.slane %v2894, 1
  %v3983 = vrot.slane %v2896, 1
  %v3984 = vsel %vm3366, %v3982, %v3983
  %v3985 = vrot.slane %v2899, 1
  %v3986 = vrot.slane %v2901, 1
  %v3987 = vsel %vm3366, %v3985, %v3986
  %v3988 = vrot.slane %v2904, 1
  %v3989 = vrot.slane %v2906, 1
  %v3990 = vsel %vm3366, %v3988, %v3989
  %v4007 = vadd.f32 %v2722, %v3969
  %v4008 = vadd.f32 %v2724, %v3968
  %v4009 = vadd.f32 %v2727, %v3972
  %v4010 = vadd.f32 %v2729, %v3971
  %v4011 = vadd.f32 %v2732, %v3975
  %v4012 = vadd.f32 %v2734, %v3974
  %v4013 = vadd.f32 %v2737, %v3978
  %v4014 = vadd.f32 %v2739, %v3977
  %v4015 = vadd.f32 %v2742, %v3981
  %v4016 = vadd.f32 %v2744, %v3980
  %v4017 = vadd.f32 %v2747, %v3984
  %v4018 = vadd.f32 %v2749, %v3983
  %v4019 = vadd.f32 %v2752, %v3987
  %v4020 = vadd.f32 %v2754, %v3986
  %v4021 = vadd.f32 %v2757, %v3990
  %v4022 = vadd.f32 %v2759, %v3989
  %v4039 = vrot.slane %v3016, 2
  %v4040 = vrot.slane %v3018, 2
  %v4041 = vsel %vm1548, %v4039, %v4040
  %v4042 = vrot.slane %v3021, 2
  %v4043 = vrot.slane %v3023, 2
  %v4044 = vsel %vm1548, %v4042, %v4043
  %v4045 = vrot.slane %v3026, 2
  %v4046 = vrot.slane %v3028, 2
  %v4047 = vsel %vm1548, %v4045, %v4046
  %v4048 = vrot.slane %v3031, 2
  %v4049 = vrot.slane %v3033, 2
  %v4050 = vsel %vm1548, %v4048, %v4049
  %v4051 = vrot.slane %v3036, 2
  %v4052 = vrot.slane %v3038, 2
  %v4053 = vsel %vm1548, %v4051, %v4052
  %v4054 = vrot.slane %v3041, 2
  %v4055 = vrot.slane %v3043, 2
  %v4056 = vsel %vm1548, %v4054, %v4055
  %v4057 = vrot.slane %v3046, 2
  %v4058 = vrot.slane %v3048, 2
  %v4059 = vsel %vm1548, %v4057, %v4058
  %v4060 = vrot.slane %v3051, 2
  %v4061 = vrot.slane %v3053, 2
  %v4062 = vsel %vm1548, %v4060, %v4061
  %v4079 = vadd.f32 %v4007, %v4041
  %v4080 = vadd.f32 %v4008, %v4040
  %v4081 = vadd.f32 %v4009, %v4044
  %v4082 = vadd.f32 %v4010, %v4043
  %v4083 = vadd.f32 %v4011, %v4047
  %v4084 = vadd.f32 %v4012, %v4046
  %v4085 = vadd.f32 %v4013, %v4050
  %v4086 = vadd.f32 %v4014, %v4049
  %v4087 = vadd.f32 %v4015, %v4053
  %v4088 = vadd.f32 %v4016, %v4052
  %v4089 = vadd.f32 %v4017, %v4056
  %v4090 = vadd.f32 %v4018, %v4055
  %v4091 = vadd.f32 %v4019, %v4059
  %v4092 = vadd.f32 %v4020, %v4058
  %v4093 = vadd.f32 %v4021, %v4062
  %v4094 = vadd.f32 %v4022, %v4061
  %v4111 = vrot.slane %v3163, 3
  %v4112 = vrot.slane %v3165, 3
  %v4113 = vsel %vm3778, %v4111, %v4112
  %v4114 = vrot.slane %v3168, 3
  %v4115 = vrot.slane %v3170, 3
  %v4116 = vsel %vm3778, %v4114, %v4115
  %v4117 = vrot.slane %v3173, 3
  %v4118 = vrot.slane %v3175, 3
  %v4119 = vsel %vm3778, %v4117, %v4118
  %v4120 = vrot.slane %v3178, 3
  %v4121 = vrot.slane %v3180, 3
  %v4122 = vsel %vm3778, %v4120, %v4121
  %v4123 = vrot.slane %v3183, 3
  %v4124 = vrot.slane %v3185, 3
  %v4125 = vsel %vm3778, %v4123, %v4124
  %v4126 = vrot.slane %v3188, 3
  %v4127 = vrot.slane %v3190, 3
  %v4128 = vsel %vm3778, %v4126, %v4127
  %v4129 = vrot.slane %v3193, 3
  %v4130 = vrot.slane %v3195, 3
  %v4131 = vsel %vm3778, %v4129, %v4130
  %v4132 = vrot.slane %v3198, 3
  %v4133 = vrot.slane %v3200, 3
  %v4134 = vsel %vm3778, %v4132, %v4133
  %v4151 = vadd.f32 %v4079, %v4113
  %v4152 = vadd.f32 %v4080, %v4112
  %v4153 = vadd.f32 %v4081, %v4116
  %v4154 = vadd.f32 %v4082, %v4115
  %v4155 = vadd.f32 %v4083, %v4119
  %v4156 = vadd.f32 %v4084, %v4118
  %v4157 = vadd.f32 %v4085, %v4122
  %v4158 = vadd.f32 %v4086, %v4121
  %v4159 = vadd.f32 %v4087, %v4125
  %v4160 = vadd.f32 %v4088, %v4124
  %v4161 = vadd.f32 %v4089, %v4128
  %v4162 = vadd.f32 %v4090, %v4127
  %v4163 = vadd.f32 %v4091, %v4131
  %v4164 = vadd.f32 %v4092, %v4130
  %v4165 = vadd.f32 %v4093, %v4134
  %v4166 = vadd.f32 %v4094, %v4133
  %vm4183 = vcmask 1043456
  %v4184 = vrot.slane %v3310, 4
  %v4185 = vrot.slane %v3312, 4
  %v4186 = vsel %vm4183, %v4184, %v4185
  %v4187 = vrot.slane %v3315, 4
  %v4188 = vrot.slane %v3317, 4
  %v4189 = vsel %vm4183, %v4187, %v4188
  %v4190 = vrot.slane %v3320, 4
  %v4191 = vrot.slane %v3322, 4
  %v4192 = vsel %vm4183, %v4190, %v4191
  %v4193 = vrot.slane %v3325, 4
  %v4194 = vrot.slane %v3327, 4
  %v4195 = vsel %vm4183, %v4193, %v4194
  %v4196 = vrot.slane %v3330, 4
  %v4197 = vrot.slane %v3332, 4
  %v4198 = vsel %vm4183, %v4196, %v4197
  %v4199 = vrot.slane %v3335, 4
  %v4200 = vrot.slane %v3337, 4
  %v4201 = vsel %vm4183, %v4199, %v4200
  %v4202 = vrot.slane %v3340, 4
  %v4203 = vrot.slane %v3342, 4
  %v4204 = vsel %vm4183, %v4202, %v4203
  %v4205 = vrot.slane %v3345, 4
  %v4206 = vrot.slane %v3347, 4
  %v4207 = vsel %vm4183, %v4205, %v4206
  %v4224 = vadd.f32 %v4151, %v4186
  %v4225 = vadd.f32 %v4152, %v4185
  %v4226 = vadd.f32 %v4153, %v4189
  %v4227 = vadd.f32 %v4154, %v4188
  %v4228 = vadd.f32 %v4155, %v4192
  %v4229 = vadd.f32 %v4156, %v4191
  %v4230 = vadd.f32 %v4157, %v4195
  %v4231 = vadd.f32 %v4158, %v4194
  %v4232 = vadd.f32 %v4159, %v4198
  %v4233 = vadd.f32 %v4160, %v4197
  %v4234 = vadd.f32 %v4161, %v4201
  %v4235 = vadd.f32 %v4162, %v4200
  %v4236 = vadd.f32 %v4163, %v4204
  %v4237 = vadd.f32 %v4164, %v4203
  %v4238 = vadd.f32 %v4165, %v4207
  %v4239 = vadd.f32 %v4166, %v4206
  %v4240 = vrot.slane %v3349, 2
  %v4241 = vperm.slane %v4240, 0
  %v4243 = vadd.f32 %v4224, %v4241
  %v4244 = vadd.f32 %v4225, %v4241
  %v4245 = vadd.f32 %v4226, %v4241
  %v4246 = vadd.f32 %v4227, %v4241
  %v4247 = vadd.f32 %v4228, %v4241
  %v4248 = vadd.f32 %v4229, %v4241
  %v4249 = vadd.f32 %v4230, %v4241
  %v4250 = vadd.f32 %v4231, %v4241
  %v4251 = vadd.f32 %v4232, %v4241
  %v4252 = vadd.f32 %v4233, %v4241
  %v4253 = vadd.f32 %v4234, %v4241
  %v4254 = vadd.f32 %v4235, %v4241
  %v4255 = vadd.f32 %v4236, %v4241
  %v4256 = vadd.f32 %v4237, %v4241
  %v4257 = vadd.f32 %v4238, %v4241
  %v4258 = vadd.f32 %v4239, %v4241
  %v4259 = vmax.f32 %v4243, 0.0
  %v4260 = vmax.f32 %v4244, 0.0
  %v4261 = vmax.f32 %v4245, 0.0
  %v4262 = vmax.f32 %v4246, 0.0
  %v4263 = vmax.f32 %v4247, 0.0
  %v4264 = vmax.f32 %v4248, 0.0
  %v4265 = vmax.f32 %v4249, 0.0
  %v4266 = vmax.f32 %v4250, 0.0
  %v4267 = vmax.f32 %v4251, 0.0
  %v4268 = vmax.f32 %v4252, 0.0
  %v4269 = vmax.f32 %v4253, 0.0
  %v4270 = vmax.f32 %v4254, 0.0
  %v4271 = vmax.f32 %v4255, 0.0
  %v4272 = vmax.f32 %v4256, 0.0
  %v4273 = vmax.f32 %v4257, 0.0
  %v4274 = vmax.f32 %v4258, 0.0
  %v4275 = vsel %vm4183, %v4260, -inf
  %v4276 = vmax.f32 %v4259, %v4275
  %v4277 = vrot.slane %v4276, 4
  %v4278 = vmax.f32 %v4276, %v4277
  %v4279 = vrot.slane %v4278, 2
  %v4280 = vmax.f32 %v4278, %v4279
  %v4281 = vrot.slane %v4280, 1
  %v4282 = vmax.f32 %v4280, %v4281
  %v4283 = vsel %vm4183, %v4262, -inf
  %v4284 = vmax.f32 %v4261, %v4283
  %v4285 = vrot.slane %v4284, 4
  %v4286 = vmax.f32 %v4284, %v4285
  %v4287 = vrot.slane %v4286, 2
  %v4288 = vmax.f32 %v4286, %v4287
  %v4289 = vrot.slane %v4288, 1
  %v4290 = vmax.f32 %v4288, %v4289
  %v4291 = vsel %vm4183, %v4264, -inf
  %v4292 = vmax.f32 %v4263, %v4291
  %v4293 = vrot.slane %v4292, 4
  %v4294 = vmax.f32 %v4292, %v4293
  %v4295 = vrot.slane %v4294, 2
  %v4296 = vmax.f32 %v4294, %v4295
  %v4297 = vrot.slane %v4296, 1
  %v4298 = vmax.f32 %v4296, %v4297
  %v4299 = vsel %vm4183, %v4266, -inf
  %v4300 = vmax.f32 %v4265, %v4299
  %v4301 = vrot.slane %v4300, 4
  %v4302 = vmax.f32 %v4300, %v4301
  %v4303 = vrot.slane %v4302, 2
  %v4304 = vmax.f32 %v4302, %v4303
  %v4305 = vrot.slane %v4304, 1
  %v4306 = vmax.f32 %v4304, %v4305
  %v4307 = vsel %vm4183, %v4268, -inf
  %v4308 = vmax.f32 %v4267, %v4307
  %v4309 = vrot.slane %v4308, 4
  %v4310 = vmax.f32 %v4308, %v4309
  %v4311 = vrot.slane %v4310, 2
  %v4312 = vmax.f32 %v4310, %v4311
  %v4313 = vrot.slane %v4312, 1
  %v4314 = vmax.f32 %v4312, %v4313
  %v4315 = vsel %vm4183, %v4270, -inf
  %v4316 = vmax.f32 %v4269, %v4315
  %v4317 = vrot.slane %v4316, 4
  %v4318 = vmax.f32 %v4316, %v4317
  %v4319 = vrot.slane %v4318, 2
  %v4320 = vmax.f32 %v4318, %v4319
  %v4321 = vrot.slane %v4320, 1
  %v4322 = vmax.f32 %v4320, %v4321
  %v4323 = vsel %vm4183, %v4272, -inf
  %v4324 = vmax.f32 %v4271, %v4323
  %v4325 = vrot.slane %v4324, 4
  %v4326 = vmax.f32 %v4324, %v4325
  %v4327 = vrot.slane %v4326, 2
  %v4328 = vmax.f32 %v4326, %v4327
  %v4329 = vrot.slane %v4328, 1
  %v4330 = vmax.f32 %v4328, %v4329
  %v4331 = vsel %vm4183, %v4274, -inf
  %v4332 = vmax.f32 %v4273, %v4331
  %v4333 = vrot.slane %v4332, 4
  %v4334 = vmax.f32 %v4332, %v4333
  %v4335 = vrot.slane %v4334, 2
  %v4336 = vmax.f32 %v4334, %v4335
  %v4337 = vrot.slane %v4336, 1
  %v4338 = vmax.f32 %v4336, %v4337
  %v4347 = vsel %vm3602, %v4290, %v4282
  %v4348 = vsel %vm3604, %v4298, %v4347
  %v4349 = vsel %vm3606, %v4306, %v4348
  %v4350 = vsel %vm3608, %v4314, %v4349
  %v4351 = vsel %vm3610, %v4322, %v4350
  %v4352 = vsel %vm3612, %v4330, %v4351
  %v4353 = vsel %vm3614, %v4338, %v4352
  %4355 = vst [vmem:[%s3 + $0x10] sm:$0xff] %v4353
  // Predicated region
  $region14: #{toulmin_forward.2} parent=0 // pred_check
    _
  $region15: #{toulmin_forward.2} parent=0 // pred_check_branch
    %4357 = sbr.rel (0) target = $region17
  $region16: #{toulmin_forward.2} parent=0 // pred_region
    _
  $region17: #{toulmin_forward.2} parent=0 // pred_fallthru
    _
  // Predicated region
  $region18: #{toulmin_forward.2} parent=0 // pred_check
    _
  $region19: #{toulmin_forward.2} parent=0 // pred_check_branch
    %4359 = sbr.rel (0) target = $region21
  $region20: #{toulmin_forward.2} parent=0 // pred_region
    _
  $region21: #{toulmin_forward.2} parent=0 // pred_fallthru
    _

</llo_original>
